<compile_context>
chip_gen: v6e
topology: v6e:2x2x1
jax: 0.10.0
libtpu: 0.0.40
codegen_flags: <defaults>
</compile_context>

<pallas_src>
import jax
import jax.numpy as jnp
import numpy as np
from jax.experimental import pallas as pl
from jax.experimental.pallas import tpu as pltpu

LEAKY_SLOPE = 0.2
BN_EPS = 1e-5


# ---------------------------------------------------------------------------
# Fused LeakyReLU -> Conv2d(4,2,1) -> ReLU -> ConvTranspose2d(4,2,1) (pre-BN)
# + per-block BatchNorm partial statistics.
# ---------------------------------------------------------------------------
def _fused_down_up_kernel(xs_ref, wd_ref, wu_ref, zs_ref, stat_ref,
                          xa_ref, yp_ref, dop_ref, uop_ref):
    """One batch block of the fused down/up path.

    xs_ref  : [Nb, Ho+1, Wo+1, 4C]   bf16  2x2 space-to-depth of the padded input
    wd_ref  : [16C, inner]           bf16  K-concatenated down-conv weight
    wu_ref  : [4, 4*inner, outer]    bf16  per-sub-pixel K-concatenated up-conv weight
    zs_ref  : [Nb, 4, Ho*Wo, outer]  bf16  pre-BN output, sub-pixel planar (rs = 2r+s)
    stat_ref: [1, 2, outer]          f32   per-block (sum, sum-of-squares)
    xa_ref  : [Nb, Ho+1, Wo+1, 4C]   f32   scratch: LeakyReLU(x), activated once
    yp_ref  : [Nb, Ho+2, Wo+2, inner] f32  scratch: zero-padded ReLU(y)
    dop_ref : [Nb*Ho*Wo, 16C]        bf16  scratch: down-conv K-concat operand
    uop_ref : [Nb*Ho*Wo, 4*inner]    bf16  scratch: up-conv K-concat operand
    """
    Nb, Hp, Wp, C4 = xs_ref.shape
    Ho, Wo = Hp - 1, Wp - 1
    inner = yp_ref.shape[-1]
    outer = wu_ref.shape[-1]
    M = Nb * Ho * Wo
    taps = ((0, 0), (0, 1), (1, 0), (1, 1))

    # LeakyReLU once over the whole tile (f32 VPU math: v5e-safe).  The 4
    # overlapping space-to-depth windows below are pure slices of this buffer.
    xa = xs_ref[...].astype(jnp.float32)
    xa_ref[...] = jnp.where(xa >= 0, xa, LEAKY_SLOPE * xa)

    # Down conv: K-concatenate the 4 taps -> a single [M,16C] x [16C,inner] dot.
    for t, (dk, dl) in enumerate(taps):
        w = xa_ref[:, dk:dk + Ho, dl:dl + Wo, :]
        dop_ref[:, t * C4:(t + 1) * C4] = w.reshape(M, C4).astype(jnp.bfloat16)
    y = jnp.maximum(
        jnp.dot(dop_ref[...], wd_ref[...], preferred_element_type=jnp.float32), 0.0)

    # ReLU(y) -> interior of the persistent padded scratch.  Only the 1-wide halo
    # border is zeroed (every step: a program_id==0-only init would be unsafe when
    # the "parallel" batch grid is split across TensorCores).
    yp_ref[:, 0:1, :, :] = jnp.zeros((Nb, 1, Wo + 2, inner), jnp.float32)
    yp_ref[:, Ho + 1:Ho + 2, :, :] = jnp.zeros((Nb, 1, Wo + 2, inner), jnp.float32)
    yp_ref[:, :, 0:1, :] = jnp.zeros((Nb, Ho + 2, 1, inner), jnp.float32)
    yp_ref[:, :, Wo + 1:Wo + 2, :] = jnp.zeros((Nb, Ho + 2, 1, inner), jnp.float32)
    yp_ref[:, 1:Ho + 1, 1:Wo + 1, :] = y.reshape(Nb, Ho, Wo, inner)

    # The 9 distinct shifted windows, materialized + cast to bf16 once and reused
    # across the 4 sub-pixel positions.
    win = [[yp_ref[:, a:a + Ho, b:b + Wo, :].reshape(M, inner).astype(jnp.bfloat16)
            for b in range(3)] for a in range(3)]

    # Up conv: one K-concatenated [M,4*inner] x [4*inner,outer] dot per sub-pixel,
    # BN partial statistics accumulated from the f32 result (before the bf16 store).
    s1 = jnp.zeros((1, outer), jnp.float32)
    s2 = jnp.zeros((1, outer), jnp.float32)
    for r in range(2):
        for s in range(2):
            for t, (dk, dl) in enumerate(taps):
                uop_ref[:, t * inner:(t + 1) * inner] = win[r + dk][s + dl]
            accz = jnp.dot(uop_ref[...], wu_ref[2 * r + s],
                           preferred_element_type=jnp.float32)
            # Note: last dim `outer` is lane-dense for realistic inner-block channel
            # counts (>=128); for the toy outer=4 we accept masked stores rather
            # than padding channels.
            zs_ref[:, 2 * r + s] = (
                accz.reshape(Nb, Ho * Wo, outer).astype(jnp.bfloat16))
            s1 = s1 + jnp.sum(accz, axis=0, keepdims=True)
            s2 = s2 + jnp.sum(accz * accz, axis=0, keepdims=True)

    stat_ref[0, 0:1, :] = s1
    stat_ref[0, 1:2, :] = s2


# ---------------------------------------------------------------------------
# Batch-block sizing against a VMEM budget that also fits v7x (64 MiB physical).
# ---------------------------------------------------------------------------
def _step_vmem_bytes(nb, Hp, Wp, C, inner, outer):
    Ho, Wo = Hp - 1, Wp - 1
    m = nb * Ho * Wo
    io = 2 * (nb * Hp * Wp * 4 * C) * 2            # double-buffered bf16 input tile
    io += 2 * (nb * 4 * Ho * Wo * outer) * 2       # double-buffered bf16 zs tile
    io += 2 * (2 * outer) * 4                      # stats tile
    wgt = 2 * (16 * C * inner + 16 * inner * outer) * 2
    scratch = (nb * Hp * Wp * 4 * C * 4            # activated tile (f32)
               + nb * (Ho + 2) * (Wo + 2) * inner * 4
               + m * 16 * C * 2 + m * 4 * inner * 2)
    live = m * inner * 4 + 9 * m * inner * 2       # y + the 9 shifted windows
    return io + wgt + scratch + live


def _pick_batch_block(N, Ho, Wo, C, inner, outer, budget=24 * 2 ** 20):
    """Largest block that divides N, targets >=512 matmul rows and fits the budget."""
    nb = max(1, min(N, pl.cdiv(512, Ho * Wo)))
    while nb > 1 and (N % nb != 0 or
                      _step_vmem_bytes(nb, Ho + 1, Wo + 1, C, inner, outer) > budget):
        nb -= 1
    return nb


# ---------------------------------------------------------------------------
# Wrapper
# ---------------------------------------------------------------------------
def unet_innermost_forward(x, w_down, w_up, gamma, beta):
    """x: [N, C, H, W] f32 -> [N, 2*C, H, W] f32 (innermost U-Net skip block)."""
    N, C, H, W = x.shape
    assert H % 2 == 0 and W % 2 == 0, "spatial dims must be even"
    inner = w_down.shape[0]
    outer = w_up.shape[1]
    Ho, Wo = H // 2, W // 2
    Hp, Wp = Ho + 1, Wo + 1

    # NCHW -> NHWC, zero-pad by 1, 2x2 space-to-depth => [N, Hp, Wp, 4C] in bf16
    # (halves the HBM->VMEM DMA of the largest input tensor; LeakyReLU(0) == 0 so
    # padding before the in-kernel activation is equivalent to the module's order).
    xh = jnp.transpose(x, (0, 2, 3, 1))
    xp = jnp.pad(xh, ((0, 0), (1, 1), (1, 1), (0, 0)))
    xs = (xp.reshape(N, Hp, 2, Wp, 2, C)
            .transpose(0, 1, 3, 2, 4, 5)
            .reshape(N, Hp, Wp, 4 * C)
            .astype(jnp.bfloat16))

    # Conv2d weight [inner, C, 4, 4] -> K-concatenated [(dk, dl, e_h, e_w, ci), inner].
    wd_cat = (w_down.reshape(inner, C, 2, 2, 2, 2)
                    .transpose(2, 4, 3, 5, 1, 0)
                    .reshape(16 * C, inner)
                    .astype(jnp.bfloat16))
    # ConvTranspose2d weight [inner, outer, 4, 4] -> per-sub-pixel K-concatenated
    # [rs = 2r+s, (dk, dl, ci), outer], kernel element (3 - r - 2dk, 3 - s - 2dl).
    wu_cat = (jnp.flip(w_up, axis=(2, 3))
                 .reshape(inner, outer, 2, 2, 2, 2)
                 .transpose(3, 5, 2, 4, 0, 1)
                 .reshape(4, 4 * inner, outer)
                 .astype(jnp.bfloat16))

    # Batch blocking: fold nb images into the matmul M dimension.
    nb = _pick_batch_block(N, Ho, Wo, C, inner, outer)
    nblk = N // nb
    vmem_need = _step_vmem_bytes(nb, Hp, Wp, C, inner, outer)
    vmem_limit = int(min(48 * 2 ** 20, max(2 * vmem_need, 16 * 2 ** 20)))

    zs, stats = pl.pallas_call(
        _fused_down_up_kernel,
        out_shape=(jax.ShapeDtypeStruct((N, 4, Ho * Wo, outer), jnp.bfloat16),
                   jax.ShapeDtypeStruct((nblk, 2, outer), jnp.float32)),
        grid=(nblk,),
        in_specs=[pl.BlockSpec((nb, Hp, Wp, 4 * C), lambda n: (n, 0, 0, 0)),
                  pl.BlockSpec((16 * C, inner), lambda n: (0, 0)),
                  pl.BlockSpec((4, 4 * inner, outer), lambda n: (0, 0, 0))],
        out_specs=(pl.BlockSpec((nb, 4, Ho * Wo, outer), lambda n: (n, 0, 0, 0)),
                   pl.BlockSpec((1, 2, outer), lambda n: (n, 0, 0))),
        scratch_shapes=[pltpu.VMEM((nb, Hp, Wp, 4 * C), jnp.float32),
                        pltpu.VMEM((nb, Ho + 2, Wo + 2, inner), jnp.float32),
                        pltpu.VMEM((nb * Ho * Wo, 16 * C), jnp.bfloat16),
                        pltpu.VMEM((nb * Ho * Wo, 4 * inner), jnp.bfloat16)],
        compiler_params=pltpu.CompilerParams(
            dimension_semantics=("parallel",),
            vmem_limit_bytes=vmem_limit),
    )(xs, wd_cat, wu_cat)

    # BatchNorm (training-mode batch stats): fold mean/var/gamma/beta into scale/shift.
    # TODO(synk): E[x^2]-E[x]^2 in f32 can cancel for large-mean activations; switch to
    # a shifted accumulation if tolerances ever tighten.
    cnt = float(N * H * W)
    ssum = jnp.sum(stats[:, 0, :], axis=0)
    ssq = jnp.sum(stats[:, 1, :], axis=0)
    mean = ssum / cnt
    var = jnp.maximum(ssq / cnt - mean * mean, 0.0)          # biased variance
    scale = gamma * jax.lax.rsqrt(var + BN_EPS)
    shift = beta - mean * scale

    # Epilogue in XLA: affine + sub-pixel depth-to-space + skip concat fuse into a
    # single pass over the pre-BN activation (no separate BN kernel / extra HBM trip).
    up = zs.astype(jnp.float32) * scale + shift
    up = (up.reshape(N, 2, 2, Ho, Wo, outer)
            .transpose(0, 5, 3, 1, 4, 2)
            .reshape(N, outer, H, W))
    return jnp.concatenate([x, up], axis=1)


# ---------------------------------------------------------------------------
# Pure-JAX reference (same bf16-operand / f32-accumulation numerics as the kernel)
# ---------------------------------------------------------------------------
def _reference(x, w_down, w_up, gamma, beta):
    xb = x.astype(jnp.bfloat16).astype(jnp.float32)
    h = jnp.where(xb >= 0, xb, LEAKY_SLOPE * xb).astype(jnp.bfloat16)
    y = jax.lax.conv_general_dilated(
        h, w_down.astype(jnp.bfloat16), window_strides=(2, 2),
        padding=((1, 1), (1, 1)), dimension_numbers=("NCHW", "OIHW", "NCHW"),
        preferred_element_type=jnp.float32)
    y = jnp.maximum(y, 0.0).astype(jnp.bfloat16)
    w_eq = jnp.flip(w_up, axis=(2, 3)).transpose(1, 0, 2, 3).astype(jnp.bfloat16)
    z = jax.lax.conv_general_dilated(
        y, w_eq, window_strides=(1, 1), padding=((2, 2), (2, 2)),
        lhs_dilation=(2, 2), dimension_numbers=("NCHW", "OIHW", "NCHW"),
        preferred_element_type=jnp.float32)
    mean = z.mean(axis=(0, 2, 3), keepdims=True)
    var = ((z - mean) ** 2).mean(axis=(0, 2, 3), keepdims=True)
    zn = (z - mean) / jnp.sqrt(var + BN_EPS)
    zn = zn * gamma.reshape(1, -1, 1, 1) + beta.reshape(1, -1, 1, 1)
    return jnp.concatenate([x, zn], axis=1)


# TODO(synk): outermost / middle UnetSkipConnectionBlock variants (submodule
# recursion, Tanh, Dropout) are not exercised here; this implements the innermost
# block configuration.

if __name__ == "__main__":
    N, outer_nc, inner_nc, H, W = 2, 4, 8, 16, 16   # input_nc defaults to outer_nc

    key = jax.random.PRNGKey(0)
    kx, kd, ku = jax.random.split(key, 3)
    x = jax.random.normal(kx, (N, outer_nc, H, W), jnp.float32)
    # Conv2d(input_nc, inner_nc, 4) weight: [inner_nc, input_nc, 4, 4], no bias
    w_down = 0.05 * jax.random.normal(kd, (inner_nc, outer_nc, 4, 4), jnp.float32)
    # ConvTranspose2d(inner_nc, outer_nc, 4) weight: [inner_nc, outer_nc, 4, 4], no bias
    w_up = 0.05 * jax.random.normal(ku, (inner_nc, outer_nc, 4, 4), jnp.float32)
    # BatchNorm2d(outer_nc) affine params (default init)
    gamma = jnp.ones((outer_nc,), jnp.float32)
    beta = jnp.zeros((outer_nc,), jnp.float32)

    fwd = jax.jit(unet_innermost_forward)
    out = jax.block_until_ready(fwd(x, w_down, w_up, gamma, beta))
    assert out.shape == (N, 2 * outer_nc, H, W), out.shape

    ref = jax.block_until_ready(jax.jit(_reference)(x, w_down, w_up, gamma, beta))
    np.testing.assert_allclose(np.asarray(out), np.asarray(ref),
                               rtol=2e-2, atol=2e-2)
    print("KERNEL_OK")
</pallas_src>

<mosaic_0001>
module attributes {stable_mosaic.version = 11 : i64} {
  func.func @_fused_down_up_kernel(%arg0: i32, %arg1: memref<2x9x9x16xbf16, #tpu.memory_space<vmem>>, %arg2: memref<64x8xbf16, #tpu.memory_space<vmem>>, %arg3: memref<4x32x4xbf16, #tpu.memory_space<vmem>>, %arg4: memref<2x4x64x4xbf16, #tpu.memory_space<vmem>>, %arg5: memref<1x2x4xf32, #tpu.memory_space<vmem>>, %arg6: memref<2x9x9x16xf32, #tpu.memory_space<vmem>>, %arg7: memref<2x10x10x8xf32, #tpu.memory_space<vmem>>, %arg8: memref<128x64xbf16, #tpu.memory_space<vmem>>, %arg9: memref<128x32xbf16, #tpu.memory_space<vmem>>) attributes {dimension_semantics = [#tpu.dimension_semantics<parallel>], iteration_bounds = array<i64: 1>, scalar_prefetch = 0 : i64, scratch_operands = 4 : i64, tpu.core_type = #tpu.core_type<tc>, window_params = [{transform_indices = @transform_0, window_bounds = array<i64: 2, 9, 9, 16>}, {pipeline_mode = #tpu.pipeline_mode<synchronous>, transform_indices = @transform_1, window_bounds = array<i64: 64, 8>}, {pipeline_mode = #tpu.pipeline_mode<synchronous>, transform_indices = @transform_2, window_bounds = array<i64: 4, 32, 4>}, {transform_indices = @transform_3, window_bounds = array<i64: 2, 4, 64, 4>}, {transform_indices = @transform_4, window_bounds = array<i64: 1, 2, 4>}]} {
    %c0 = arith.constant 0 : index
    %c0_0 = arith.constant 0 : index
    %c0_1 = arith.constant 0 : index
    %c0_2 = arith.constant 0 : index
    %0 = vector.load %arg1[%c0, %c0_0, %c0_1, %c0_2] : memref<2x9x9x16xbf16, #tpu.memory_space<vmem>>, vector<2x9x9x16xbf16>
    %1 = arith.extf %0 : vector<2x9x9x16xbf16> to vector<2x9x9x16xf32>
    %cst = arith.constant 0.000000e+00 : f32
    %2 = vector.broadcast %cst : f32 to vector<2x9x9x16xf32>
    %3 = arith.cmpf oge, %1, %2 : vector<2x9x9x16xf32>
    %cst_3 = arith.constant 2.000000e-01 : f32
    %4 = vector.broadcast %cst_3 : f32 to vector<2x9x9x16xf32>
    %5 = arith.mulf %4, %1 : vector<2x9x9x16xf32>
    %6 = arith.select %3, %1, %5 : vector<2x9x9x16xi1>, vector<2x9x9x16xf32>
    %c0_4 = arith.constant 0 : index
    %c0_5 = arith.constant 0 : index
    %c0_6 = arith.constant 0 : index
    %c0_7 = arith.constant 0 : index
    %7 = vector.load %arg6[%c0_4, %c0_5, %c0_6, %c0_7] : memref<2x9x9x16xf32, #tpu.memory_space<vmem>>, vector<2x9x9x16xf32>
    tpu.vector_store %arg6[%c0_4, %c0_5, %c0_6, %c0_7], %6 {strides = array<i32>} : memref<2x9x9x16xf32, #tpu.memory_space<vmem>>, vector<2x9x9x16xf32>,
    %c0_8 = arith.constant 0 : index
    %c0_9 = arith.constant 0 : index
    %c0_10 = arith.constant 0 : index
    %c0_11 = arith.constant 0 : index
    %8 = vector.load %arg6[%c0_8, %c0_9, %c0_10, %c0_11] : memref<2x9x9x16xf32, #tpu.memory_space<vmem>>, vector<2x8x8x16xf32>
    %9 = vector.shape_cast %8 : vector<2x8x8x16xf32> to vector<128x16xf32>
    %10 = arith.truncf %9 : vector<128x16xf32> to vector<128x16xbf16>
    %c0_12 = arith.constant 0 : index
    %c0_13 = arith.constant 0 : index
    %11 = vector.load %arg8[%c0_12, %c0_13] : memref<128x64xbf16, #tpu.memory_space<vmem>>, vector<128x16xbf16>
    tpu.vector_store %arg8[%c0_12, %c0_13], %10 {strides = array<i32>} : memref<128x64xbf16, #tpu.memory_space<vmem>>, vector<128x16xbf16>,
    %c0_14 = arith.constant 0 : index
    %c0_15 = arith.constant 0 : index
    %c1 = arith.constant 1 : index
    %c0_16 = arith.constant 0 : index
    %12 = vector.load %arg6[%c0_14, %c0_15, %c1, %c0_16] : memref<2x9x9x16xf32, #tpu.memory_space<vmem>>, vector<2x8x8x16xf32>
    %13 = vector.shape_cast %12 : vector<2x8x8x16xf32> to vector<128x16xf32>
    %14 = arith.truncf %13 : vector<128x16xf32> to vector<128x16xbf16>
    %c0_17 = arith.constant 0 : index
    %c16 = arith.constant 16 : index
    %15 = vector.load %arg8[%c0_17, %c16] : memref<128x64xbf16, #tpu.memory_space<vmem>>, vector<128x16xbf16>
    tpu.vector_store %arg8[%c0_17, %c16], %14 {strides = array<i32>} : memref<128x64xbf16, #tpu.memory_space<vmem>>, vector<128x16xbf16>,
    %c0_18 = arith.constant 0 : index
    %c1_19 = arith.constant 1 : index
    %c0_20 = arith.constant 0 : index
    %c0_21 = arith.constant 0 : index
    %16 = vector.load %arg6[%c0_18, %c1_19, %c0_20, %c0_21] : memref<2x9x9x16xf32, #tpu.memory_space<vmem>>, vector<2x8x8x16xf32>
    %17 = vector.shape_cast %16 : vector<2x8x8x16xf32> to vector<128x16xf32>
    %18 = arith.truncf %17 : vector<128x16xf32> to vector<128x16xbf16>
    %c0_22 = arith.constant 0 : index
    %c32 = arith.constant 32 : index
    %19 = vector.load %arg8[%c0_22, %c32] : memref<128x64xbf16, #tpu.memory_space<vmem>>, vector<128x16xbf16>
    tpu.vector_store %arg8[%c0_22, %c32], %18 {strides = array<i32>} : memref<128x64xbf16, #tpu.memory_space<vmem>>, vector<128x16xbf16>,
    %c0_23 = arith.constant 0 : index
    %c1_24 = arith.constant 1 : index
    %c1_25 = arith.constant 1 : index
    %c0_26 = arith.constant 0 : index
    %20 = vector.load %arg6[%c0_23, %c1_24, %c1_25, %c0_26] : memref<2x9x9x16xf32, #tpu.memory_space<vmem>>, vector<2x8x8x16xf32>
    %21 = vector.shape_cast %20 : vector<2x8x8x16xf32> to vector<128x16xf32>
    %22 = arith.truncf %21 : vector<128x16xf32> to vector<128x16xbf16>
    %c0_27 = arith.constant 0 : index
    %c48 = arith.constant 48 : index
    %23 = vector.load %arg8[%c0_27, %c48] : memref<128x64xbf16, #tpu.memory_space<vmem>>, vector<128x16xbf16>
    tpu.vector_store %arg8[%c0_27, %c48], %22 {strides = array<i32>} : memref<128x64xbf16, #tpu.memory_space<vmem>>, vector<128x16xbf16>,
    %c0_28 = arith.constant 0 : index
    %c0_29 = arith.constant 0 : index
    %24 = vector.load %arg8[%c0_28, %c0_29] : memref<128x64xbf16, #tpu.memory_space<vmem>>, vector<128x64xbf16>
    %c0_30 = arith.constant 0 : index
    %c0_31 = arith.constant 0 : index
    %25 = vector.load %arg2[%c0_30, %c0_31] : memref<64x8xbf16, #tpu.memory_space<vmem>>, vector<64x8xbf16>
    %cst_32 = arith.constant dense<0.000000e+00> : vector<128x8xf32>
    %26 = tpu.matmul %24, %25, %cst_32 {dimension_numbers = #tpu.dot_dimension_numbers<[1], [0], [0], [1], [0, 0, 1, 1], [], []>} : vector<128x64xbf16>, vector<64x8xbf16>, vector<128x8xf32> -> vector<128x8xf32>
    %cst_33 = arith.constant 0.000000e+00 : f32
    %27 = vector.broadcast %cst_33 : f32 to vector<128x8xf32>
    %28 = arith.maximumf %26, %27 : vector<128x8xf32>
    %cst_34 = arith.constant 0.000000e+00 : f32
    %29 = vector.broadcast %cst_34 : f32 to vector<2x1x10x8xf32>
    %c0_35 = arith.constant 0 : index
    %c0_36 = arith.constant 0 : index
    %c0_37 = arith.constant 0 : index
    %c0_38 = arith.constant 0 : index
    %30 = vector.load %arg7[%c0_35, %c0_36, %c0_37, %c0_38] : memref<2x10x10x8xf32, #tpu.memory_space<vmem>>, vector<2x1x10x8xf32>
    tpu.vector_store %arg7[%c0_35, %c0_36, %c0_37, %c0_38], %29 {strides = array<i32>} : memref<2x10x10x8xf32, #tpu.memory_space<vmem>>, vector<2x1x10x8xf32>,
    %cst_39 = arith.constant 0.000000e+00 : f32
    %31 = vector.broadcast %cst_39 : f32 to vector<2x1x10x8xf32>
    %c0_40 = arith.constant 0 : index
    %c9 = arith.constant 9 : index
    %c0_41 = arith.constant 0 : index
    %c0_42 = arith.constant 0 : index
    %32 = vector.load %arg7[%c0_40, %c9, %c0_41, %c0_42] : memref<2x10x10x8xf32, #tpu.memory_space<vmem>>, vector<2x1x10x8xf32>
    tpu.vector_store %arg7[%c0_40, %c9, %c0_41, %c0_42], %31 {strides = array<i32>} : memref<2x10x10x8xf32, #tpu.memory_space<vmem>>, vector<2x1x10x8xf32>,
    %cst_43 = arith.constant 0.000000e+00 : f32
    %33 = vector.broadcast %cst_43 : f32 to vector<2x10x1x8xf32>
    %c0_44 = arith.constant 0 : index
    %c0_45 = arith.constant 0 : index
    %c0_46 = arith.constant 0 : index
    %c0_47 = arith.constant 0 : index
    %34 = vector.load %arg7[%c0_44, %c0_45, %c0_46, %c0_47] : memref<2x10x10x8xf32, #tpu.memory_space<vmem>>, vector<2x10x1x8xf32>
    tpu.vector_store %arg7[%c0_44, %c0_45, %c0_46, %c0_47], %33 {strides = array<i32>} : memref<2x10x10x8xf32, #tpu.memory_space<vmem>>, vector<2x10x1x8xf32>,
    %cst_48 = arith.constant 0.000000e+00 : f32
    %35 = vector.broadcast %cst_48 : f32 to vector<2x10x1x8xf32>
    %c0_49 = arith.constant 0 : index
    %c0_50 = arith.constant 0 : index
    %c9_51 = arith.constant 9 : index
    %c0_52 = arith.constant 0 : index
    %36 = vector.load %arg7[%c0_49, %c0_50, %c9_51, %c0_52] : memref<2x10x10x8xf32, #tpu.memory_space<vmem>>, vector<2x10x1x8xf32>
    tpu.vector_store %arg7[%c0_49, %c0_50, %c9_51, %c0_52], %35 {strides = array<i32>} : memref<2x10x10x8xf32, #tpu.memory_space<vmem>>, vector<2x10x1x8xf32>,
    %37 = vector.shape_cast %28 : vector<128x8xf32> to vector<2x8x8x8xf32>
    %c0_53 = arith.constant 0 : index
    %c1_54 = arith.constant 1 : index
    %c1_55 = arith.constant 1 : index
    %c0_56 = arith.constant 0 : index
    %38 = vector.load %arg7[%c0_53, %c1_54, %c1_55, %c0_56] : memref<2x10x10x8xf32, #tpu.memory_space<vmem>>, vector<2x8x8x8xf32>
    tpu.vector_store %arg7[%c0_53, %c1_54, %c1_55, %c0_56], %37 {strides = array<i32>} : memref<2x10x10x8xf32, #tpu.memory_space<vmem>>, vector<2x8x8x8xf32>,
    %c0_57 = arith.constant 0 : index
    %c0_58 = arith.constant 0 : index
    %c0_59 = arith.constant 0 : index
    %c0_60 = arith.constant 0 : index
    %39 = vector.load %arg7[%c0_57, %c0_58, %c0_59, %c0_60] : memref<2x10x10x8xf32, #tpu.memory_space<vmem>>, vector<2x8x8x8xf32>
    %40 = vector.shape_cast %39 : vector<2x8x8x8xf32> to vector<128x8xf32>
    %41 = arith.truncf %40 : vector<128x8xf32> to vector<128x8xbf16>
    %c0_61 = arith.constant 0 : index
    %c0_62 = arith.constant 0 : index
    %c1_63 = arith.constant 1 : index
    %c0_64 = arith.constant 0 : index
    %42 = vector.load %arg7[%c0_61, %c0_62, %c1_63, %c0_64] : memref<2x10x10x8xf32, #tpu.memory_space<vmem>>, vector<2x8x8x8xf32>
    %43 = vector.shape_cast %42 : vector<2x8x8x8xf32> to vector<128x8xf32>
    %44 = arith.truncf %43 : vector<128x8xf32> to vector<128x8xbf16>
    %c0_65 = arith.constant 0 : index
    %c0_66 = arith.constant 0 : index
    %c2 = arith.constant 2 : index
    %c0_67 = arith.constant 0 : index
    %45 = vector.load %arg7[%c0_65, %c0_66, %c2, %c0_67] : memref<2x10x10x8xf32, #tpu.memory_space<vmem>>, vector<2x8x8x8xf32>
    %46 = vector.shape_cast %45 : vector<2x8x8x8xf32> to vector<128x8xf32>
    %47 = arith.truncf %46 : vector<128x8xf32> to vector<128x8xbf16>
    %c0_68 = arith.constant 0 : index
    %c1_69 = arith.constant 1 : index
    %c0_70 = arith.constant 0 : index
    %c0_71 = arith.constant 0 : index
    %48 = vector.load %arg7[%c0_68, %c1_69, %c0_70, %c0_71] : memref<2x10x10x8xf32, #tpu.memory_space<vmem>>, vector<2x8x8x8xf32>
    %49 = vector.shape_cast %48 : vector<2x8x8x8xf32> to vector<128x8xf32>
    %50 = arith.truncf %49 : vector<128x8xf32> to vector<128x8xbf16>
    %c0_72 = arith.constant 0 : index
    %c1_73 = arith.constant 1 : index
    %c1_74 = arith.constant 1 : index
    %c0_75 = arith.constant 0 : index
    %51 = vector.load %arg7[%c0_72, %c1_73, %c1_74, %c0_75] : memref<2x10x10x8xf32, #tpu.memory_space<vmem>>, vector<2x8x8x8xf32>
    %52 = vector.shape_cast %51 : vector<2x8x8x8xf32> to vector<128x8xf32>
    %53 = arith.truncf %52 : vector<128x8xf32> to vector<128x8xbf16>
    %c0_76 = arith.constant 0 : index
    %c1_77 = arith.constant 1 : index
    %c2_78 = arith.constant 2 : index
    %c0_79 = arith.constant 0 : index
    %54 = vector.load %arg7[%c0_76, %c1_77, %c2_78, %c0_79] : memref<2x10x10x8xf32, #tpu.memory_space<vmem>>, vector<2x8x8x8xf32>
    %55 = vector.shape_cast %54 : vector<2x8x8x8xf32> to vector<128x8xf32>
    %56 = arith.truncf %55 : vector<128x8xf32> to vector<128x8xbf16>
    %c0_80 = arith.constant 0 : index
    %c2_81 = arith.constant 2 : index
    %c0_82 = arith.constant 0 : index
    %c0_83 = arith.constant 0 : index
    %57 = vector.load %arg7[%c0_80, %c2_81, %c0_82, %c0_83] : memref<2x10x10x8xf32, #tpu.memory_space<vmem>>, vector<2x8x8x8xf32>
    %58 = vector.shape_cast %57 : vector<2x8x8x8xf32> to vector<128x8xf32>
    %59 = arith.truncf %58 : vector<128x8xf32> to vector<128x8xbf16>
    %c0_84 = arith.constant 0 : index
    %c2_85 = arith.constant 2 : index
    %c1_86 = arith.constant 1 : index
    %c0_87 = arith.constant 0 : index
    %60 = vector.load %arg7[%c0_84, %c2_85, %c1_86, %c0_87] : memref<2x10x10x8xf32, #tpu.memory_space<vmem>>, vector<2x8x8x8xf32>
    %61 = vector.shape_cast %60 : vector<2x8x8x8xf32> to vector<128x8xf32>
    %62 = arith.truncf %61 : vector<128x8xf32> to vector<128x8xbf16>
    %c0_88 = arith.constant 0 : index
    %c2_89 = arith.constant 2 : index
    %c2_90 = arith.constant 2 : index
    %c0_91 = arith.constant 0 : index
    %63 = vector.load %arg7[%c0_88, %c2_89, %c2_90, %c0_91] : memref<2x10x10x8xf32, #tpu.memory_space<vmem>>, vector<2x8x8x8xf32>
    %64 = vector.shape_cast %63 : vector<2x8x8x8xf32> to vector<128x8xf32>
    %65 = arith.truncf %64 : vector<128x8xf32> to vector<128x8xbf16>
    %cst_92 = arith.constant 0.000000e+00 : f32
    %66 = vector.broadcast %cst_92 : f32 to vector<1x4xf32>
    %cst_93 = arith.constant 0.000000e+00 : f32
    %67 = vector.broadcast %cst_93 : f32 to vector<1x4xf32>
    %c0_94 = arith.constant 0 : index
    %c0_95 = arith.constant 0 : index
    %68 = vector.load %arg9[%c0_94, %c0_95] : memref<128x32xbf16, #tpu.memory_space<vmem>>, vector<128x8xbf16>
    tpu.vector_store %arg9[%c0_94, %c0_95], %41 {strides = array<i32>} : memref<128x32xbf16, #tpu.memory_space<vmem>>, vector<128x8xbf16>,
    %c0_96 = arith.constant 0 : index
    %c8 = arith.constant 8 : index
    %69 = vector.load %arg9[%c0_96, %c8] : memref<128x32xbf16, #tpu.memory_space<vmem>>, vector<128x8xbf16>
    tpu.vector_store %arg9[%c0_96, %c8], %44 {strides = array<i32>} : memref<128x32xbf16, #tpu.memory_space<vmem>>, vector<128x8xbf16>,
    %c0_97 = arith.constant 0 : index
    %c16_98 = arith.constant 16 : index
    %70 = vector.load %arg9[%c0_97, %c16_98] : memref<128x32xbf16, #tpu.memory_space<vmem>>, vector<128x8xbf16>
    tpu.vector_store %arg9[%c0_97, %c16_98], %50 {strides = array<i32>} : memref<128x32xbf16, #tpu.memory_space<vmem>>, vector<128x8xbf16>,
    %c0_99 = arith.constant 0 : index
    %c24 = arith.constant 24 : index
    %71 = vector.load %arg9[%c0_99, %c24] : memref<128x32xbf16, #tpu.memory_space<vmem>>, vector<128x8xbf16>
    tpu.vector_store %arg9[%c0_99, %c24], %53 {strides = array<i32>} : memref<128x32xbf16, #tpu.memory_space<vmem>>, vector<128x8xbf16>,
    %c0_100 = arith.constant 0 : index
    %c0_101 = arith.constant 0 : index
    %72 = vector.load %arg9[%c0_100, %c0_101] : memref<128x32xbf16, #tpu.memory_space<vmem>>, vector<128x32xbf16>
    %c0_102 = arith.constant 0 : index
    %c0_103 = arith.constant 0 : index
    %c0_104 = arith.constant 0 : index
    %73 = vector.load %arg3[%c0_102, %c0_103, %c0_104] : memref<4x32x4xbf16, #tpu.memory_space<vmem>>, vector<1x32x4xbf16>
    %74 = vector.shape_cast %73 : vector<1x32x4xbf16> to vector<32x4xbf16>
    %cst_105 = arith.constant dense<0.000000e+00> : vector<128x4xf32>
    %75 = tpu.matmul %72, %74, %cst_105 {dimension_numbers = #tpu.dot_dimension_numbers<[1], [0], [0], [1], [0, 0, 1, 1], [], []>} : vector<128x32xbf16>, vector<32x4xbf16>, vector<128x4xf32> -> vector<128x4xf32>
    %76 = vector.shape_cast %75 : vector<128x4xf32> to vector<2x64x4xf32>
    %77 = arith.truncf %76 : vector<2x64x4xf32> to vector<2x64x4xbf16>
    %c0_106 = arith.constant 0 : index
    %c0_107 = arith.constant 0 : index
    %c0_108 = arith.constant 0 : index
    %c0_109 = arith.constant 0 : index
    %78 = vector.load %arg4[%c0_106, %c0_107, %c0_108, %c0_109] : memref<2x4x64x4xbf16, #tpu.memory_space<vmem>>, vector<2x1x64x4xbf16>
    %79 = vector.shape_cast %78 : vector<2x1x64x4xbf16> to vector<2x64x4xbf16>
    %80 = vector.shape_cast %77 : vector<2x64x4xbf16> to vector<2x1x64x4xbf16>
    tpu.vector_store %arg4[%c0_106, %c0_107, %c0_108, %c0_109], %80 {strides = array<i32>} : memref<2x4x64x4xbf16, #tpu.memory_space<vmem>>, vector<2x1x64x4xbf16>,
    %cst_110 = arith.constant dense<0.000000e+00> : vector<4xf32>
    %81 = vector.multi_reduction <add>, %75, %cst_110 [0] : vector<128x4xf32> to vector<4xf32>
    %82 = vector.shape_cast %81 : vector<4xf32> to vector<1x4xf32>
    %83 = arith.addf %66, %82 : vector<1x4xf32>
    %84 = arith.mulf %75, %75 : vector<128x4xf32>
    %cst_111 = arith.constant dense<0.000000e+00> : vector<4xf32>
    %85 = vector.multi_reduction <add>, %84, %cst_111 [0] : vector<128x4xf32> to vector<4xf32>
    %86 = vector.shape_cast %85 : vector<4xf32> to vector<1x4xf32>
    %87 = arith.addf %67, %86 : vector<1x4xf32>
    %c0_112 = arith.constant 0 : index
    %c0_113 = arith.constant 0 : index
    %88 = vector.load %arg9[%c0_112, %c0_113] : memref<128x32xbf16, #tpu.memory_space<vmem>>, vector<128x8xbf16>
    tpu.vector_store %arg9[%c0_112, %c0_113], %44 {strides = array<i32>} : memref<128x32xbf16, #tpu.memory_space<vmem>>, vector<128x8xbf16>,
    %c0_114 = arith.constant 0 : index
    %c8_115 = arith.constant 8 : index
    %89 = vector.load %arg9[%c0_114, %c8_115] : memref<128x32xbf16, #tpu.memory_space<vmem>>, vector<128x8xbf16>
    tpu.vector_store %arg9[%c0_114, %c8_115], %47 {strides = array<i32>} : memref<128x32xbf16, #tpu.memory_space<vmem>>, vector<128x8xbf16>,
    %c0_116 = arith.constant 0 : index
    %c16_117 = arith.constant 16 : index
    %90 = vector.load %arg9[%c0_116, %c16_117] : memref<128x32xbf16, #tpu.memory_space<vmem>>, vector<128x8xbf16>
    tpu.vector_store %arg9[%c0_116, %c16_117], %53 {strides = array<i32>} : memref<128x32xbf16, #tpu.memory_space<vmem>>, vector<128x8xbf16>,
    %c0_118 = arith.constant 0 : index
    %c24_119 = arith.constant 24 : index
    %91 = vector.load %arg9[%c0_118, %c24_119] : memref<128x32xbf16, #tpu.memory_space<vmem>>, vector<128x8xbf16>
    tpu.vector_store %arg9[%c0_118, %c24_119], %56 {strides = array<i32>} : memref<128x32xbf16, #tpu.memory_space<vmem>>, vector<128x8xbf16>,
    %c0_120 = arith.constant 0 : index
    %c0_121 = arith.constant 0 : index
    %92 = vector.load %arg9[%c0_120, %c0_121] : memref<128x32xbf16, #tpu.memory_space<vmem>>, vector<128x32xbf16>
    %c1_122 = arith.constant 1 : index
    %c0_123 = arith.constant 0 : index
    %c0_124 = arith.constant 0 : index
    %93 = vector.load %arg3[%c1_122, %c0_123, %c0_124] : memref<4x32x4xbf16, #tpu.memory_space<vmem>>, vector<1x32x4xbf16>
    %94 = vector.shape_cast %93 : vector<1x32x4xbf16> to vector<32x4xbf16>
    %cst_125 = arith.constant dense<0.000000e+00> : vector<128x4xf32>
    %95 = tpu.matmul %92, %94, %cst_125 {dimension_numbers = #tpu.dot_dimension_numbers<[1], [0], [0], [1], [0, 0, 1, 1], [], []>} : vector<128x32xbf16>, vector<32x4xbf16>, vector<128x4xf32> -> vector<128x4xf32>
    %96 = vector.shape_cast %95 : vector<128x4xf32> to vector<2x64x4xf32>
    %97 = arith.truncf %96 : vector<2x64x4xf32> to vector<2x64x4xbf16>
    %c0_126 = arith.constant 0 : index
    %c1_127 = arith.constant 1 : index
    %c0_128 = arith.constant 0 : index
    %c0_129 = arith.constant 0 : index
    %98 = vector.load %arg4[%c0_126, %c1_127, %c0_128, %c0_129] : memref<2x4x64x4xbf16, #tpu.memory_space<vmem>>, vector<2x1x64x4xbf16>
    %99 = vector.shape_cast %98 : vector<2x1x64x4xbf16> to vector<2x64x4xbf16>
    %100 = vector.shape_cast %97 : vector<2x64x4xbf16> to vector<2x1x64x4xbf16>
    tpu.vector_store %arg4[%c0_126, %c1_127, %c0_128, %c0_129], %100 {strides = array<i32>} : memref<2x4x64x4xbf16, #tpu.memory_space<vmem>>, vector<2x1x64x4xbf16>,
    %cst_130 = arith.constant dense<0.000000e+00> : vector<4xf32>
    %101 = vector.multi_reduction <add>, %95, %cst_130 [0] : vector<128x4xf32> to vector<4xf32>
    %102 = vector.shape_cast %101 : vector<4xf32> to vector<1x4xf32>
    %103 = arith.addf %83, %102 : vector<1x4xf32>
    %104 = arith.mulf %95, %95 : vector<128x4xf32>
    %cst_131 = arith.constant dense<0.000000e+00> : vector<4xf32>
    %105 = vector.multi_reduction <add>, %104, %cst_131 [0] : vector<128x4xf32> to vector<4xf32>
    %106 = vector.shape_cast %105 : vector<4xf32> to vector<1x4xf32>
    %107 = arith.addf %87, %106 : vector<1x4xf32>
    %c0_132 = arith.constant 0 : index
    %c0_133 = arith.constant 0 : index
    %108 = vector.load %arg9[%c0_132, %c0_133] : memref<128x32xbf16, #tpu.memory_space<vmem>>, vector<128x8xbf16>
    tpu.vector_store %arg9[%c0_132, %c0_133], %50 {strides = array<i32>} : memref<128x32xbf16, #tpu.memory_space<vmem>>, vector<128x8xbf16>,
    %c0_134 = arith.constant 0 : index
    %c8_135 = arith.constant 8 : index
    %109 = vector.load %arg9[%c0_134, %c8_135] : memref<128x32xbf16, #tpu.memory_space<vmem>>, vector<128x8xbf16>
    tpu.vector_store %arg9[%c0_134, %c8_135], %53 {strides = array<i32>} : memref<128x32xbf16, #tpu.memory_space<vmem>>, vector<128x8xbf16>,
    %c0_136 = arith.constant 0 : index
    %c16_137 = arith.constant 16 : index
    %110 = vector.load %arg9[%c0_136, %c16_137] : memref<128x32xbf16, #tpu.memory_space<vmem>>, vector<128x8xbf16>
    tpu.vector_store %arg9[%c0_136, %c16_137], %59 {strides = array<i32>} : memref<128x32xbf16, #tpu.memory_space<vmem>>, vector<128x8xbf16>,
    %c0_138 = arith.constant 0 : index
    %c24_139 = arith.constant 24 : index
    %111 = vector.load %arg9[%c0_138, %c24_139] : memref<128x32xbf16, #tpu.memory_space<vmem>>, vector<128x8xbf16>
    tpu.vector_store %arg9[%c0_138, %c24_139], %62 {strides = array<i32>} : memref<128x32xbf16, #tpu.memory_space<vmem>>, vector<128x8xbf16>,
    %c0_140 = arith.constant 0 : index
    %c0_141 = arith.constant 0 : index
    %112 = vector.load %arg9[%c0_140, %c0_141] : memref<128x32xbf16, #tpu.memory_space<vmem>>, vector<128x32xbf16>
    %c2_142 = arith.constant 2 : index
    %c0_143 = arith.constant 0 : index
    %c0_144 = arith.constant 0 : index
    %113 = vector.load %arg3[%c2_142, %c0_143, %c0_144] : memref<4x32x4xbf16, #tpu.memory_space<vmem>>, vector<1x32x4xbf16>
    %114 = vector.shape_cast %113 : vector<1x32x4xbf16> to vector<32x4xbf16>
    %cst_145 = arith.constant dense<0.000000e+00> : vector<128x4xf32>
    %115 = tpu.matmul %112, %114, %cst_145 {dimension_numbers = #tpu.dot_dimension_numbers<[1], [0], [0], [1], [0, 0, 1, 1], [], []>} : vector<128x32xbf16>, vector<32x4xbf16>, vector<128x4xf32> -> vector<128x4xf32>
    %116 = vector.shape_cast %115 : vector<128x4xf32> to vector<2x64x4xf32>
    %117 = arith.truncf %116 : vector<2x64x4xf32> to vector<2x64x4xbf16>
    %c0_146 = arith.constant 0 : index
    %c2_147 = arith.constant 2 : index
    %c0_148 = arith.constant 0 : index
    %c0_149 = arith.constant 0 : index
    %118 = vector.load %arg4[%c0_146, %c2_147, %c0_148, %c0_149] : memref<2x4x64x4xbf16, #tpu.memory_space<vmem>>, vector<2x1x64x4xbf16>
    %119 = vector.shape_cast %118 : vector<2x1x64x4xbf16> to vector<2x64x4xbf16>
    %120 = vector.shape_cast %117 : vector<2x64x4xbf16> to vector<2x1x64x4xbf16>
    tpu.vector_store %arg4[%c0_146, %c2_147, %c0_148, %c0_149], %120 {strides = array<i32>} : memref<2x4x64x4xbf16, #tpu.memory_space<vmem>>, vector<2x1x64x4xbf16>,
    %cst_150 = arith.constant dense<0.000000e+00> : vector<4xf32>
    %121 = vector.multi_reduction <add>, %115, %cst_150 [0] : vector<128x4xf32> to vector<4xf32>
    %122 = vector.shape_cast %121 : vector<4xf32> to vector<1x4xf32>
    %123 = arith.addf %103, %122 : vector<1x4xf32>
    %124 = arith.mulf %115, %115 : vector<128x4xf32>
    %cst_151 = arith.constant dense<0.000000e+00> : vector<4xf32>
    %125 = vector.multi_reduction <add>, %124, %cst_151 [0] : vector<128x4xf32> to vector<4xf32>
    %126 = vector.shape_cast %125 : vector<4xf32> to vector<1x4xf32>
    %127 = arith.addf %107, %126 : vector<1x4xf32>
    %c0_152 = arith.constant 0 : index
    %c0_153 = arith.constant 0 : index
    %128 = vector.load %arg9[%c0_152, %c0_153] : memref<128x32xbf16, #tpu.memory_space<vmem>>, vector<128x8xbf16>
    tpu.vector_store %arg9[%c0_152, %c0_153], %53 {strides = array<i32>} : memref<128x32xbf16, #tpu.memory_space<vmem>>, vector<128x8xbf16>,
    %c0_154 = arith.constant 0 : index
    %c8_155 = arith.constant 8 : index
    %129 = vector.load %arg9[%c0_154, %c8_155] : memref<128x32xbf16, #tpu.memory_space<vmem>>, vector<128x8xbf16>
    tpu.vector_store %arg9[%c0_154, %c8_155], %56 {strides = array<i32>} : memref<128x32xbf16, #tpu.memory_space<vmem>>, vector<128x8xbf16>,
    %c0_156 = arith.constant 0 : index
    %c16_157 = arith.constant 16 : index
    %130 = vector.load %arg9[%c0_156, %c16_157] : memref<128x32xbf16, #tpu.memory_space<vmem>>, vector<128x8xbf16>
    tpu.vector_store %arg9[%c0_156, %c16_157], %62 {strides = array<i32>} : memref<128x32xbf16, #tpu.memory_space<vmem>>, vector<128x8xbf16>,
    %c0_158 = arith.constant 0 : index
    %c24_159 = arith.constant 24 : index
    %131 = vector.load %arg9[%c0_158, %c24_159] : memref<128x32xbf16, #tpu.memory_space<vmem>>, vector<128x8xbf16>
    tpu.vector_store %arg9[%c0_158, %c24_159], %65 {strides = array<i32>} : memref<128x32xbf16, #tpu.memory_space<vmem>>, vector<128x8xbf16>,
    %c0_160 = arith.constant 0 : index
    %c0_161 = arith.constant 0 : index
    %132 = vector.load %arg9[%c0_160, %c0_161] : memref<128x32xbf16, #tpu.memory_space<vmem>>, vector<128x32xbf16>
    %c3 = arith.constant 3 : index
    %c0_162 = arith.constant 0 : index
    %c0_163 = arith.constant 0 : index
    %133 = vector.load %arg3[%c3, %c0_162, %c0_163] : memref<4x32x4xbf16, #tpu.memory_space<vmem>>, vector<1x32x4xbf16>
    %134 = vector.shape_cast %133 : vector<1x32x4xbf16> to vector<32x4xbf16>
    %cst_164 = arith.constant dense<0.000000e+00> : vector<128x4xf32>
    %135 = tpu.matmul %132, %134, %cst_164 {dimension_numbers = #tpu.dot_dimension_numbers<[1], [0], [0], [1], [0, 0, 1, 1], [], []>} : vector<128x32xbf16>, vector<32x4xbf16>, vector<128x4xf32> -> vector<128x4xf32>
    %136 = vector.shape_cast %135 : vector<128x4xf32> to vector<2x64x4xf32>
    %137 = arith.truncf %136 : vector<2x64x4xf32> to vector<2x64x4xbf16>
    %c0_165 = arith.constant 0 : index
    %c3_166 = arith.constant 3 : index
    %c0_167 = arith.constant 0 : index
    %c0_168 = arith.constant 0 : index
    %138 = vector.load %arg4[%c0_165, %c3_166, %c0_167, %c0_168] : memref<2x4x64x4xbf16, #tpu.memory_space<vmem>>, vector<2x1x64x4xbf16>
    %139 = vector.shape_cast %138 : vector<2x1x64x4xbf16> to vector<2x64x4xbf16>
    %140 = vector.shape_cast %137 : vector<2x64x4xbf16> to vector<2x1x64x4xbf16>
    tpu.vector_store %arg4[%c0_165, %c3_166, %c0_167, %c0_168], %140 {strides = array<i32>} : memref<2x4x64x4xbf16, #tpu.memory_space<vmem>>, vector<2x1x64x4xbf16>,
    %cst_169 = arith.constant dense<0.000000e+00> : vector<4xf32>
    %141 = vector.multi_reduction <add>, %135, %cst_169 [0] : vector<128x4xf32> to vector<4xf32>
    %142 = vector.shape_cast %141 : vector<4xf32> to vector<1x4xf32>
    %143 = arith.addf %123, %142 : vector<1x4xf32>
    %144 = arith.mulf %135, %135 : vector<128x4xf32>
    %cst_170 = arith.constant dense<0.000000e+00> : vector<4xf32>
    %145 = vector.multi_reduction <add>, %144, %cst_170 [0] : vector<128x4xf32> to vector<4xf32>
    %146 = vector.shape_cast %145 : vector<4xf32> to vector<1x4xf32>
    %147 = arith.addf %127, %146 : vector<1x4xf32>
    %c0_171 = arith.constant 0 : index
    %c0_172 = arith.constant 0 : index
    %c0_173 = arith.constant 0 : index
    %148 = vector.load %arg5[%c0_171, %c0_172, %c0_173] : memref<1x2x4xf32, #tpu.memory_space<vmem>>, vector<1x1x4xf32>
    %149 = vector.shape_cast %148 : vector<1x1x4xf32> to vector<1x4xf32>
    %150 = vector.shape_cast %143 : vector<1x4xf32> to vector<1x1x4xf32>
    tpu.vector_store %arg5[%c0_171, %c0_172, %c0_173], %150 {strides = array<i32>} : memref<1x2x4xf32, #tpu.memory_space<vmem>>, vector<1x1x4xf32>,
    %c0_174 = arith.constant 0 : index
    %c1_175 = arith.constant 1 : index
    %c0_176 = arith.constant 0 : index
    %151 = vector.load %arg5[%c0_174, %c1_175, %c0_176] : memref<1x2x4xf32, #tpu.memory_space<vmem>>, vector<1x1x4xf32>
    %152 = vector.shape_cast %151 : vector<1x1x4xf32> to vector<1x4xf32>
    %153 = vector.shape_cast %147 : vector<1x4xf32> to vector<1x1x4xf32>
    tpu.vector_store %arg5[%c0_174, %c1_175, %c0_176], %153 {strides = array<i32>} : memref<1x2x4xf32, #tpu.memory_space<vmem>>, vector<1x1x4xf32>,
    return
  }
  func.func @transform_0(%arg0: i32) -> (i32, i32, i32, i32) {
    %c0_i32 = arith.constant 0 : i32
    %c0_i32_0 = arith.constant 0 : i32
    %c0_i32_1 = arith.constant 0 : i32
    %c0_i32_2 = arith.constant 0 : i32
    return %arg0, %c0_i32, %c0_i32_0, %c0_i32_1 : i32, i32, i32, i32
  }
  func.func @transform_1(%arg0: i32) -> (i32, i32) {
    %c0_i32 = arith.constant 0 : i32
    %c0_i32_0 = arith.constant 0 : i32
    %c0_i32_1 = arith.constant 0 : i32
    return %c0_i32, %c0_i32_0 : i32, i32
  }
  func.func @transform_2(%arg0: i32) -> (i32, i32, i32) {
    %c0_i32 = arith.constant 0 : i32
    %c0_i32_0 = arith.constant 0 : i32
    %c0_i32_1 = arith.constant 0 : i32
    %c0_i32_2 = arith.constant 0 : i32
    return %c0_i32, %c0_i32_0, %c0_i32_1 : i32, i32, i32
  }
  func.func @transform_3(%arg0: i32) -> (i32, i32, i32, i32) {
    %c0_i32 = arith.constant 0 : i32
    %c0_i32_0 = arith.constant 0 : i32
    %c0_i32_1 = arith.constant 0 : i32
    %c0_i32_2 = arith.constant 0 : i32
    return %arg0, %c0_i32, %c0_i32_0, %c0_i32_1 : i32, i32, i32, i32
  }
  func.func @transform_4(%arg0: i32) -> (i32, i32, i32) {
    %c0_i32 = arith.constant 0 : i32
    %c0_i32_0 = arith.constant 0 : i32
    %c0_i32_1 = arith.constant 0 : i32
    return %arg0, %c0_i32, %c0_i32_0 : i32, i32, i32
  }
}

</mosaic_0001>

<llo_original>
// kernel: unet_innermost_forward.1
$region0: #{unet_innermost_forward.1}
  #allocation0 [shape = 'u32[]', space=smem, size = 0x4, offset = 0x4, fixed_abs, tag = 'smem constant byte address 0x4 - core index']
  #allocation1 [shape = 'u32[144,128]{1,0:T(1,128)}', space=vmem, size = 0x12000, scoped, tag = 'internal scratch']
  #allocation2 [shape = 'f32[2,9,9,16]{3,2,1,0:T(8,128)}', space=vmem, size = 0x24000, scoped, tag = 'scratch operand']
  #allocation3 [shape = 'f32[2,10,10,8]{3,2,1,0:T(8,128)}', space=vmem, size = 0x28000, scoped, tag = 'scratch operand']
  #allocation4 [shape = 'bf16[128,64]{1,0:T(8,128)(2,1)}', space=vmem, size = 0x8000, scoped, tag = 'scratch operand']
  #allocation5 [shape = 'bf16[128,32]{1,0:T(8,128)(2,1)}', space=vmem, size = 0x8000, scoped, tag = 'scratch operand']
  %s0 = inlined_call_operand.vmem [shape: bf16[2,9,9,16], index: 0, kind: input, shape index: {}]
  %s1 = inlined_call_operand.vmem [shape: bf16[64,8], index: 1, kind: input, shape index: {}]
  %s2 = inlined_call_operand.vmem [shape: bf16[4,32,4], index: 2, kind: input, shape index: {}]
  %s3 = inlined_call_operand.vmem [shape: bf16[2,4,64,4], index: 3, kind: output, shape index: {0}]
  %s4 = inlined_call_operand.vmem [shape: f32[1,2,4], index: 4, kind: output, shape index: {1}]
  %5 = xla_tuple %s3, %s4
  %s6 = sld [smem:[#allocation0]]
  $region30: #{unet_innermost_forward.1} parent=0
    _
  %s8 = ssub.s32 1, %s6
  %s9 = scalar_select 0, %s8, %s6
  // Predicated region
  $region2: #{unet_innermost_forward.1} parent=0 // pred_check
    _
  $region3: #{unet_innermost_forward.1} parent=0 // pred_check_branch
    %11 = sbr.rel (0) target = $region5
  $region4: #{unet_innermost_forward.1} parent=0 // pred_region
    _
  $region5: #{unet_innermost_forward.1} parent=0 // pred_fallthru
    _
  // Predicated region
  $region6: #{unet_innermost_forward.1} parent=0 // pred_check
    _
  $region7: #{unet_innermost_forward.1} parent=0 // pred_check_branch
    %13 = sbr.rel (0) target = $region9
  $region8: #{unet_innermost_forward.1} parent=0 // pred_region
    _
  $region9: #{unet_innermost_forward.1} parent=0 // pred_fallthru
    _
  // Predicated region
  $region10: #{unet_innermost_forward.1} parent=0 // pred_check
    _
  $region11: #{unet_innermost_forward.1} parent=0 // pred_check_branch
    %15 = sbr.rel (0) target = $region13
  $region12: #{unet_innermost_forward.1} parent=0 // pred_region
    _
  $region13: #{unet_innermost_forward.1} parent=0 // pred_fallthru
    _
  %v17 = vld [vmem:[%s0] sm:$0xf]
  %v18 = vld [vmem:[%s0 + $0x4] sm:$0x1]
  %v19 = vld [vmem:[%s0 + $0x8] sm:$0xf]
  %v20 = vld [vmem:[%s0 + $0xc] sm:$0x1]
  %v21 = vld [vmem:[%s0 + $0x10] sm:$0xf]
  %v22 = vld [vmem:[%s0 + $0x14] sm:$0x1]
  %v23 = vld [vmem:[%s0 + $0x18] sm:$0xf]
  %v24 = vld [vmem:[%s0 + $0x1c] sm:$0x1]
  %v25 = vld [vmem:[%s0 + $0x20] sm:$0xf]
  %v26 = vld [vmem:[%s0 + $0x24] sm:$0x1]
  %v27 = vld [vmem:[%s0 + $0x28] sm:$0xf]
  %v28 = vld [vmem:[%s0 + $0x2c] sm:$0x1]
  %v29 = vld [vmem:[%s0 + $0x30] sm:$0xf]
  %v30 = vld [vmem:[%s0 + $0x34] sm:$0x1]
  %v31 = vld [vmem:[%s0 + $0x38] sm:$0xf]
  %v32 = vld [vmem:[%s0 + $0x3c] sm:$0x1]
  %v33 = vld [vmem:[%s0 + $0x40] sm:$0xf]
  %v34 = vld [vmem:[%s0 + $0x44] sm:$0x1]
  %v35 = vld [vmem:[%s0 + $0x48] sm:$0xf]
  %v36 = vld [vmem:[%s0 + $0x4c] sm:$0x1]
  %v37 = vld [vmem:[%s0 + $0x50] sm:$0xf]
  %v38 = vld [vmem:[%s0 + $0x54] sm:$0x1]
  %v39 = vld [vmem:[%s0 + $0x58] sm:$0xf]
  %v40 = vld [vmem:[%s0 + $0x5c] sm:$0x1]
  %v41 = vld [vmem:[%s0 + $0x60] sm:$0xf]
  %v42 = vld [vmem:[%s0 + $0x64] sm:$0x1]
  %v43 = vld [vmem:[%s0 + $0x68] sm:$0xf]
  %v44 = vld [vmem:[%s0 + $0x6c] sm:$0x1]
  %v45 = vld [vmem:[%s0 + $0x70] sm:$0xf]
  %v46 = vld [vmem:[%s0 + $0x74] sm:$0x1]
  %v47 = vld [vmem:[%s0 + $0x78] sm:$0xf]
  %v48 = vld [vmem:[%s0 + $0x7c] sm:$0x1]
  %v49 = vld [vmem:[%s0 + $0x80] sm:$0xf]
  %v50 = vld [vmem:[%s0 + $0x84] sm:$0x1]
  %v51 = vld [vmem:[%s0 + $0x88] sm:$0xf]
  %v52 = vld [vmem:[%s0 + $0x8c] sm:$0x1]
  %v53 = vunpack.c.l.bf16 %v17
  %v54 = vunpack.c.l.bf16 %v18
  %v55 = vunpack.c.l.bf16 %v19
  %v56 = vunpack.c.l.bf16 %v20
  %v57 = vunpack.c.l.bf16 %v21
  %v58 = vunpack.c.l.bf16 %v22
  %v59 = vunpack.c.l.bf16 %v23
  %v60 = vunpack.c.l.bf16 %v24
  %v61 = vunpack.c.l.bf16 %v25
  %v62 = vunpack.c.l.bf16 %v26
  %v63 = vunpack.c.l.bf16 %v27
  %v64 = vunpack.c.l.bf16 %v28
  %v65 = vunpack.c.l.bf16 %v29
  %v66 = vunpack.c.l.bf16 %v30
  %v67 = vunpack.c.l.bf16 %v31
  %v68 = vunpack.c.l.bf16 %v32
  %v69 = vunpack.c.l.bf16 %v33
  %v70 = vunpack.c.l.bf16 %v34
  %v71 = vunpack.c.l.bf16 %v35
  %v72 = vunpack.c.l.bf16 %v36
  %v73 = vunpack.c.l.bf16 %v37
  %v74 = vunpack.c.l.bf16 %v38
  %v75 = vunpack.c.l.bf16 %v39
  %v76 = vunpack.c.l.bf16 %v40
  %v77 = vunpack.c.l.bf16 %v41
  %v78 = vunpack.c.l.bf16 %v42
  %v79 = vunpack.c.l.bf16 %v43
  %v80 = vunpack.c.l.bf16 %v44
  %v81 = vunpack.c.l.bf16 %v45
  %v82 = vunpack.c.l.bf16 %v46
  %v83 = vunpack.c.l.bf16 %v47
  %v84 = vunpack.c.l.bf16 %v48
  %v85 = vunpack.c.l.bf16 %v49
  %v86 = vunpack.c.l.bf16 %v50
  %v87 = vunpack.c.l.bf16 %v51
  %v88 = vunpack.c.l.bf16 %v52
  %vm89 = vcmp.ge.f32.partialorder %v53, 0.0
  %vm90 = vcmp.ge.f32.partialorder %v54, 0.0
  %vm91 = vcmp.ge.f32.partialorder %v55, 0.0
  %vm92 = vcmp.ge.f32.partialorder %v56, 0.0
  %vm93 = vcmp.ge.f32.partialorder %v57, 0.0
  %vm94 = vcmp.ge.f32.partialorder %v58, 0.0
  %vm95 = vcmp.ge.f32.partialorder %v59, 0.0
  %vm96 = vcmp.ge.f32.partialorder %v60, 0.0
  %vm97 = vcmp.ge.f32.partialorder %v61, 0.0
  %vm98 = vcmp.ge.f32.partialorder %v62, 0.0
  %vm99 = vcmp.ge.f32.partialorder %v63, 0.0
  %vm100 = vcmp.ge.f32.partialorder %v64, 0.0
  %vm101 = vcmp.ge.f32.partialorder %v65, 0.0
  %vm102 = vcmp.ge.f32.partialorder %v66, 0.0
  %vm103 = vcmp.ge.f32.partialorder %v67, 0.0
  %vm104 = vcmp.ge.f32.partialorder %v68, 0.0
  %vm105 = vcmp.ge.f32.partialorder %v69, 0.0
  %vm106 = vcmp.ge.f32.partialorder %v70, 0.0
  %vm107 = vcmp.ge.f32.partialorder %v71, 0.0
  %vm108 = vcmp.ge.f32.partialorder %v72, 0.0
  %vm109 = vcmp.ge.f32.partialorder %v73, 0.0
  %vm110 = vcmp.ge.f32.partialorder %v74, 0.0
  %vm111 = vcmp.ge.f32.partialorder %v75, 0.0
  %vm112 = vcmp.ge.f32.partialorder %v76, 0.0
  %vm113 = vcmp.ge.f32.partialorder %v77, 0.0
  %vm114 = vcmp.ge.f32.partialorder %v78, 0.0
  %vm115 = vcmp.ge.f32.partialorder %v79, 0.0
  %vm116 = vcmp.ge.f32.partialorder %v80, 0.0
  %vm117 = vcmp.ge.f32.partialorder %v81, 0.0
  %vm118 = vcmp.ge.f32.partialorder %v82, 0.0
  %vm119 = vcmp.ge.f32.partialorder %v83, 0.0
  %vm120 = vcmp.ge.f32.partialorder %v84, 0.0
  %vm121 = vcmp.ge.f32.partialorder %v85, 0.0
  %vm122 = vcmp.ge.f32.partialorder %v86, 0.0
  %vm123 = vcmp.ge.f32.partialorder %v87, 0.0
  %vm124 = vcmp.ge.f32.partialorder %v88, 0.0
  %v125 = vmul.f32 %v53, 0.2
  %v126 = vmul.f32 %v54, 0.2
  %v127 = vmul.f32 %v55, 0.2
  %v128 = vmul.f32 %v56, 0.2
  %v129 = vmul.f32 %v57, 0.2
  %v130 = vmul.f32 %v58, 0.2
  %v131 = vmul.f32 %v59, 0.2
  %v132 = vmul.f32 %v60, 0.2
  %v133 = vmul.f32 %v61, 0.2
  %v134 = vmul.f32 %v62, 0.2
  %v135 = vmul.f32 %v63, 0.2
  %v136 = vmul.f32 %v64, 0.2
  %v137 = vmul.f32 %v65, 0.2
  %v138 = vmul.f32 %v66, 0.2
  %v139 = vmul.f32 %v67, 0.2
  %v140 = vmul.f32 %v68, 0.2
  %v141 = vmul.f32 %v69, 0.2
  %v142 = vmul.f32 %v70, 0.2
  %v143 = vmul.f32 %v71, 0.2
  %v144 = vmul.f32 %v72, 0.2
  %v145 = vmul.f32 %v73, 0.2
  %v146 = vmul.f32 %v74, 0.2
  %v147 = vmul.f32 %v75, 0.2
  %v148 = vmul.f32 %v76, 0.2
  %v149 = vmul.f32 %v77, 0.2
  %v150 = vmul.f32 %v78, 0.2
  %v151 = vmul.f32 %v79, 0.2
  %v152 = vmul.f32 %v80, 0.2
  %v153 = vmul.f32 %v81, 0.2
  %v154 = vmul.f32 %v82, 0.2
  %v155 = vmul.f32 %v83, 0.2
  %v156 = vmul.f32 %v84, 0.2
  %v157 = vmul.f32 %v85, 0.2
  %v158 = vmul.f32 %v86, 0.2
  %v159 = vmul.f32 %v87, 0.2
  %v160 = vmul.f32 %v88, 0.2
  %v161 = vsel %vm89, %v53, %v125
  %v162 = vsel %vm90, %v54, %v126
  %v163 = vsel %vm91, %v55, %v127
  %v164 = vsel %vm92, %v56, %v128
  %v165 = vsel %vm93, %v57, %v129
  %v166 = vsel %vm94, %v58, %v130
  %v167 = vsel %vm95, %v59, %v131
  %v168 = vsel %vm96, %v60, %v132
  %v169 = vsel %vm97, %v61, %v133
  %v170 = vsel %vm98, %v62, %v134
  %v171 = vsel %vm99, %v63, %v135
  %v172 = vsel %vm100, %v64, %v136
  %v173 = vsel %vm101, %v65, %v137
  %v174 = vsel %vm102, %v66, %v138
  %v175 = vsel %vm103, %v67, %v139
  %v176 = vsel %vm104, %v68, %v140
  %v177 = vsel %vm105, %v69, %v141
  %v178 = vsel %vm106, %v70, %v142
  %v179 = vsel %vm107, %v71, %v143
  %v180 = vsel %vm108, %v72, %v144
  %v181 = vsel %vm109, %v73, %v145
  %v182 = vsel %vm110, %v74, %v146
  %v183 = vsel %vm111, %v75, %v147
  %v184 = vsel %vm112, %v76, %v148
  %v185 = vsel %vm113, %v77, %v149
  %v186 = vsel %vm114, %v78, %v150
  %v187 = vsel %vm115, %v79, %v151
  %v188 = vsel %vm116, %v80, %v152
  %v189 = vsel %vm117, %v81, %v153
  %v190 = vsel %vm118, %v82, %v154
  %v191 = vsel %vm119, %v83, %v155
  %v192 = vsel %vm120, %v84, %v156
  %v193 = vsel %vm121, %v85, %v157
  %v194 = vsel %vm122, %v86, %v158
  %v195 = vsel %vm123, %v87, %v159
  %v196 = vsel %vm124, %v88, %v160
  %vm197 = vcmask 130048
  %198 = vst.msk [vmem:[#allocation2] sm:$0xff] %vm197, %v161
  %vm199 = vcmask 122880
  %200 = vst.msk [vmem:[#allocation2 + $0x8] sm:$0x1] %vm199, %v162
  %201 = vst.msk [vmem:[#allocation2 + $0x10] sm:$0xff] %vm197, %v163
  %202 = vst.msk [vmem:[#allocation2 + $0x18] sm:$0x1] %vm199, %v164
  %203 = vst.msk [vmem:[#allocation2 + $0x20] sm:$0xff] %vm197, %v165
  %204 = vst.msk [vmem:[#allocation2 + $0x28] sm:$0x1] %vm199, %v166
  %205 = vst.msk [vmem:[#allocation2 + $0x30] sm:$0xff] %vm197, %v167
  %206 = vst.msk [vmem:[#allocation2 + $0x38] sm:$0x1] %vm199, %v168
  %207 = vst.msk [vmem:[#allocation2 + $0x40] sm:$0xff] %vm197, %v169
  %208 = vst.msk [vmem:[#allocation2 + $0x48] sm:$0x1] %vm199, %v170
  %209 = vst.msk [vmem:[#allocation2 + $0x50] sm:$0xff] %vm197, %v171
  %210 = vst.msk [vmem:[#allocation2 + $0x58] sm:$0x1] %vm199, %v172
  %211 = vst.msk [vmem:[#allocation2 + $0x60] sm:$0xff] %vm197, %v173
  %212 = vst.msk [vmem:[#allocation2 + $0x68] sm:$0x1] %vm199, %v174
  %213 = vst.msk [vmem:[#allocation2 + $0x70] sm:$0xff] %vm197, %v175
  %214 = vst.msk [vmem:[#allocation2 + $0x78] sm:$0x1] %vm199, %v176
  %215 = vst.msk [vmem:[#allocation2 + $0x80] sm:$0xff] %vm197, %v177
  %216 = vst.msk [vmem:[#allocation2 + $0x88] sm:$0x1] %vm199, %v178
  %217 = vst.msk [vmem:[#allocation2 + $0x90] sm:$0xff] %vm197, %v179
  %218 = vst.msk [vmem:[#allocation2 + $0x98] sm:$0x1] %vm199, %v180
  %219 = vst.msk [vmem:[#allocation2 + $0xa0] sm:$0xff] %vm197, %v181
  %220 = vst.msk [vmem:[#allocation2 + $0xa8] sm:$0x1] %vm199, %v182
  %221 = vst.msk [vmem:[#allocation2 + $0xb0] sm:$0xff] %vm197, %v183
  %222 = vst.msk [vmem:[#allocation2 + $0xb8] sm:$0x1] %vm199, %v184
  %223 = vst.msk [vmem:[#allocation2 + $0xc0] sm:$0xff] %vm197, %v185
  %224 = vst.msk [vmem:[#allocation2 + $0xc8] sm:$0x1] %vm199, %v186
  %225 = vst.msk [vmem:[#allocation2 + $0xd0] sm:$0xff] %vm197, %v187
  %226 = vst.msk [vmem:[#allocation2 + $0xd8] sm:$0x1] %vm199, %v188
  %227 = vst.msk [vmem:[#allocation2 + $0xe0] sm:$0xff] %vm197, %v189
  %228 = vst.msk [vmem:[#allocation2 + $0xe8] sm:$0x1] %vm199, %v190
  %229 = vst.msk [vmem:[#allocation2 + $0xf0] sm:$0xff] %vm197, %v191
  %230 = vst.msk [vmem:[#allocation2 + $0xf8] sm:$0x1] %vm199, %v192
  %231 = vst.msk [vmem:[#allocation2 + $0x100] sm:$0xff] %vm197, %v193
  %232 = vst.msk [vmem:[#allocation2 + $0x108] sm:$0x1] %vm199, %v194
  %233 = vst.msk [vmem:[#allocation2 + $0x110] sm:$0xff] %vm197, %v195
  %234 = vst.msk [vmem:[#allocation2 + $0x118] sm:$0x1] %vm199, %v196
  %v235 = vld [vmem:[#allocation2] sm:$0xff]
  %v236 = vld [vmem:[#allocation2 + $0x10] sm:$0xff]
  %v237 = vld [vmem:[#allocation2 + $0x20] sm:$0xff]
  %v238 = vld [vmem:[#allocation2 + $0x30] sm:$0xff]
  %v239 = vld [vmem:[#allocation2 + $0x40] sm:$0xff]
  %v240 = vld [vmem:[#allocation2 + $0x50] sm:$0xff]
  %v241 = vld [vmem:[#allocation2 + $0x60] sm:$0xff]
  %v242 = vld [vmem:[#allocation2 + $0x70] sm:$0xff]
  %v243 = vld [vmem:[#allocation2 + $0x90] sm:$0xff]
  %v244 = vld [vmem:[#allocation2 + $0xa0] sm:$0xff]
  %v245 = vld [vmem:[#allocation2 + $0xb0] sm:$0xff]
  %v246 = vld [vmem:[#allocation2 + $0xc0] sm:$0xff]
  %v247 = vld [vmem:[#allocation2 + $0xd0] sm:$0xff]
  %v248 = vld [vmem:[#allocation2 + $0xe0] sm:$0xff]
  %v249 = vld [vmem:[#allocation2 + $0xf0] sm:$0xff]
  %v250 = vld [vmem:[#allocation2 + $0x100] sm:$0xff]
  %v251 = vpack.c.bf16 %v236, %v235
  %v252 = vpack.c.bf16 %v238, %v237
  %v253 = vpack.c.bf16 %v240, %v239
  %v254 = vpack.c.bf16 %v242, %v241
  %v255 = vpack.c.bf16 %v244, %v243
  %v256 = vpack.c.bf16 %v246, %v245
  %v257 = vpack.c.bf16 %v248, %v247
  %v258 = vpack.c.bf16 %v250, %v249
  %v267 = vunpack.c.l.b16 %v251
  %v268 = vunpack.c.h.b16 %v251
  %v269 = vunpack.c.l.b16 %v252
  %v270 = vunpack.c.h.b16 %v252
  %v271 = vunpack.c.l.b16 %v253
  %v272 = vunpack.c.h.b16 %v253
  %v273 = vunpack.c.l.b16 %v254
  %v274 = vunpack.c.h.b16 %v254
  %v275 = vunpack.c.l.b16 %v255
  %v276 = vunpack.c.h.b16 %v255
  %v277 = vunpack.c.l.b16 %v256
  %v278 = vunpack.c.h.b16 %v256
  %v279 = vunpack.c.l.b16 %v257
  %v280 = vunpack.c.h.b16 %v257
  %v281 = vunpack.c.l.b16 %v258
  %v282 = vunpack.c.h.b16 %v258
  %v283 = vpack.c.b16 %v267, %v267
  %v284 = vpack.c.b16 %v268, %v268
  %v285 = vpack.c.b16 %v269, %v269
  %v286 = vpack.c.b16 %v270, %v270
  %v287 = vpack.c.b16 %v271, %v271
  %v288 = vpack.c.b16 %v272, %v272
  %v289 = vpack.c.b16 %v273, %v273
  %v290 = vpack.c.b16 %v274, %v274
  %v291 = vpack.c.b16 %v275, %v275
  %v292 = vpack.c.b16 %v276, %v276
  %v293 = vpack.c.b16 %v277, %v277
  %v294 = vpack.c.b16 %v278, %v278
  %v295 = vpack.c.b16 %v279, %v279
  %v296 = vpack.c.b16 %v280, %v280
  %v297 = vpack.c.b16 %v281, %v281
  %v298 = vpack.c.b16 %v282, %v282
  %vm315 = vcmask 125952
  %316 = vst.msk [vmem:[#allocation4] sm:$0xf] %vm315, %v283
  %317 = vst.msk [vmem:[#allocation4 + $0x4] sm:$0xf] %vm315, %v284
  %318 = vst.msk [vmem:[#allocation4 + $0x8] sm:$0xf] %vm315, %v285
  %319 = vst.msk [vmem:[#allocation4 + $0xc] sm:$0xf] %vm315, %v286
  %320 = vst.msk [vmem:[#allocation4 + $0x10] sm:$0xf] %vm315, %v287
  %321 = vst.msk [vmem:[#allocation4 + $0x14] sm:$0xf] %vm315, %v288
  %322 = vst.msk [vmem:[#allocation4 + $0x18] sm:$0xf] %vm315, %v289
  %323 = vst.msk [vmem:[#allocation4 + $0x1c] sm:$0xf] %vm315, %v290
  %324 = vst.msk [vmem:[#allocation4 + $0x20] sm:$0xf] %vm315, %v291
  %325 = vst.msk [vmem:[#allocation4 + $0x24] sm:$0xf] %vm315, %v292
  %326 = vst.msk [vmem:[#allocation4 + $0x28] sm:$0xf] %vm315, %v293
  %327 = vst.msk [vmem:[#allocation4 + $0x2c] sm:$0xf] %vm315, %v294
  %328 = vst.msk [vmem:[#allocation4 + $0x30] sm:$0xf] %vm315, %v295
  %329 = vst.msk [vmem:[#allocation4 + $0x34] sm:$0xf] %vm315, %v296
  %330 = vst.msk [vmem:[#allocation4 + $0x38] sm:$0xf] %vm315, %v297
  %331 = vst.msk [vmem:[#allocation4 + $0x3c] sm:$0xf] %vm315, %v298
  %v332 = vld [vmem:[#allocation2 + $0x1] sm:$0xff]
  %v333 = vld [vmem:[#allocation2 + $0x11] sm:$0xff]
  %v334 = vld [vmem:[#allocation2 + $0x21] sm:$0xff]
  %v335 = vld [vmem:[#allocation2 + $0x31] sm:$0xff]
  %v336 = vld [vmem:[#allocation2 + $0x41] sm:$0xff]
  %v337 = vld [vmem:[#allocation2 + $0x51] sm:$0xff]
  %v338 = vld [vmem:[#allocation2 + $0x61] sm:$0xff]
  %v339 = vld [vmem:[#allocation2 + $0x71] sm:$0xff]
  %v340 = vld [vmem:[#allocation2 + $0x91] sm:$0xff]
  %v341 = vld [vmem:[#allocation2 + $0xa1] sm:$0xff]
  %v342 = vld [vmem:[#allocation2 + $0xb1] sm:$0xff]
  %v343 = vld [vmem:[#allocation2 + $0xc1] sm:$0xff]
  %v344 = vld [vmem:[#allocation2 + $0xd1] sm:$0xff]
  %v345 = vld [vmem:[#allocation2 + $0xe1] sm:$0xff]
  %v346 = vld [vmem:[#allocation2 + $0xf1] sm:$0xff]
  %v347 = vld [vmem:[#allocation2 + $0x101] sm:$0xff]
  %v348 = vpack.c.bf16 %v333, %v332
  %v349 = vpack.c.bf16 %v335, %v334
  %v350 = vpack.c.bf16 %v337, %v336
  %v351 = vpack.c.bf16 %v339, %v338
  %v352 = vpack.c.bf16 %v341, %v340
  %v353 = vpack.c.bf16 %v343, %v342
  %v354 = vpack.c.bf16 %v345, %v344
  %v355 = vpack.c.bf16 %v347, %v346
  %v364 = vunpack.c.l.b16 %v348
  %v365 = vunpack.c.h.b16 %v348
  %v366 = vunpack.c.l.b16 %v349
  %v367 = vunpack.c.h.b16 %v349
  %v368 = vunpack.c.l.b16 %v350
  %v369 = vunpack.c.h.b16 %v350
  %v370 = vunpack.c.l.b16 %v351
  %v371 = vunpack.c.h.b16 %v351
  %v372 = vunpack.c.l.b16 %v352
  %v373 = vunpack.c.h.b16 %v352
  %v374 = vunpack.c.l.b16 %v353
  %v375 = vunpack.c.h.b16 %v353
  %v376 = vunpack.c.l.b16 %v354
  %v377 = vunpack.c.h.b16 %v354
  %v378 = vunpack.c.l.b16 %v355
  %v379 = vunpack.c.h.b16 %v355
  %v380 = vpack.c.b16 %v364, %v364
  %v381 = vpack.c.b16 %v365, %v365
  %v382 = vpack.c.b16 %v366, %v366
  %v383 = vpack.c.b16 %v367, %v367
  %v384 = vpack.c.b16 %v368, %v368
  %v385 = vpack.c.b16 %v369, %v369
  %v386 = vpack.c.b16 %v370, %v370
  %v387 = vpack.c.b16 %v371, %v371
  %v388 = vpack.c.b16 %v372, %v372
  %v389 = vpack.c.b16 %v373, %v373
  %v390 = vpack.c.b16 %v374, %v374
  %v391 = vpack.c.b16 %v375, %v375
  %v392 = vpack.c.b16 %v376, %v376
  %v393 = vpack.c.b16 %v377, %v377
  %v394 = vpack.c.b16 %v378, %v378
  %v395 = vpack.c.b16 %v379, %v379
  %396 = vrot.lane.b32.xlu0 %v380, 16
  %v397 = vpop.permute.xlu0 %396
  %398 = vrot.lane.b32.xlu0 %v381, 16
  %v399 = vpop.permute.xlu0 %398
  %400 = vrot.lane.b32.xlu0 %v382, 16
  %v401 = vpop.permute.xlu0 %400
  %402 = vrot.lane.b32.xlu0 %v383, 16
  %v403 = vpop.permute.xlu0 %402
  %404 = vrot.lane.b32.xlu0 %v384, 16
  %v405 = vpop.permute.xlu0 %404
  %406 = vrot.lane.b32.xlu0 %v385, 16
  %v407 = vpop.permute.xlu0 %406
  %408 = vrot.lane.b32.xlu0 %v386, 16
  %v409 = vpop.permute.xlu0 %408
  %410 = vrot.lane.b32.xlu0 %v387, 16
  %v411 = vpop.permute.xlu0 %410
  %412 = vrot.lane.b32.xlu0 %v388, 16
  %v413 = vpop.permute.xlu0 %412
  %414 = vrot.lane.b32.xlu0 %v389, 16
  %v415 = vpop.permute.xlu0 %414
  %416 = vrot.lane.b32.xlu0 %v390, 16
  %v417 = vpop.permute.xlu0 %416
  %418 = vrot.lane.b32.xlu0 %v391, 16
  %v419 = vpop.permute.xlu0 %418
  %420 = vrot.lane.b32.xlu0 %v392, 16
  %v421 = vpop.permute.xlu0 %420
  %422 = vrot.lane.b32.xlu0 %v393, 16
  %v423 = vpop.permute.xlu0 %422
  %424 = vrot.lane.b32.xlu0 %v394, 16
  %v425 = vpop.permute.xlu0 %424
  %426 = vrot.lane.b32.xlu0 %v395, 16
  %v427 = vpop.permute.xlu0 %426
  %vm444 = vcmask 257152
  %445 = vst.msk [vmem:[#allocation4] sm:$0xf] %vm444, %v397
  %446 = vst.msk [vmem:[#allocation4 + $0x4] sm:$0xf] %vm444, %v399
  %447 = vst.msk [vmem:[#allocation4 + $0x8] sm:$0xf] %vm444, %v401
  %448 = vst.msk [vmem:[#allocation4 + $0xc] sm:$0xf] %vm444, %v403
  %449 = vst.msk [vmem:[#allocation4 + $0x10] sm:$0xf] %vm444, %v405
  %450 = vst.msk [vmem:[#allocation4 + $0x14] sm:$0xf] %vm444, %v407
  %451 = vst.msk [vmem:[#allocation4 + $0x18] sm:$0xf] %vm444, %v409
  %452 = vst.msk [vmem:[#allocation4 + $0x1c] sm:$0xf] %vm444, %v411
  %453 = vst.msk [vmem:[#allocation4 + $0x20] sm:$0xf] %vm444, %v413
  %454 = vst.msk [vmem:[#allocation4 + $0x24] sm:$0xf] %vm444, %v415
  %455 = vst.msk [vmem:[#allocation4 + $0x28] sm:$0xf] %vm444, %v417
  %456 = vst.msk [vmem:[#allocation4 + $0x2c] sm:$0xf] %vm444, %v419
  %457 = vst.msk [vmem:[#allocation4 + $0x30] sm:$0xf] %vm444, %v421
  %458 = vst.msk [vmem:[#allocation4 + $0x34] sm:$0xf] %vm444, %v423
  %459 = vst.msk [vmem:[#allocation4 + $0x38] sm:$0xf] %vm444, %v425
  %460 = vst.msk [vmem:[#allocation4 + $0x3c] sm:$0xf] %vm444, %v427
  %s461 = scalar_lea.vmem [#allocation2], 16
  %v462 = vld [vmem:[%s461] sm:$0xff]
  %v463 = vld [vmem:[%s461 + $0x10] sm:$0xff]
  %v464 = vld [vmem:[%s461 + $0x20] sm:$0xff]
  %v465 = vld [vmem:[%s461 + $0x30] sm:$0xff]
  %v466 = vld [vmem:[%s461 + $0x40] sm:$0xff]
  %v467 = vld [vmem:[%s461 + $0x50] sm:$0xff]
  %v468 = vld [vmem:[%s461 + $0x60] sm:$0xff]
  %v469 = vld [vmem:[%s461 + $0x70] sm:$0xff]
  %v470 = vld [vmem:[%s461 + $0x90] sm:$0xff]
  %v471 = vld [vmem:[%s461 + $0xa0] sm:$0xff]
  %v472 = vld [vmem:[%s461 + $0xb0] sm:$0xff]
  %v473 = vld [vmem:[%s461 + $0xc0] sm:$0xff]
  %v474 = vld [vmem:[%s461 + $0xd0] sm:$0xff]
  %v475 = vld [vmem:[%s461 + $0xe0] sm:$0xff]
  %v476 = vld [vmem:[%s461 + $0xf0] sm:$0xff]
  %v477 = vld [vmem:[%s461 + $0x100] sm:$0xff]
  %v478 = vpack.c.bf16 %v463, %v462
  %v479 = vpack.c.bf16 %v465, %v464
  %v480 = vpack.c.bf16 %v467, %v466
  %v481 = vpack.c.bf16 %v469, %v468
  %v482 = vpack.c.bf16 %v471, %v470
  %v483 = vpack.c.bf16 %v473, %v472
  %v484 = vpack.c.bf16 %v475, %v474
  %v485 = vpack.c.bf16 %v477, %v476
  %v494 = vunpack.c.l.b16 %v478
  %v495 = vunpack.c.h.b16 %v478
  %v496 = vunpack.c.l.b16 %v479
  %v497 = vunpack.c.h.b16 %v479
  %v498 = vunpack.c.l.b16 %v480
  %v499 = vunpack.c.h.b16 %v480
  %v500 = vunpack.c.l.b16 %v481
  %v501 = vunpack.c.h.b16 %v481
  %v502 = vunpack.c.l.b16 %v482
  %v503 = vunpack.c.h.b16 %v482
  %v504 = vunpack.c.l.b16 %v483
  %v505 = vunpack.c.h.b16 %v483
  %v506 = vunpack.c.l.b16 %v484
  %v507 = vunpack.c.h.b16 %v484
  %v508 = vunpack.c.l.b16 %v485
  %v509 = vunpack.c.h.b16 %v485
  %v510 = vpack.c.b16 %v494, %v494
  %v511 = vpack.c.b16 %v495, %v495
  %v512 = vpack.c.b16 %v496, %v496
  %v513 = vpack.c.b16 %v497, %v497
  %v514 = vpack.c.b16 %v498, %v498
  %v515 = vpack.c.b16 %v499, %v499
  %v516 = vpack.c.b16 %v500, %v500
  %v517 = vpack.c.b16 %v501, %v501
  %v518 = vpack.c.b16 %v502, %v502
  %v519 = vpack.c.b16 %v503, %v503
  %v520 = vpack.c.b16 %v504, %v504
  %v521 = vpack.c.b16 %v505, %v505
  %v522 = vpack.c.b16 %v506, %v506
  %v523 = vpack.c.b16 %v507, %v507
  %v524 = vpack.c.b16 %v508, %v508
  %v525 = vpack.c.b16 %v509, %v509
  %526 = vrot.lane.b32.xlu0 %v510, 32
  %v527 = vpop.permute.xlu0 %526
  %528 = vrot.lane.b32.xlu0 %v511, 32
  %v529 = vpop.permute.xlu0 %528
  %530 = vrot.lane.b32.xlu0 %v512, 32
  %v531 = vpop.permute.xlu0 %530
  %532 = vrot.lane.b32.xlu0 %v513, 32
  %v533 = vpop.permute.xlu0 %532
  %534 = vrot.lane.b32.xlu0 %v514, 32
  %v535 = vpop.permute.xlu0 %534
  %536 = vrot.lane.b32.xlu0 %v515, 32
  %v537 = vpop.permute.xlu0 %536
  %538 = vrot.lane.b32.xlu0 %v516, 32
  %v539 = vpop.permute.xlu0 %538
  %540 = vrot.lane.b32.xlu0 %v517, 32
  %v541 = vpop.permute.xlu0 %540
  %542 = vrot.lane.b32.xlu0 %v518, 32
  %v543 = vpop.permute.xlu0 %542
  %544 = vrot.lane.b32.xlu0 %v519, 32
  %v545 = vpop.permute.xlu0 %544
  %546 = vrot.lane.b32.xlu0 %v520, 32
  %v547 = vpop.permute.xlu0 %546
  %548 = vrot.lane.b32.xlu0 %v521, 32
  %v549 = vpop.permute.xlu0 %548
  %550 = vrot.lane.b32.xlu0 %v522, 32
  %v551 = vpop.permute.xlu0 %550
  %552 = vrot.lane.b32.xlu0 %v523, 32
  %v553 = vpop.permute.xlu0 %552
  %554 = vrot.lane.b32.xlu0 %v524, 32
  %v555 = vpop.permute.xlu0 %554
  %556 = vrot.lane.b32.xlu0 %v525, 32
  %v557 = vpop.permute.xlu0 %556
  %vm574 = vcmask 388352
  %575 = vst.msk [vmem:[#allocation4] sm:$0xf] %vm574, %v527
  %576 = vst.msk [vmem:[#allocation4 + $0x4] sm:$0xf] %vm574, %v529
  %577 = vst.msk [vmem:[#allocation4 + $0x8] sm:$0xf] %vm574, %v531
  %578 = vst.msk [vmem:[#allocation4 + $0xc] sm:$0xf] %vm574, %v533
  %579 = vst.msk [vmem:[#allocation4 + $0x10] sm:$0xf] %vm574, %v535
  %580 = vst.msk [vmem:[#allocation4 + $0x14] sm:$0xf] %vm574, %v537
  %581 = vst.msk [vmem:[#allocation4 + $0x18] sm:$0xf] %vm574, %v539
  %582 = vst.msk [vmem:[#allocation4 + $0x1c] sm:$0xf] %vm574, %v541
  %583 = vst.msk [vmem:[#allocation4 + $0x20] sm:$0xf] %vm574, %v543
  %584 = vst.msk [vmem:[#allocation4 + $0x24] sm:$0xf] %vm574, %v545
  %585 = vst.msk [vmem:[#allocation4 + $0x28] sm:$0xf] %vm574, %v547
  %586 = vst.msk [vmem:[#allocation4 + $0x2c] sm:$0xf] %vm574, %v549
  %587 = vst.msk [vmem:[#allocation4 + $0x30] sm:$0xf] %vm574, %v551
  %588 = vst.msk [vmem:[#allocation4 + $0x34] sm:$0xf] %vm574, %v553
  %589 = vst.msk [vmem:[#allocation4 + $0x38] sm:$0xf] %vm574, %v555
  %590 = vst.msk [vmem:[#allocation4 + $0x3c] sm:$0xf] %vm574, %v557
  %v591 = vld [vmem:[%s461 + $0x1] sm:$0xff]
  %v592 = vld [vmem:[%s461 + $0x11] sm:$0xff]
  %v593 = vld [vmem:[%s461 + $0x21] sm:$0xff]
  %v594 = vld [vmem:[%s461 + $0x31] sm:$0xff]
  %v595 = vld [vmem:[%s461 + $0x41] sm:$0xff]
  %v596 = vld [vmem:[%s461 + $0x51] sm:$0xff]
  %v597 = vld [vmem:[%s461 + $0x61] sm:$0xff]
  %v598 = vld [vmem:[%s461 + $0x71] sm:$0xff]
  %v599 = vld [vmem:[%s461 + $0x91] sm:$0xff]
  %v600 = vld [vmem:[%s461 + $0xa1] sm:$0xff]
  %v601 = vld [vmem:[%s461 + $0xb1] sm:$0xff]
  %v602 = vld [vmem:[%s461 + $0xc1] sm:$0xff]
  %v603 = vld [vmem:[%s461 + $0xd1] sm:$0xff]
  %v604 = vld [vmem:[%s461 + $0xe1] sm:$0xff]
  %v605 = vld [vmem:[%s461 + $0xf1] sm:$0xff]
  %v606 = vld [vmem:[%s461 + $0x101] sm:$0xff]
  %v607 = vpack.c.bf16 %v592, %v591
  %v608 = vpack.c.bf16 %v594, %v593
  %v609 = vpack.c.bf16 %v596, %v595
  %v610 = vpack.c.bf16 %v598, %v597
  %v611 = vpack.c.bf16 %v600, %v599
  %v612 = vpack.c.bf16 %v602, %v601
  %v613 = vpack.c.bf16 %v604, %v603
  %v614 = vpack.c.bf16 %v606, %v605
  %v623 = vunpack.c.l.b16 %v607
  %v624 = vunpack.c.h.b16 %v607
  %v625 = vunpack.c.l.b16 %v608
  %v626 = vunpack.c.h.b16 %v608
  %v627 = vunpack.c.l.b16 %v609
  %v628 = vunpack.c.h.b16 %v609
  %v629 = vunpack.c.l.b16 %v610
  %v630 = vunpack.c.h.b16 %v610
  %v631 = vunpack.c.l.b16 %v611
  %v632 = vunpack.c.h.b16 %v611
  %v633 = vunpack.c.l.b16 %v612
  %v634 = vunpack.c.h.b16 %v612
  %v635 = vunpack.c.l.b16 %v613
  %v636 = vunpack.c.h.b16 %v613
  %v637 = vunpack.c.l.b16 %v614
  %v638 = vunpack.c.h.b16 %v614
  %v639 = vpack.c.b16 %v623, %v623
  %v640 = vpack.c.b16 %v624, %v624
  %v641 = vpack.c.b16 %v625, %v625
  %v642 = vpack.c.b16 %v626, %v626
  %v643 = vpack.c.b16 %v627, %v627
  %v644 = vpack.c.b16 %v628, %v628
  %v645 = vpack.c.b16 %v629, %v629
  %v646 = vpack.c.b16 %v630, %v630
  %v647 = vpack.c.b16 %v631, %v631
  %v648 = vpack.c.b16 %v632, %v632
  %v649 = vpack.c.b16 %v633, %v633
  %v650 = vpack.c.b16 %v634, %v634
  %v651 = vpack.c.b16 %v635, %v635
  %v652 = vpack.c.b16 %v636, %v636
  %v653 = vpack.c.b16 %v637, %v637
  %v654 = vpack.c.b16 %v638, %v638
  %655 = vrot.lane.b32.xlu0 %v639, 48
  %v656 = vpop.permute.xlu0 %655
  %657 = vrot.lane.b32.xlu0 %v640, 48
  %v658 = vpop.permute.xlu0 %657
  %659 = vrot.lane.b32.xlu0 %v641, 48
  %v660 = vpop.permute.xlu0 %659
  %661 = vrot.lane.b32.xlu0 %v642, 48
  %v662 = vpop.permute.xlu0 %661
  %663 = vrot.lane.b32.xlu0 %v643, 48
  %v664 = vpop.permute.xlu0 %663
  %665 = vrot.lane.b32.xlu0 %v644, 48
  %v666 = vpop.permute.xlu0 %665
  %667 = vrot.lane.b32.xlu0 %v645, 48
  %v668 = vpop.permute.xlu0 %667
  %669 = vrot.lane.b32.xlu0 %v646, 48
  %v670 = vpop.permute.xlu0 %669
  %671 = vrot.lane.b32.xlu0 %v647, 48
  %v672 = vpop.permute.xlu0 %671
  %673 = vrot.lane.b32.xlu0 %v648, 48
  %v674 = vpop.permute.xlu0 %673
  %675 = vrot.lane.b32.xlu0 %v649, 48
  %v676 = vpop.permute.xlu0 %675
  %677 = vrot.lane.b32.xlu0 %v650, 48
  %v678 = vpop.permute.xlu0 %677
  %679 = vrot.lane.b32.xlu0 %v651, 48
  %v680 = vpop.permute.xlu0 %679
  %681 = vrot.lane.b32.xlu0 %v652, 48
  %v682 = vpop.permute.xlu0 %681
  %683 = vrot.lane.b32.xlu0 %v653, 48
  %v684 = vpop.permute.xlu0 %683
  %685 = vrot.lane.b32.xlu0 %v654, 48
  %v686 = vpop.permute.xlu0 %685
  %vm703 = vcmask 519552
  %704 = vst.msk [vmem:[#allocation4] sm:$0xf] %vm703, %v656
  %705 = vst.msk [vmem:[#allocation4 + $0x4] sm:$0xf] %vm703, %v658
  %706 = vst.msk [vmem:[#allocation4 + $0x8] sm:$0xf] %vm703, %v660
  %707 = vst.msk [vmem:[#allocation4 + $0xc] sm:$0xf] %vm703, %v662
  %708 = vst.msk [vmem:[#allocation4 + $0x10] sm:$0xf] %vm703, %v664
  %709 = vst.msk [vmem:[#allocation4 + $0x14] sm:$0xf] %vm703, %v666
  %710 = vst.msk [vmem:[#allocation4 + $0x18] sm:$0xf] %vm703, %v668
  %711 = vst.msk [vmem:[#allocation4 + $0x1c] sm:$0xf] %vm703, %v670
  %712 = vst.msk [vmem:[#allocation4 + $0x20] sm:$0xf] %vm703, %v672
  %713 = vst.msk [vmem:[#allocation4 + $0x24] sm:$0xf] %vm703, %v674
  %714 = vst.msk [vmem:[#allocation4 + $0x28] sm:$0xf] %vm703, %v676
  %715 = vst.msk [vmem:[#allocation4 + $0x2c] sm:$0xf] %vm703, %v678
  %716 = vst.msk [vmem:[#allocation4 + $0x30] sm:$0xf] %vm703, %v680
  %717 = vst.msk [vmem:[#allocation4 + $0x34] sm:$0xf] %vm703, %v682
  %718 = vst.msk [vmem:[#allocation4 + $0x38] sm:$0xf] %vm703, %v684
  %719 = vst.msk [vmem:[#allocation4 + $0x3c] sm:$0xf] %vm703, %v686
  %v720 = vld [vmem:[#allocation4] sm:$0xf]
  %v721 = vld [vmem:[#allocation4 + $0x4] sm:$0xf]
  %v722 = vld [vmem:[#allocation4 + $0x8] sm:$0xf]
  %v723 = vld [vmem:[#allocation4 + $0xc] sm:$0xf]
  %v724 = vld [vmem:[#allocation4 + $0x10] sm:$0xf]
  %v725 = vld [vmem:[#allocation4 + $0x14] sm:$0xf]
  %v726 = vld [vmem:[#allocation4 + $0x18] sm:$0xf]
  %v727 = vld [vmem:[#allocation4 + $0x1c] sm:$0xf]
  %v728 = vld [vmem:[#allocation4 + $0x20] sm:$0xf]
  %v729 = vld [vmem:[#allocation4 + $0x24] sm:$0xf]
  %v730 = vld [vmem:[#allocation4 + $0x28] sm:$0xf]
  %v731 = vld [vmem:[#allocation4 + $0x2c] sm:$0xf]
  %v732 = vld [vmem:[#allocation4 + $0x30] sm:$0xf]
  %v733 = vld [vmem:[#allocation4 + $0x34] sm:$0xf]
  %v734 = vld [vmem:[#allocation4 + $0x38] sm:$0xf]
  %v735 = vld [vmem:[#allocation4 + $0x3c] sm:$0xf]
  %v736 = vld [vmem:[%s1] sm:$0xf]
  %v737 = vld [vmem:[%s1 + $0x4] sm:$0xf]
  %v738 = vld [vmem:[%s1 + $0x8] sm:$0xf]
  %v739 = vld [vmem:[%s1 + $0xc] sm:$0xf]
  %v740 = vld [vmem:[%s1 + $0x10] sm:$0xf]
  %v741 = vld [vmem:[%s1 + $0x14] sm:$0xf]
  %v742 = vld [vmem:[%s1 + $0x18] sm:$0xf]
  %v743 = vld [vmem:[%s1 + $0x1c] sm:$0xf]
  %v760 = vunpack.c.l.b16 %v720
  %v761 = vunpack.c.l.b16 %v721
  %v762 = vunpack.c.l.b16 %v722
  %v763 = vunpack.c.l.b16 %v723
  %v764 = vunpack.c.l.b16 %v724
  %v765 = vunpack.c.l.b16 %v725
  %v766 = vunpack.c.l.b16 %v726
  %v767 = vunpack.c.l.b16 %v727
  %v768 = vunpack.c.l.b16 %v728
  %v769 = vunpack.c.l.b16 %v729
  %v770 = vunpack.c.l.b16 %v730
  %v771 = vunpack.c.l.b16 %v731
  %v772 = vunpack.c.l.b16 %v732
  %v773 = vunpack.c.l.b16 %v733
  %v774 = vunpack.c.l.b16 %v734
  %v775 = vunpack.c.l.b16 %v735
  %v776 = vpack.c.b16 %v761, %v760
  %v777 = vpack.c.b16 %v763, %v762
  %v778 = vpack.c.b16 %v765, %v764
  %v779 = vpack.c.b16 %v767, %v766
  %v780 = vpack.c.b16 %v769, %v768
  %v781 = vpack.c.b16 %v771, %v770
  %v782 = vpack.c.b16 %v773, %v772
  %v783 = vpack.c.b16 %v775, %v774
  %v792 = vunpack.c.l.b16 %v736
  %v793 = vunpack.c.l.b16 %v737
  %v794 = vunpack.c.l.b16 %v738
  %v795 = vunpack.c.l.b16 %v739
  %v796 = vunpack.c.l.b16 %v740
  %v797 = vunpack.c.l.b16 %v741
  %v798 = vunpack.c.l.b16 %v742
  %v799 = vunpack.c.l.b16 %v743
  %v800 = vpack.c.b16 %v793, %v792
  %v801 = vpack.c.b16 %v795, %v794
  %v802 = vpack.c.b16 %v797, %v796
  %v803 = vpack.c.b16 %v799, %v798
  %vm808 = vcmask 523264
  %v810 = vsel %vm808, %v776, 0
  %v813 = vsel %vm808, %v777, 0
  %v816 = vsel %vm808, %v778, 0
  %v819 = vsel %vm808, %v779, 0
  %v822 = vsel %vm808, %v780, 0
  %v825 = vsel %vm808, %v781, 0
  %v828 = vsel %vm808, %v782, 0
  %v831 = vsel %vm808, %v783, 0
  %833 = vmatprep.subr.bf16.mxu0 0
  %834 = vmatpush1.bf16.msra.mxu0 0
  %835 = vmatprep.subr.bf16.mxu0 0
  %836 = vmatpush1.bf16.msra.mxu0 0
  %837 = vmatprep.subr.bf16.mxu0 0
  %838 = vmatpush1.bf16.msra.mxu0 0
  %839 = vmatprep.subr.bf16.mxu0 0
  %840 = vmatpush1.bf16.msra.mxu0 0
  %841 = vmatprep.subr.bf16.mxu0 0
  %842 = vmatpush1.bf16.msra.mxu0 %v803
  %843 = vmatprep.subr.bf16.mxu0 0
  %844 = vmatpush1.bf16.msra.mxu0 %v802
  %845 = vmatprep.subr.bf16.mxu0 0
  %846 = vmatpush1.bf16.msra.mxu0 %v801
  %847 = vmatprep.subr.bf16.mxu0 0
  %848 = vmatpush1.bf16.msra.mxu0 %v800
  %849 = vmatprep.subr.bf16.mxu0 0
  %850 = vmatpush2.bf16.msra.mxu0 0
  %851 = vmatprep.subr.bf16.mxu0 0
  %852 = vmatpush2.bf16.msra.mxu0 0
  %853 = vmatprep.subr.bf16.mxu0 0
  %854 = vmatpush2.bf16.msra.mxu0 0
  %855 = vmatprep.subr.bf16.mxu0 0
  %856 = vmatpush2.bf16.msra.mxu0 0
  %857 = vmatprep.subr.bf16.mxu0 0
  %858 = vmatpush2.bf16.msra.mxu0 0
  %859 = vmatprep.subr.bf16.mxu0 0
  %860 = vmatpush2.bf16.msra.mxu0 0
  %861 = vmatprep.subr.bf16.mxu0 0
  %862 = vmatpush2.bf16.msra.mxu0 0
  %863 = vmatprep.subr.bf16.mxu0 0
  %864 = vmatpush2.bf16.msra.mxu0 0
  %865 = vmatprep.mubr.bf16.mxu0 0
  %866 = vmatmul.mubr.bf16.gmra.mxu0 %v810
  %v867 = vpop.f32.mrf.mxu0
  %v868 = vadd.f32 0.0, %v867
  %v869 = vpop.f32.mrf.mxu0
  %v870 = vpop.f32.mrf.mxu0
  %v871 = vadd.f32 0.0, %v870
  %v872 = vpop.f32.mrf.mxu0
  %873 = vmatprep.mubr.bf16.mxu0 0
  %874 = vmatmul.mubr.bf16.gmra.mxu0 %v813
  %v875 = vpop.f32.mrf.mxu0
  %v876 = vadd.f32 0.0, %v875
  %v877 = vpop.f32.mrf.mxu0
  %v878 = vpop.f32.mrf.mxu0
  %v879 = vadd.f32 0.0, %v878
  %v880 = vpop.f32.mrf.mxu0
  %881 = vmatprep.mubr.bf16.mxu0 0
  %882 = vmatmul.mubr.bf16.gmra.mxu0 %v816
  %v883 = vpop.f32.mrf.mxu0
  %v884 = vadd.f32 0.0, %v883
  %v885 = vpop.f32.mrf.mxu0
  %v886 = vpop.f32.mrf.mxu0
  %v887 = vadd.f32 0.0, %v886
  %v888 = vpop.f32.mrf.mxu0
  %889 = vmatprep.mubr.bf16.mxu0 0
  %890 = vmatmul.mubr.bf16.gmra.mxu0 %v819
  %v891 = vpop.f32.mrf.mxu0
  %v892 = vadd.f32 0.0, %v891
  %v893 = vpop.f32.mrf.mxu0
  %v894 = vpop.f32.mrf.mxu0
  %v895 = vadd.f32 0.0, %v894
  %v896 = vpop.f32.mrf.mxu0
  %897 = vmatprep.mubr.bf16.mxu0 0
  %898 = vmatmul.mubr.bf16.gmra.mxu0 %v822
  %v899 = vpop.f32.mrf.mxu0
  %v900 = vadd.f32 0.0, %v899
  %v901 = vpop.f32.mrf.mxu0
  %v902 = vpop.f32.mrf.mxu0
  %v903 = vadd.f32 0.0, %v902
  %v904 = vpop.f32.mrf.mxu0
  %905 = vmatprep.mubr.bf16.mxu0 0
  %906 = vmatmul.mubr.bf16.gmra.mxu0 %v825
  %v907 = vpop.f32.mrf.mxu0
  %v908 = vadd.f32 0.0, %v907
  %v909 = vpop.f32.mrf.mxu0
  %v910 = vpop.f32.mrf.mxu0
  %v911 = vadd.f32 0.0, %v910
  %v912 = vpop.f32.mrf.mxu0
  %913 = vmatprep.mubr.bf16.mxu0 0
  %914 = vmatmul.mubr.bf16.gmra.mxu0 %v828
  %v915 = vpop.f32.mrf.mxu0
  %v916 = vadd.f32 0.0, %v915
  %v917 = vpop.f32.mrf.mxu0
  %v918 = vpop.f32.mrf.mxu0
  %v919 = vadd.f32 0.0, %v918
  %v920 = vpop.f32.mrf.mxu0
  %921 = vmatprep.mubr.bf16.mxu0 0
  %922 = vmatmul.mubr.bf16.gmra.mxu0 %v831
  %v923 = vpop.f32.mrf.mxu0
  %v924 = vadd.f32 0.0, %v923
  %v925 = vpop.f32.mrf.mxu0
  %v926 = vpop.f32.mrf.mxu0
  %v927 = vadd.f32 0.0, %v926
  %v928 = vpop.f32.mrf.mxu0
  %929 = vdwg.mxu0
  %v930 = vmax.f32 %v868, 0.0
  %v931 = vmax.f32 %v871, 0.0
  %v932 = vmax.f32 %v876, 0.0
  %v933 = vmax.f32 %v879, 0.0
  %v934 = vmax.f32 %v884, 0.0
  %v935 = vmax.f32 %v887, 0.0
  %v936 = vmax.f32 %v892, 0.0
  %v937 = vmax.f32 %v895, 0.0
  %v938 = vmax.f32 %v900, 0.0
  %v939 = vmax.f32 %v903, 0.0
  %v940 = vmax.f32 %v908, 0.0
  %v941 = vmax.f32 %v911, 0.0
  %v942 = vmax.f32 %v916, 0.0
  %v943 = vmax.f32 %v919, 0.0
  %v944 = vmax.f32 %v924, 0.0
  %v945 = vmax.f32 %v927, 0.0
  %vm946 = vcmask 64512
  %947 = vst.msk [vmem:[#allocation3] sm:$0xff] %vm946, 0.0
  %vm948 = vcmask 58368
  %949 = vst.msk [vmem:[#allocation3 + $0x8] sm:$0x3] %vm948, 0.0
  %950 = vst.msk [vmem:[#allocation3 + $0xa0] sm:$0xff] %vm946, 0.0
  %951 = vst.msk [vmem:[#allocation3 + $0xa8] sm:$0x3] %vm948, 0.0
  %s952 = scalar_lea.vmem [#allocation3], 144
  %953 = vst.msk [vmem:[%s952] sm:$0xff] %vm946, 0.0
  %954 = vst.msk [vmem:[%s952 + $0x8] sm:$0x3] %vm948, 0.0
  %955 = vst.msk [vmem:[%s952 + $0xa0] sm:$0xff] %vm946, 0.0
  %956 = vst.msk [vmem:[%s952 + $0xa8] sm:$0x3] %vm948, 0.0
  %vm957 = vcmask 57344
  %958 = vst.msk [vmem:[#allocation3] sm:$0x1] %vm957, 0.0
  %959 = vst.msk [vmem:[#allocation3 + $0x10] sm:$0x1] %vm957, 0.0
  %960 = vst.msk [vmem:[#allocation3 + $0x20] sm:$0x1] %vm957, 0.0
  %961 = vst.msk [vmem:[#allocation3 + $0x30] sm:$0x1] %vm957, 0.0
  %962 = vst.msk [vmem:[#allocation3 + $0x40] sm:$0x1] %vm957, 0.0
  %963 = vst.msk [vmem:[#allocation3 + $0x50] sm:$0x1] %vm957, 0.0
  %964 = vst.msk [vmem:[#allocation3 + $0x60] sm:$0x1] %vm957, 0.0
  %965 = vst.msk [vmem:[#allocation3 + $0x70] sm:$0x1] %vm957, 0.0
  %966 = vst.msk [vmem:[#allocation3 + $0x80] sm:$0x1] %vm957, 0.0
  %967 = vst.msk [vmem:[#allocation3 + $0x90] sm:$0x1] %vm957, 0.0
  %968 = vst.msk [vmem:[#allocation3 + $0xa0] sm:$0x1] %vm957, 0.0
  %969 = vst.msk [vmem:[#allocation3 + $0xb0] sm:$0x1] %vm957, 0.0
  %970 = vst.msk [vmem:[#allocation3 + $0xc0] sm:$0x1] %vm957, 0.0
  %971 = vst.msk [vmem:[#allocation3 + $0xd0] sm:$0x1] %vm957, 0.0
  %972 = vst.msk [vmem:[#allocation3 + $0xe0] sm:$0x1] %vm957, 0.0
  %973 = vst.msk [vmem:[#allocation3 + $0xf0] sm:$0x1] %vm957, 0.0
  %974 = vst.msk [vmem:[#allocation3 + $0x100] sm:$0x1] %vm957, 0.0
  %975 = vst.msk [vmem:[#allocation3 + $0x110] sm:$0x1] %vm957, 0.0
  %976 = vst.msk [vmem:[#allocation3 + $0x120] sm:$0x1] %vm957, 0.0
  %977 = vst.msk [vmem:[#allocation3 + $0x130] sm:$0x1] %vm957, 0.0
  %978 = vst.msk [vmem:[#allocation3 + $0x9] sm:$0x1] %vm957, 0.0
  %979 = vst.msk [vmem:[#allocation3 + $0x19] sm:$0x1] %vm957, 0.0
  %980 = vst.msk [vmem:[#allocation3 + $0x29] sm:$0x1] %vm957, 0.0
  %981 = vst.msk [vmem:[#allocation3 + $0x39] sm:$0x1] %vm957, 0.0
  %982 = vst.msk [vmem:[#allocation3 + $0x49] sm:$0x1] %vm957, 0.0
  %983 = vst.msk [vmem:[#allocation3 + $0x59] sm:$0x1] %vm957, 0.0
  %984 = vst.msk [vmem:[#allocation3 + $0x69] sm:$0x1] %vm957, 0.0
  %985 = vst.msk [vmem:[#allocation3 + $0x79] sm:$0x1] %vm957, 0.0
  %986 = vst.msk [vmem:[#allocation3 + $0x89] sm:$0x1] %vm957, 0.0
  %987 = vst.msk [vmem:[#allocation3 + $0x99] sm:$0x1] %vm957, 0.0
  %988 = vst.msk [vmem:[#allocation3 + $0xa9] sm:$0x1] %vm957, 0.0
  %989 = vst.msk [vmem:[#allocation3 + $0xb9] sm:$0x1] %vm957, 0.0
  %990 = vst.msk [vmem:[#allocation3 + $0xc9] sm:$0x1] %vm957, 0.0
  %991 = vst.msk [vmem:[#allocation3 + $0xd9] sm:$0x1] %vm957, 0.0
  %992 = vst.msk [vmem:[#allocation3 + $0xe9] sm:$0x1] %vm957, 0.0
  %993 = vst.msk [vmem:[#allocation3 + $0xf9] sm:$0x1] %vm957, 0.0
  %994 = vst.msk [vmem:[#allocation3 + $0x109] sm:$0x1] %vm957, 0.0
  %995 = vst.msk [vmem:[#allocation3 + $0x119] sm:$0x1] %vm957, 0.0
  %996 = vst.msk [vmem:[#allocation3 + $0x129] sm:$0x1] %vm957, 0.0
  %997 = vst.msk [vmem:[#allocation3 + $0x139] sm:$0x1] %vm957, 0.0
  %s998 = scalar_lea.vmem [#allocation3], 16
  %999 = vst.msk [vmem:[%s998 + $0x1] sm:$0xff] %vm946, %v930
  %1000 = vst.msk [vmem:[%s998 + $0x11] sm:$0xff] %vm946, %v931
  %1001 = vst.msk [vmem:[%s998 + $0x21] sm:$0xff] %vm946, %v932
  %1002 = vst.msk [vmem:[%s998 + $0x31] sm:$0xff] %vm946, %v933
  %1003 = vst.msk [vmem:[%s998 + $0x41] sm:$0xff] %vm946, %v934
  %1004 = vst.msk [vmem:[%s998 + $0x51] sm:$0xff] %vm946, %v935
  %1005 = vst.msk [vmem:[%s998 + $0x61] sm:$0xff] %vm946, %v936
  %1006 = vst.msk [vmem:[%s998 + $0x71] sm:$0xff] %vm946, %v937
  %1007 = vst.msk [vmem:[%s998 + $0xa1] sm:$0xff] %vm946, %v938
  %1008 = vst.msk [vmem:[%s998 + $0xb1] sm:$0xff] %vm946, %v939
  %1009 = vst.msk [vmem:[%s998 + $0xc1] sm:$0xff] %vm946, %v940
  %1010 = vst.msk [vmem:[%s998 + $0xd1] sm:$0xff] %vm946, %v941
  %1011 = vst.msk [vmem:[%s998 + $0xe1] sm:$0xff] %vm946, %v942
  %1012 = vst.msk [vmem:[%s998 + $0xf1] sm:$0xff] %vm946, %v943
  %1013 = vst.msk [vmem:[%s998 + $0x101] sm:$0xff] %vm946, %v944
  %1014 = vst.msk [vmem:[%s998 + $0x111] sm:$0xff] %vm946, %v945
  %v1015 = vld [vmem:[#allocation3] sm:$0xff]
  %v1016 = vld [vmem:[#allocation3 + $0x10] sm:$0xff]
  %v1017 = vld [vmem:[#allocation3 + $0x20] sm:$0xff]
  %v1018 = vld [vmem:[#allocation3 + $0x30] sm:$0xff]
  %v1019 = vld [vmem:[#allocation3 + $0x40] sm:$0xff]
  %v1020 = vld [vmem:[#allocation3 + $0x50] sm:$0xff]
  %v1021 = vld [vmem:[#allocation3 + $0x60] sm:$0xff]
  %v1022 = vld [vmem:[#allocation3 + $0x70] sm:$0xff]
  %v1023 = vld [vmem:[#allocation3 + $0xa0] sm:$0xff]
  %v1024 = vld [vmem:[#allocation3 + $0xb0] sm:$0xff]
  %v1025 = vld [vmem:[#allocation3 + $0xc0] sm:$0xff]
  %v1026 = vld [vmem:[#allocation3 + $0xd0] sm:$0xff]
  %v1027 = vld [vmem:[#allocation3 + $0xe0] sm:$0xff]
  %v1028 = vld [vmem:[#allocation3 + $0xf0] sm:$0xff]
  %v1029 = vld [vmem:[#allocation3 + $0x100] sm:$0xff]
  %v1030 = vld [vmem:[#allocation3 + $0x110] sm:$0xff]
  %v1031 = vpack.c.bf16 %v1016, %v1015
  %v1032 = vpack.c.bf16 %v1018, %v1017
  %v1033 = vpack.c.bf16 %v1020, %v1019
  %v1034 = vpack.c.bf16 %v1022, %v1021
  %v1035 = vpack.c.bf16 %v1024, %v1023
  %v1036 = vpack.c.bf16 %v1026, %v1025
  %v1037 = vpack.c.bf16 %v1028, %v1027
  %v1038 = vpack.c.bf16 %v1030, %v1029
  %v1039 = vld [vmem:[#allocation3 + $0x1] sm:$0xff]
  %v1040 = vld [vmem:[#allocation3 + $0x11] sm:$0xff]
  %v1041 = vld [vmem:[#allocation3 + $0x21] sm:$0xff]
  %v1042 = vld [vmem:[#allocation3 + $0x31] sm:$0xff]
  %v1043 = vld [vmem:[#allocation3 + $0x41] sm:$0xff]
  %v1044 = vld [vmem:[#allocation3 + $0x51] sm:$0xff]
  %v1045 = vld [vmem:[#allocation3 + $0x61] sm:$0xff]
  %v1046 = vld [vmem:[#allocation3 + $0x71] sm:$0xff]
  %v1047 = vld [vmem:[#allocation3 + $0xa1] sm:$0xff]
  %v1048 = vld [vmem:[#allocation3 + $0xb1] sm:$0xff]
  %v1049 = vld [vmem:[#allocation3 + $0xc1] sm:$0xff]
  %v1050 = vld [vmem:[#allocation3 + $0xd1] sm:$0xff]
  %v1051 = vld [vmem:[#allocation3 + $0xe1] sm:$0xff]
  %v1052 = vld [vmem:[#allocation3 + $0xf1] sm:$0xff]
  %v1053 = vld [vmem:[#allocation3 + $0x101] sm:$0xff]
  %v1054 = vld [vmem:[#allocation3 + $0x111] sm:$0xff]
  %v1055 = vpack.c.bf16 %v1040, %v1039
  %v1056 = vpack.c.bf16 %v1042, %v1041
  %v1057 = vpack.c.bf16 %v1044, %v1043
  %v1058 = vpack.c.bf16 %v1046, %v1045
  %v1059 = vpack.c.bf16 %v1048, %v1047
  %v1060 = vpack.c.bf16 %v1050, %v1049
  %v1061 = vpack.c.bf16 %v1052, %v1051
  %v1062 = vpack.c.bf16 %v1054, %v1053
  %v1063 = vld [vmem:[#allocation3 + $0x2] sm:$0xff]
  %v1064 = vld [vmem:[#allocation3 + $0x12] sm:$0xff]
  %v1065 = vld [vmem:[#allocation3 + $0x22] sm:$0xff]
  %v1066 = vld [vmem:[#allocation3 + $0x32] sm:$0xff]
  %v1067 = vld [vmem:[#allocation3 + $0x42] sm:$0xff]
  %v1068 = vld [vmem:[#allocation3 + $0x52] sm:$0xff]
  %v1069 = vld [vmem:[#allocation3 + $0x62] sm:$0xff]
  %v1070 = vld [vmem:[#allocation3 + $0x72] sm:$0xff]
  %v1071 = vld [vmem:[#allocation3 + $0xa2] sm:$0xff]
  %v1072 = vld [vmem:[#allocation3 + $0xb2] sm:$0xff]
  %v1073 = vld [vmem:[#allocation3 + $0xc2] sm:$0xff]
  %v1074 = vld [vmem:[#allocation3 + $0xd2] sm:$0xff]
  %v1075 = vld [vmem:[#allocation3 + $0xe2] sm:$0xff]
  %v1076 = vld [vmem:[#allocation3 + $0xf2] sm:$0xff]
  %v1077 = vld [vmem:[#allocation3 + $0x102] sm:$0xff]
  %v1078 = vld [vmem:[#allocation3 + $0x112] sm:$0xff]
  %v1079 = vpack.c.bf16 %v1064, %v1063
  %v1080 = vpack.c.bf16 %v1066, %v1065
  %v1081 = vpack.c.bf16 %v1068, %v1067
  %v1082 = vpack.c.bf16 %v1070, %v1069
  %v1083 = vpack.c.bf16 %v1072, %v1071
  %v1084 = vpack.c.bf16 %v1074, %v1073
  %v1085 = vpack.c.bf16 %v1076, %v1075
  %v1086 = vpack.c.bf16 %v1078, %v1077
  %v1087 = vld [vmem:[%s998] sm:$0xff]
  %v1088 = vld [vmem:[%s998 + $0x10] sm:$0xff]
  %v1089 = vld [vmem:[%s998 + $0x20] sm:$0xff]
  %v1090 = vld [vmem:[%s998 + $0x30] sm:$0xff]
  %v1091 = vld [vmem:[%s998 + $0x40] sm:$0xff]
  %v1092 = vld [vmem:[%s998 + $0x50] sm:$0xff]
  %v1093 = vld [vmem:[%s998 + $0x60] sm:$0xff]
  %v1094 = vld [vmem:[%s998 + $0x70] sm:$0xff]
  %v1095 = vld [vmem:[%s998 + $0xa0] sm:$0xff]
  %v1096 = vld [vmem:[%s998 + $0xb0] sm:$0xff]
  %v1097 = vld [vmem:[%s998 + $0xc0] sm:$0xff]
  %v1098 = vld [vmem:[%s998 + $0xd0] sm:$0xff]
  %v1099 = vld [vmem:[%s998 + $0xe0] sm:$0xff]
  %v1100 = vld [vmem:[%s998 + $0xf0] sm:$0xff]
  %v1101 = vld [vmem:[%s998 + $0x100] sm:$0xff]
  %v1102 = vld [vmem:[%s998 + $0x110] sm:$0xff]
  %v1103 = vpack.c.bf16 %v1088, %v1087
  %v1104 = vpack.c.bf16 %v1090, %v1089
  %v1105 = vpack.c.bf16 %v1092, %v1091
  %v1106 = vpack.c.bf16 %v1094, %v1093
  %v1107 = vpack.c.bf16 %v1096, %v1095
  %v1108 = vpack.c.bf16 %v1098, %v1097
  %v1109 = vpack.c.bf16 %v1100, %v1099
  %v1110 = vpack.c.bf16 %v1102, %v1101
  %v1111 = vld [vmem:[%s998 + $0x1] sm:$0xff]
  %v1112 = vld [vmem:[%s998 + $0x11] sm:$0xff]
  %v1113 = vld [vmem:[%s998 + $0x21] sm:$0xff]
  %v1114 = vld [vmem:[%s998 + $0x31] sm:$0xff]
  %v1115 = vld [vmem:[%s998 + $0x41] sm:$0xff]
  %v1116 = vld [vmem:[%s998 + $0x51] sm:$0xff]
  %v1117 = vld [vmem:[%s998 + $0x61] sm:$0xff]
  %v1118 = vld [vmem:[%s998 + $0x71] sm:$0xff]
  %v1119 = vld [vmem:[%s998 + $0xa1] sm:$0xff]
  %v1120 = vld [vmem:[%s998 + $0xb1] sm:$0xff]
  %v1121 = vld [vmem:[%s998 + $0xc1] sm:$0xff]
  %v1122 = vld [vmem:[%s998 + $0xd1] sm:$0xff]
  %v1123 = vld [vmem:[%s998 + $0xe1] sm:$0xff]
  %v1124 = vld [vmem:[%s998 + $0xf1] sm:$0xff]
  %v1125 = vld [vmem:[%s998 + $0x101] sm:$0xff]
  %v1126 = vld [vmem:[%s998 + $0x111] sm:$0xff]
  %v1127 = vpack.c.bf16 %v1112, %v1111
  %v1128 = vpack.c.bf16 %v1114, %v1113
  %v1129 = vpack.c.bf16 %v1116, %v1115
  %v1130 = vpack.c.bf16 %v1118, %v1117
  %v1131 = vpack.c.bf16 %v1120, %v1119
  %v1132 = vpack.c.bf16 %v1122, %v1121
  %v1133 = vpack.c.bf16 %v1124, %v1123
  %v1134 = vpack.c.bf16 %v1126, %v1125
  %v1135 = vld [vmem:[%s998 + $0x2] sm:$0xff]
  %v1136 = vld [vmem:[%s998 + $0x12] sm:$0xff]
  %v1137 = vld [vmem:[%s998 + $0x22] sm:$0xff]
  %v1138 = vld [vmem:[%s998 + $0x32] sm:$0xff]
  %v1139 = vld [vmem:[%s998 + $0x42] sm:$0xff]
  %v1140 = vld [vmem:[%s998 + $0x52] sm:$0xff]
  %v1141 = vld [vmem:[%s998 + $0x62] sm:$0xff]
  %v1142 = vld [vmem:[%s998 + $0x72] sm:$0xff]
  %v1143 = vld [vmem:[%s998 + $0xa2] sm:$0xff]
  %v1144 = vld [vmem:[%s998 + $0xb2] sm:$0xff]
  %v1145 = vld [vmem:[%s998 + $0xc2] sm:$0xff]
  %v1146 = vld [vmem:[%s998 + $0xd2] sm:$0xff]
  %v1147 = vld [vmem:[%s998 + $0xe2] sm:$0xff]
  %v1148 = vld [vmem:[%s998 + $0xf2] sm:$0xff]
  %v1149 = vld [vmem:[%s998 + $0x102] sm:$0xff]
  %v1150 = vld [vmem:[%s998 + $0x112] sm:$0xff]
  %v1151 = vpack.c.bf16 %v1136, %v1135
  %v1152 = vpack.c.bf16 %v1138, %v1137
  %v1153 = vpack.c.bf16 %v1140, %v1139
  %v1154 = vpack.c.bf16 %v1142, %v1141
  %v1155 = vpack.c.bf16 %v1144, %v1143
  %v1156 = vpack.c.bf16 %v1146, %v1145
  %v1157 = vpack.c.bf16 %v1148, %v1147
  %v1158 = vpack.c.bf16 %v1150, %v1149
  %s1159 = scalar_lea.vmem [#allocation3], 32
  %v1160 = vld [vmem:[%s1159] sm:$0xff]
  %v1161 = vld [vmem:[%s1159 + $0x10] sm:$0xff]
  %v1162 = vld [vmem:[%s1159 + $0x20] sm:$0xff]
  %v1163 = vld [vmem:[%s1159 + $0x30] sm:$0xff]
  %v1164 = vld [vmem:[%s1159 + $0x40] sm:$0xff]
  %v1165 = vld [vmem:[%s1159 + $0x50] sm:$0xff]
  %v1166 = vld [vmem:[%s1159 + $0x60] sm:$0xff]
  %v1167 = vld [vmem:[%s1159 + $0x70] sm:$0xff]
  %v1168 = vld [vmem:[%s1159 + $0xa0] sm:$0xff]
  %v1169 = vld [vmem:[%s1159 + $0xb0] sm:$0xff]
  %v1170 = vld [vmem:[%s1159 + $0xc0] sm:$0xff]
  %v1171 = vld [vmem:[%s1159 + $0xd0] sm:$0xff]
  %v1172 = vld [vmem:[%s1159 + $0xe0] sm:$0xff]
  %v1173 = vld [vmem:[%s1159 + $0xf0] sm:$0xff]
  %v1174 = vld [vmem:[%s1159 + $0x100] sm:$0xff]
  %v1175 = vld [vmem:[%s1159 + $0x110] sm:$0xff]
  %v1176 = vpack.c.bf16 %v1161, %v1160
  %v1177 = vpack.c.bf16 %v1163, %v1162
  %v1178 = vpack.c.bf16 %v1165, %v1164
  %v1179 = vpack.c.bf16 %v1167, %v1166
  %v1180 = vpack.c.bf16 %v1169, %v1168
  %v1181 = vpack.c.bf16 %v1171, %v1170
  %v1182 = vpack.c.bf16 %v1173, %v1172
  %v1183 = vpack.c.bf16 %v1175, %v1174
  %v1184 = vld [vmem:[%s1159 + $0x1] sm:$0xff]
  %v1185 = vld [vmem:[%s1159 + $0x11] sm:$0xff]
  %v1186 = vld [vmem:[%s1159 + $0x21] sm:$0xff]
  %v1187 = vld [vmem:[%s1159 + $0x31] sm:$0xff]
  %v1188 = vld [vmem:[%s1159 + $0x41] sm:$0xff]
  %v1189 = vld [vmem:[%s1159 + $0x51] sm:$0xff]
  %v1190 = vld [vmem:[%s1159 + $0x61] sm:$0xff]
  %v1191 = vld [vmem:[%s1159 + $0x71] sm:$0xff]
  %v1192 = vld [vmem:[%s1159 + $0xa1] sm:$0xff]
  %v1193 = vld [vmem:[%s1159 + $0xb1] sm:$0xff]
  %v1194 = vld [vmem:[%s1159 + $0xc1] sm:$0xff]
  %v1195 = vld [vmem:[%s1159 + $0xd1] sm:$0xff]
  %v1196 = vld [vmem:[%s1159 + $0xe1] sm:$0xff]
  %v1197 = vld [vmem:[%s1159 + $0xf1] sm:$0xff]
  %v1198 = vld [vmem:[%s1159 + $0x101] sm:$0xff]
  %v1199 = vld [vmem:[%s1159 + $0x111] sm:$0xff]
  %v1200 = vpack.c.bf16 %v1185, %v1184
  %v1201 = vpack.c.bf16 %v1187, %v1186
  %v1202 = vpack.c.bf16 %v1189, %v1188
  %v1203 = vpack.c.bf16 %v1191, %v1190
  %v1204 = vpack.c.bf16 %v1193, %v1192
  %v1205 = vpack.c.bf16 %v1195, %v1194
  %v1206 = vpack.c.bf16 %v1197, %v1196
  %v1207 = vpack.c.bf16 %v1199, %v1198
  %v1208 = vld [vmem:[%s1159 + $0x2] sm:$0xff]
  %v1209 = vld [vmem:[%s1159 + $0x12] sm:$0xff]
  %v1210 = vld [vmem:[%s1159 + $0x22] sm:$0xff]
  %v1211 = vld [vmem:[%s1159 + $0x32] sm:$0xff]
  %v1212 = vld [vmem:[%s1159 + $0x42] sm:$0xff]
  %v1213 = vld [vmem:[%s1159 + $0x52] sm:$0xff]
  %v1214 = vld [vmem:[%s1159 + $0x62] sm:$0xff]
  %v1215 = vld [vmem:[%s1159 + $0x72] sm:$0xff]
  %v1216 = vld [vmem:[%s1159 + $0xa2] sm:$0xff]
  %v1217 = vld [vmem:[%s1159 + $0xb2] sm:$0xff]
  %v1218 = vld [vmem:[%s1159 + $0xc2] sm:$0xff]
  %v1219 = vld [vmem:[%s1159 + $0xd2] sm:$0xff]
  %v1220 = vld [vmem:[%s1159 + $0xe2] sm:$0xff]
  %v1221 = vld [vmem:[%s1159 + $0xf2] sm:$0xff]
  %v1222 = vld [vmem:[%s1159 + $0x102] sm:$0xff]
  %v1223 = vld [vmem:[%s1159 + $0x112] sm:$0xff]
  %v1224 = vpack.c.bf16 %v1209, %v1208
  %v1225 = vpack.c.bf16 %v1211, %v1210
  %v1226 = vpack.c.bf16 %v1213, %v1212
  %v1227 = vpack.c.bf16 %v1215, %v1214
  %v1228 = vpack.c.bf16 %v1217, %v1216
  %v1229 = vpack.c.bf16 %v1219, %v1218
  %v1230 = vpack.c.bf16 %v1221, %v1220
  %v1231 = vpack.c.bf16 %v1223, %v1222
  %v1240 = vunpack.c.l.b16 %v1031
  %v1241 = vunpack.c.h.b16 %v1031
  %v1242 = vunpack.c.l.b16 %v1032
  %v1243 = vunpack.c.h.b16 %v1032
  %v1244 = vunpack.c.l.b16 %v1033
  %v1245 = vunpack.c.h.b16 %v1033
  %v1246 = vunpack.c.l.b16 %v1034
  %v1247 = vunpack.c.h.b16 %v1034
  %v1248 = vunpack.c.l.b16 %v1035
  %v1249 = vunpack.c.h.b16 %v1035
  %v1250 = vunpack.c.l.b16 %v1036
  %v1251 = vunpack.c.h.b16 %v1036
  %v1252 = vunpack.c.l.b16 %v1037
  %v1253 = vunpack.c.h.b16 %v1037
  %v1254 = vunpack.c.l.b16 %v1038
  %v1255 = vunpack.c.h.b16 %v1038
  %v1256 = vpack.c.b16 %v1240, %v1240
  %v1257 = vpack.c.b16 %v1241, %v1241
  %v1258 = vpack.c.b16 %v1242, %v1242
  %v1259 = vpack.c.b16 %v1243, %v1243
  %v1260 = vpack.c.b16 %v1244, %v1244
  %v1261 = vpack.c.b16 %v1245, %v1245
  %v1262 = vpack.c.b16 %v1246, %v1246
  %v1263 = vpack.c.b16 %v1247, %v1247
  %v1264 = vpack.c.b16 %v1248, %v1248
  %v1265 = vpack.c.b16 %v1249, %v1249
  %v1266 = vpack.c.b16 %v1250, %v1250
  %v1267 = vpack.c.b16 %v1251, %v1251
  %v1268 = vpack.c.b16 %v1252, %v1252
  %v1269 = vpack.c.b16 %v1253, %v1253
  %v1270 = vpack.c.b16 %v1254, %v1254
  %v1271 = vpack.c.b16 %v1255, %v1255
  %vm1288 = vcmask 60416
  %1289 = vst.msk [vmem:[#allocation5] sm:$0xf] %vm1288, %v1256
  %1290 = vst.msk [vmem:[#allocation5 + $0x4] sm:$0xf] %vm1288, %v1257
  %1291 = vst.msk [vmem:[#allocation5 + $0x8] sm:$0xf] %vm1288, %v1258
  %1292 = vst.msk [vmem:[#allocation5 + $0xc] sm:$0xf] %vm1288, %v1259
  %1293 = vst.msk [vmem:[#allocation5 + $0x10] sm:$0xf] %vm1288, %v1260
  %1294 = vst.msk [vmem:[#allocation5 + $0x14] sm:$0xf] %vm1288, %v1261
  %1295 = vst.msk [vmem:[#allocation5 + $0x18] sm:$0xf] %vm1288, %v1262
  %1296 = vst.msk [vmem:[#allocation5 + $0x1c] sm:$0xf] %vm1288, %v1263
  %1297 = vst.msk [vmem:[#allocation5 + $0x20] sm:$0xf] %vm1288, %v1264
  %1298 = vst.msk [vmem:[#allocation5 + $0x24] sm:$0xf] %vm1288, %v1265
  %1299 = vst.msk [vmem:[#allocation5 + $0x28] sm:$0xf] %vm1288, %v1266
  %1300 = vst.msk [vmem:[#allocation5 + $0x2c] sm:$0xf] %vm1288, %v1267
  %1301 = vst.msk [vmem:[#allocation5 + $0x30] sm:$0xf] %vm1288, %v1268
  %1302 = vst.msk [vmem:[#allocation5 + $0x34] sm:$0xf] %vm1288, %v1269
  %1303 = vst.msk [vmem:[#allocation5 + $0x38] sm:$0xf] %vm1288, %v1270
  %1304 = vst.msk [vmem:[#allocation5 + $0x3c] sm:$0xf] %vm1288, %v1271
  %v1313 = vunpack.c.l.b16 %v1055
  %v1314 = vunpack.c.h.b16 %v1055
  %v1315 = vunpack.c.l.b16 %v1056
  %v1316 = vunpack.c.h.b16 %v1056
  %v1317 = vunpack.c.l.b16 %v1057
  %v1318 = vunpack.c.h.b16 %v1057
  %v1319 = vunpack.c.l.b16 %v1058
  %v1320 = vunpack.c.h.b16 %v1058
  %v1321 = vunpack.c.l.b16 %v1059
  %v1322 = vunpack.c.h.b16 %v1059
  %v1323 = vunpack.c.l.b16 %v1060
  %v1324 = vunpack.c.h.b16 %v1060
  %v1325 = vunpack.c.l.b16 %v1061
  %v1326 = vunpack.c.h.b16 %v1061
  %v1327 = vunpack.c.l.b16 %v1062
  %v1328 = vunpack.c.h.b16 %v1062
  %v1329 = vpack.c.b16 %v1313, %v1313
  %v1330 = vpack.c.b16 %v1314, %v1314
  %v1331 = vpack.c.b16 %v1315, %v1315
  %v1332 = vpack.c.b16 %v1316, %v1316
  %v1333 = vpack.c.b16 %v1317, %v1317
  %v1334 = vpack.c.b16 %v1318, %v1318
  %v1335 = vpack.c.b16 %v1319, %v1319
  %v1336 = vpack.c.b16 %v1320, %v1320
  %v1337 = vpack.c.b16 %v1321, %v1321
  %v1338 = vpack.c.b16 %v1322, %v1322
  %v1339 = vpack.c.b16 %v1323, %v1323
  %v1340 = vpack.c.b16 %v1324, %v1324
  %v1341 = vpack.c.b16 %v1325, %v1325
  %v1342 = vpack.c.b16 %v1326, %v1326
  %v1343 = vpack.c.b16 %v1327, %v1327
  %v1344 = vpack.c.b16 %v1328, %v1328
  %1345 = vrot.lane.b32.xlu0 %v1329, 8
  %v1346 = vpop.permute.xlu0 %1345
  %1347 = vrot.lane.b32.xlu0 %v1330, 8
  %v1348 = vpop.permute.xlu0 %1347
  %1349 = vrot.lane.b32.xlu0 %v1331, 8
  %v1350 = vpop.permute.xlu0 %1349
  %1351 = vrot.lane.b32.xlu0 %v1332, 8
  %v1352 = vpop.permute.xlu0 %1351
  %1353 = vrot.lane.b32.xlu0 %v1333, 8
  %v1354 = vpop.permute.xlu0 %1353
  %1355 = vrot.lane.b32.xlu0 %v1334, 8
  %v1356 = vpop.permute.xlu0 %1355
  %1357 = vrot.lane.b32.xlu0 %v1335, 8
  %v1358 = vpop.permute.xlu0 %1357
  %1359 = vrot.lane.b32.xlu0 %v1336, 8
  %v1360 = vpop.permute.xlu0 %1359
  %1361 = vrot.lane.b32.xlu0 %v1337, 8
  %v1362 = vpop.permute.xlu0 %1361
  %1363 = vrot.lane.b32.xlu0 %v1338, 8
  %v1364 = vpop.permute.xlu0 %1363
  %1365 = vrot.lane.b32.xlu0 %v1339, 8
  %v1366 = vpop.permute.xlu0 %1365
  %1367 = vrot.lane.b32.xlu0 %v1340, 8
  %v1368 = vpop.permute.xlu0 %1367
  %1369 = vrot.lane.b32.xlu0 %v1341, 8
  %v1370 = vpop.permute.xlu0 %1369
  %1371 = vrot.lane.b32.xlu0 %v1342, 8
  %v1372 = vpop.permute.xlu0 %1371
  %1373 = vrot.lane.b32.xlu0 %v1343, 8
  %v1374 = vpop.permute.xlu0 %1373
  %1375 = vrot.lane.b32.xlu0 %v1344, 8
  %v1376 = vpop.permute.xlu0 %1375
  %vm1393 = vcmask 126016
  %1394 = vst.msk [vmem:[#allocation5] sm:$0xf] %vm1393, %v1346
  %1395 = vst.msk [vmem:[#allocation5 + $0x4] sm:$0xf] %vm1393, %v1348
  %1396 = vst.msk [vmem:[#allocation5 + $0x8] sm:$0xf] %vm1393, %v1350
  %1397 = vst.msk [vmem:[#allocation5 + $0xc] sm:$0xf] %vm1393, %v1352
  %1398 = vst.msk [vmem:[#allocation5 + $0x10] sm:$0xf] %vm1393, %v1354
  %1399 = vst.msk [vmem:[#allocation5 + $0x14] sm:$0xf] %vm1393, %v1356
  %1400 = vst.msk [vmem:[#allocation5 + $0x18] sm:$0xf] %vm1393, %v1358
  %1401 = vst.msk [vmem:[#allocation5 + $0x1c] sm:$0xf] %vm1393, %v1360
  %1402 = vst.msk [vmem:[#allocation5 + $0x20] sm:$0xf] %vm1393, %v1362
  %1403 = vst.msk [vmem:[#allocation5 + $0x24] sm:$0xf] %vm1393, %v1364
  %1404 = vst.msk [vmem:[#allocation5 + $0x28] sm:$0xf] %vm1393, %v1366
  %1405 = vst.msk [vmem:[#allocation5 + $0x2c] sm:$0xf] %vm1393, %v1368
  %1406 = vst.msk [vmem:[#allocation5 + $0x30] sm:$0xf] %vm1393, %v1370
  %1407 = vst.msk [vmem:[#allocation5 + $0x34] sm:$0xf] %vm1393, %v1372
  %1408 = vst.msk [vmem:[#allocation5 + $0x38] sm:$0xf] %vm1393, %v1374
  %1409 = vst.msk [vmem:[#allocation5 + $0x3c] sm:$0xf] %vm1393, %v1376
  %v1418 = vunpack.c.l.b16 %v1103
  %v1419 = vunpack.c.h.b16 %v1103
  %v1420 = vunpack.c.l.b16 %v1104
  %v1421 = vunpack.c.h.b16 %v1104
  %v1422 = vunpack.c.l.b16 %v1105
  %v1423 = vunpack.c.h.b16 %v1105
  %v1424 = vunpack.c.l.b16 %v1106
  %v1425 = vunpack.c.h.b16 %v1106
  %v1426 = vunpack.c.l.b16 %v1107
  %v1427 = vunpack.c.h.b16 %v1107
  %v1428 = vunpack.c.l.b16 %v1108
  %v1429 = vunpack.c.h.b16 %v1108
  %v1430 = vunpack.c.l.b16 %v1109
  %v1431 = vunpack.c.h.b16 %v1109
  %v1432 = vunpack.c.l.b16 %v1110
  %v1433 = vunpack.c.h.b16 %v1110
  %v1434 = vpack.c.b16 %v1418, %v1418
  %v1435 = vpack.c.b16 %v1419, %v1419
  %v1436 = vpack.c.b16 %v1420, %v1420
  %v1437 = vpack.c.b16 %v1421, %v1421
  %v1438 = vpack.c.b16 %v1422, %v1422
  %v1439 = vpack.c.b16 %v1423, %v1423
  %v1440 = vpack.c.b16 %v1424, %v1424
  %v1441 = vpack.c.b16 %v1425, %v1425
  %v1442 = vpack.c.b16 %v1426, %v1426
  %v1443 = vpack.c.b16 %v1427, %v1427
  %v1444 = vpack.c.b16 %v1428, %v1428
  %v1445 = vpack.c.b16 %v1429, %v1429
  %v1446 = vpack.c.b16 %v1430, %v1430
  %v1447 = vpack.c.b16 %v1431, %v1431
  %v1448 = vpack.c.b16 %v1432, %v1432
  %v1449 = vpack.c.b16 %v1433, %v1433
  %1450 = vrot.lane.b32.xlu0 %v1434, 16
  %v1451 = vpop.permute.xlu0 %1450
  %1452 = vrot.lane.b32.xlu0 %v1435, 16
  %v1453 = vpop.permute.xlu0 %1452
  %1454 = vrot.lane.b32.xlu0 %v1436, 16
  %v1455 = vpop.permute.xlu0 %1454
  %1456 = vrot.lane.b32.xlu0 %v1437, 16
  %v1457 = vpop.permute.xlu0 %1456
  %1458 = vrot.lane.b32.xlu0 %v1438, 16
  %v1459 = vpop.permute.xlu0 %1458
  %1460 = vrot.lane.b32.xlu0 %v1439, 16
  %v1461 = vpop.permute.xlu0 %1460
  %1462 = vrot.lane.b32.xlu0 %v1440, 16
  %v1463 = vpop.permute.xlu0 %1462
  %1464 = vrot.lane.b32.xlu0 %v1441, 16
  %v1465 = vpop.permute.xlu0 %1464
  %1466 = vrot.lane.b32.xlu0 %v1442, 16
  %v1467 = vpop.permute.xlu0 %1466
  %1468 = vrot.lane.b32.xlu0 %v1443, 16
  %v1469 = vpop.permute.xlu0 %1468
  %1470 = vrot.lane.b32.xlu0 %v1444, 16
  %v1471 = vpop.permute.xlu0 %1470
  %1472 = vrot.lane.b32.xlu0 %v1445, 16
  %v1473 = vpop.permute.xlu0 %1472
  %1474 = vrot.lane.b32.xlu0 %v1446, 16
  %v1475 = vpop.permute.xlu0 %1474
  %1476 = vrot.lane.b32.xlu0 %v1447, 16
  %v1477 = vpop.permute.xlu0 %1476
  %1478 = vrot.lane.b32.xlu0 %v1448, 16
  %v1479 = vpop.permute.xlu0 %1478
  %1480 = vrot.lane.b32.xlu0 %v1449, 16
  %v1481 = vpop.permute.xlu0 %1480
  %vm1498 = vcmask 191616
  %1499 = vst.msk [vmem:[#allocation5] sm:$0xf] %vm1498, %v1451
  %1500 = vst.msk [vmem:[#allocation5 + $0x4] sm:$0xf] %vm1498, %v1453
  %1501 = vst.msk [vmem:[#allocation5 + $0x8] sm:$0xf] %vm1498, %v1455
  %1502 = vst.msk [vmem:[#allocation5 + $0xc] sm:$0xf] %vm1498, %v1457
  %1503 = vst.msk [vmem:[#allocation5 + $0x10] sm:$0xf] %vm1498, %v1459
  %1504 = vst.msk [vmem:[#allocation5 + $0x14] sm:$0xf] %vm1498, %v1461
  %1505 = vst.msk [vmem:[#allocation5 + $0x18] sm:$0xf] %vm1498, %v1463
  %1506 = vst.msk [vmem:[#allocation5 + $0x1c] sm:$0xf] %vm1498, %v1465
  %1507 = vst.msk [vmem:[#allocation5 + $0x20] sm:$0xf] %vm1498, %v1467
  %1508 = vst.msk [vmem:[#allocation5 + $0x24] sm:$0xf] %vm1498, %v1469
  %1509 = vst.msk [vmem:[#allocation5 + $0x28] sm:$0xf] %vm1498, %v1471
  %1510 = vst.msk [vmem:[#allocation5 + $0x2c] sm:$0xf] %vm1498, %v1473
  %1511 = vst.msk [vmem:[#allocation5 + $0x30] sm:$0xf] %vm1498, %v1475
  %1512 = vst.msk [vmem:[#allocation5 + $0x34] sm:$0xf] %vm1498, %v1477
  %1513 = vst.msk [vmem:[#allocation5 + $0x38] sm:$0xf] %vm1498, %v1479
  %1514 = vst.msk [vmem:[#allocation5 + $0x3c] sm:$0xf] %vm1498, %v1481
  %v1523 = vunpack.c.l.b16 %v1127
  %v1524 = vunpack.c.h.b16 %v1127
  %v1525 = vunpack.c.l.b16 %v1128
  %v1526 = vunpack.c.h.b16 %v1128
  %v1527 = vunpack.c.l.b16 %v1129
  %v1528 = vunpack.c.h.b16 %v1129
  %v1529 = vunpack.c.l.b16 %v1130
  %v1530 = vunpack.c.h.b16 %v1130
  %v1531 = vunpack.c.l.b16 %v1131
  %v1532 = vunpack.c.h.b16 %v1131
  %v1533 = vunpack.c.l.b16 %v1132
  %v1534 = vunpack.c.h.b16 %v1132
  %v1535 = vunpack.c.l.b16 %v1133
  %v1536 = vunpack.c.h.b16 %v1133
  %v1537 = vunpack.c.l.b16 %v1134
  %v1538 = vunpack.c.h.b16 %v1134
  %v1539 = vpack.c.b16 %v1523, %v1523
  %v1540 = vpack.c.b16 %v1524, %v1524
  %v1541 = vpack.c.b16 %v1525, %v1525
  %v1542 = vpack.c.b16 %v1526, %v1526
  %v1543 = vpack.c.b16 %v1527, %v1527
  %v1544 = vpack.c.b16 %v1528, %v1528
  %v1545 = vpack.c.b16 %v1529, %v1529
  %v1546 = vpack.c.b16 %v1530, %v1530
  %v1547 = vpack.c.b16 %v1531, %v1531
  %v1548 = vpack.c.b16 %v1532, %v1532
  %v1549 = vpack.c.b16 %v1533, %v1533
  %v1550 = vpack.c.b16 %v1534, %v1534
  %v1551 = vpack.c.b16 %v1535, %v1535
  %v1552 = vpack.c.b16 %v1536, %v1536
  %v1553 = vpack.c.b16 %v1537, %v1537
  %v1554 = vpack.c.b16 %v1538, %v1538
  %1555 = vrot.lane.b32.xlu0 %v1539, 24
  %v1556 = vpop.permute.xlu0 %1555
  %1557 = vrot.lane.b32.xlu0 %v1540, 24
  %v1558 = vpop.permute.xlu0 %1557
  %1559 = vrot.lane.b32.xlu0 %v1541, 24
  %v1560 = vpop.permute.xlu0 %1559
  %1561 = vrot.lane.b32.xlu0 %v1542, 24
  %v1562 = vpop.permute.xlu0 %1561
  %1563 = vrot.lane.b32.xlu0 %v1543, 24
  %v1564 = vpop.permute.xlu0 %1563
  %1565 = vrot.lane.b32.xlu0 %v1544, 24
  %v1566 = vpop.permute.xlu0 %1565
  %1567 = vrot.lane.b32.xlu0 %v1545, 24
  %v1568 = vpop.permute.xlu0 %1567
  %1569 = vrot.lane.b32.xlu0 %v1546, 24
  %v1570 = vpop.permute.xlu0 %1569
  %1571 = vrot.lane.b32.xlu0 %v1547, 24
  %v1572 = vpop.permute.xlu0 %1571
  %1573 = vrot.lane.b32.xlu0 %v1548, 24
  %v1574 = vpop.permute.xlu0 %1573
  %1575 = vrot.lane.b32.xlu0 %v1549, 24
  %v1576 = vpop.permute.xlu0 %1575
  %1577 = vrot.lane.b32.xlu0 %v1550, 24
  %v1578 = vpop.permute.xlu0 %1577
  %1579 = vrot.lane.b32.xlu0 %v1551, 24
  %v1580 = vpop.permute.xlu0 %1579
  %1581 = vrot.lane.b32.xlu0 %v1552, 24
  %v1582 = vpop.permute.xlu0 %1581
  %1583 = vrot.lane.b32.xlu0 %v1553, 24
  %v1584 = vpop.permute.xlu0 %1583
  %1585 = vrot.lane.b32.xlu0 %v1554, 24
  %v1586 = vpop.permute.xlu0 %1585
  %vm1603 = vcmask 257216
  %1604 = vst.msk [vmem:[#allocation5] sm:$0xf] %vm1603, %v1556
  %1605 = vst.msk [vmem:[#allocation5 + $0x4] sm:$0xf] %vm1603, %v1558
  %1606 = vst.msk [vmem:[#allocation5 + $0x8] sm:$0xf] %vm1603, %v1560
  %1607 = vst.msk [vmem:[#allocation5 + $0xc] sm:$0xf] %vm1603, %v1562
  %1608 = vst.msk [vmem:[#allocation5 + $0x10] sm:$0xf] %vm1603, %v1564
  %1609 = vst.msk [vmem:[#allocation5 + $0x14] sm:$0xf] %vm1603, %v1566
  %1610 = vst.msk [vmem:[#allocation5 + $0x18] sm:$0xf] %vm1603, %v1568
  %1611 = vst.msk [vmem:[#allocation5 + $0x1c] sm:$0xf] %vm1603, %v1570
  %1612 = vst.msk [vmem:[#allocation5 + $0x20] sm:$0xf] %vm1603, %v1572
  %1613 = vst.msk [vmem:[#allocation5 + $0x24] sm:$0xf] %vm1603, %v1574
  %1614 = vst.msk [vmem:[#allocation5 + $0x28] sm:$0xf] %vm1603, %v1576
  %1615 = vst.msk [vmem:[#allocation5 + $0x2c] sm:$0xf] %vm1603, %v1578
  %1616 = vst.msk [vmem:[#allocation5 + $0x30] sm:$0xf] %vm1603, %v1580
  %1617 = vst.msk [vmem:[#allocation5 + $0x34] sm:$0xf] %vm1603, %v1582
  %1618 = vst.msk [vmem:[#allocation5 + $0x38] sm:$0xf] %vm1603, %v1584
  %1619 = vst.msk [vmem:[#allocation5 + $0x3c] sm:$0xf] %vm1603, %v1586
  %v1620 = vld [vmem:[#allocation5] sm:$0xf]
  %v1621 = vld [vmem:[#allocation5 + $0x4] sm:$0xf]
  %v1622 = vld [vmem:[#allocation5 + $0x8] sm:$0xf]
  %v1623 = vld [vmem:[#allocation5 + $0xc] sm:$0xf]
  %v1624 = vld [vmem:[#allocation5 + $0x10] sm:$0xf]
  %v1625 = vld [vmem:[#allocation5 + $0x14] sm:$0xf]
  %v1626 = vld [vmem:[#allocation5 + $0x18] sm:$0xf]
  %v1627 = vld [vmem:[#allocation5 + $0x1c] sm:$0xf]
  %v1628 = vld [vmem:[#allocation5 + $0x20] sm:$0xf]
  %v1629 = vld [vmem:[#allocation5 + $0x24] sm:$0xf]
  %v1630 = vld [vmem:[#allocation5 + $0x28] sm:$0xf]
  %v1631 = vld [vmem:[#allocation5 + $0x2c] sm:$0xf]
  %v1632 = vld [vmem:[#allocation5 + $0x30] sm:$0xf]
  %v1633 = vld [vmem:[#allocation5 + $0x34] sm:$0xf]
  %v1634 = vld [vmem:[#allocation5 + $0x38] sm:$0xf]
  %v1635 = vld [vmem:[#allocation5 + $0x3c] sm:$0xf]
  %v1636 = vld [vmem:[%s2] sm:$0xf]
  %v1637 = vld [vmem:[%s2 + $0x4] sm:$0xf]
  %v1638 = vld [vmem:[%s2 + $0x8] sm:$0xf]
  %v1639 = vld [vmem:[%s2 + $0xc] sm:$0xf]
  %v1656 = vunpack.c.l.b16 %v1620
  %v1657 = vunpack.c.l.b16 %v1621
  %v1658 = vunpack.c.l.b16 %v1622
  %v1659 = vunpack.c.l.b16 %v1623
  %v1660 = vunpack.c.l.b16 %v1624
  %v1661 = vunpack.c.l.b16 %v1625
  %v1662 = vunpack.c.l.b16 %v1626
  %v1663 = vunpack.c.l.b16 %v1627
  %v1664 = vunpack.c.l.b16 %v1628
  %v1665 = vunpack.c.l.b16 %v1629
  %v1666 = vunpack.c.l.b16 %v1630
  %v1667 = vunpack.c.l.b16 %v1631
  %v1668 = vunpack.c.l.b16 %v1632
  %v1669 = vunpack.c.l.b16 %v1633
  %v1670 = vunpack.c.l.b16 %v1634
  %v1671 = vunpack.c.l.b16 %v1635
  %v1672 = vpack.c.b16 %v1657, %v1656
  %v1673 = vpack.c.b16 %v1659, %v1658
  %v1674 = vpack.c.b16 %v1661, %v1660
  %v1675 = vpack.c.b16 %v1663, %v1662
  %v1676 = vpack.c.b16 %v1665, %v1664
  %v1677 = vpack.c.b16 %v1667, %v1666
  %v1678 = vpack.c.b16 %v1669, %v1668
  %v1679 = vpack.c.b16 %v1671, %v1670
  %v1684 = vunpack.c.l.b16 %v1636
  %v1685 = vunpack.c.l.b16 %v1637
  %v1686 = vunpack.c.l.b16 %v1638
  %v1687 = vunpack.c.l.b16 %v1639
  %v1688 = vpack.c.b16 %v1685, %v1684
  %v1689 = vpack.c.b16 %v1687, %v1686
  %vm1692 = vcmask 261120
  %v1694 = vsel %vm1692, %v1672, 0
  %v1697 = vsel %vm1692, %v1673, 0
  %v1700 = vsel %vm1692, %v1674, 0
  %v1703 = vsel %vm1692, %v1675, 0
  %v1706 = vsel %vm1692, %v1676, 0
  %v1709 = vsel %vm1692, %v1677, 0
  %v1712 = vsel %vm1692, %v1678, 0
  %v1715 = vsel %vm1692, %v1679, 0
  %1717 = vmatprep.subr.bf16.mxu0 0
  %1718 = vmatpush1.bf16.msra.mxu0 0
  %1719 = vmatprep.subr.bf16.mxu0 0
  %1720 = vmatpush1.bf16.msra.mxu0 0
  %1721 = vmatprep.subr.bf16.mxu0 0
  %1722 = vmatpush1.bf16.msra.mxu0 0
  %1723 = vmatprep.subr.bf16.mxu0 0
  %1724 = vmatpush1.bf16.msra.mxu0 0
  %1725 = vmatprep.subr.bf16.mxu0 0
  %1726 = vmatpush1.bf16.msra.mxu0 0
  %1727 = vmatprep.subr.bf16.mxu0 0
  %1728 = vmatpush1.bf16.msra.mxu0 0
  %1729 = vmatprep.subr.bf16.mxu0 0
  %1730 = vmatpush1.bf16.msra.mxu0 %v1689
  %1731 = vmatprep.subr.bf16.mxu0 0
  %1732 = vmatpush1.bf16.msra.mxu0 %v1688
  %1733 = vmatprep.subr.bf16.mxu0 0
  %1734 = vmatpush2.bf16.msra.mxu0 0
  %1735 = vmatprep.subr.bf16.mxu0 0
  %1736 = vmatpush2.bf16.msra.mxu0 0
  %1737 = vmatprep.subr.bf16.mxu0 0
  %1738 = vmatpush2.bf16.msra.mxu0 0
  %1739 = vmatprep.subr.bf16.mxu0 0
  %1740 = vmatpush2.bf16.msra.mxu0 0
  %1741 = vmatprep.subr.bf16.mxu0 0
  %1742 = vmatpush2.bf16.msra.mxu0 0
  %1743 = vmatprep.subr.bf16.mxu0 0
  %1744 = vmatpush2.bf16.msra.mxu0 0
  %1745 = vmatprep.subr.bf16.mxu0 0
  %1746 = vmatpush2.bf16.msra.mxu0 0
  %1747 = vmatprep.subr.bf16.mxu0 0
  %1748 = vmatpush2.bf16.msra.mxu0 0
  %1749 = vmatprep.mubr.bf16.mxu0 0
  %1750 = vmatmul.mubr.bf16.gmra.mxu0 %v1694
  %v1751 = vpop.f32.mrf.mxu0
  %v1752 = vadd.f32 0.0, %v1751
  %v1753 = vpop.f32.mrf.mxu0
  %v1754 = vpop.f32.mrf.mxu0
  %v1755 = vadd.f32 0.0, %v1754
  %v1756 = vpop.f32.mrf.mxu0
  %1757 = vmatprep.mubr.bf16.mxu0 0
  %1758 = vmatmul.mubr.bf16.gmra.mxu0 %v1697
  %v1759 = vpop.f32.mrf.mxu0
  %v1760 = vadd.f32 0.0, %v1759
  %v1761 = vpop.f32.mrf.mxu0
  %v1762 = vpop.f32.mrf.mxu0
  %v1763 = vadd.f32 0.0, %v1762
  %v1764 = vpop.f32.mrf.mxu0
  %1765 = vmatprep.mubr.bf16.mxu0 0
  %1766 = vmatmul.mubr.bf16.gmra.mxu0 %v1700
  %v1767 = vpop.f32.mrf.mxu0
  %v1768 = vadd.f32 0.0, %v1767
  %v1769 = vpop.f32.mrf.mxu0
  %v1770 = vpop.f32.mrf.mxu0
  %v1771 = vadd.f32 0.0, %v1770
  %v1772 = vpop.f32.mrf.mxu0
  %1773 = vmatprep.mubr.bf16.mxu0 0
  %1774 = vmatmul.mubr.bf16.gmra.mxu0 %v1703
  %v1775 = vpop.f32.mrf.mxu0
  %v1776 = vadd.f32 0.0, %v1775
  %v1777 = vpop.f32.mrf.mxu0
  %v1778 = vpop.f32.mrf.mxu0
  %v1779 = vadd.f32 0.0, %v1778
  %v1780 = vpop.f32.mrf.mxu0
  %1781 = vmatprep.mubr.bf16.mxu0 0
  %1782 = vmatmul.mubr.bf16.gmra.mxu0 %v1706
  %v1783 = vpop.f32.mrf.mxu0
  %v1784 = vadd.f32 0.0, %v1783
  %v1785 = vpop.f32.mrf.mxu0
  %v1786 = vpop.f32.mrf.mxu0
  %v1787 = vadd.f32 0.0, %v1786
  %v1788 = vpop.f32.mrf.mxu0
  %1789 = vmatprep.mubr.bf16.mxu0 0
  %1790 = vmatmul.mubr.bf16.gmra.mxu0 %v1709
  %v1791 = vpop.f32.mrf.mxu0
  %v1792 = vadd.f32 0.0, %v1791
  %v1793 = vpop.f32.mrf.mxu0
  %v1794 = vpop.f32.mrf.mxu0
  %v1795 = vadd.f32 0.0, %v1794
  %v1796 = vpop.f32.mrf.mxu0
  %1797 = vmatprep.mubr.bf16.mxu0 0
  %1798 = vmatmul.mubr.bf16.gmra.mxu0 %v1712
  %v1799 = vpop.f32.mrf.mxu0
  %v1800 = vadd.f32 0.0, %v1799
  %v1801 = vpop.f32.mrf.mxu0
  %v1802 = vpop.f32.mrf.mxu0
  %v1803 = vadd.f32 0.0, %v1802
  %v1804 = vpop.f32.mrf.mxu0
  %1805 = vmatprep.mubr.bf16.mxu0 0
  %1806 = vmatmul.mubr.bf16.gmra.mxu0 %v1715
  %v1807 = vpop.f32.mrf.mxu0
  %v1808 = vadd.f32 0.0, %v1807
  %v1809 = vpop.f32.mrf.mxu0
  %v1810 = vpop.f32.mrf.mxu0
  %v1811 = vadd.f32 0.0, %v1810
  %v1812 = vpop.f32.mrf.mxu0
  %1813 = vdwg.mxu0
  %v1814 = vpack.c.bf16 %v1755, %v1752
  %v1815 = vpack.c.bf16 %v1763, %v1760
  %v1816 = vpack.c.bf16 %v1771, %v1768
  %v1817 = vpack.c.bf16 %v1779, %v1776
  %v1818 = vpack.c.bf16 %v1787, %v1784
  %v1819 = vpack.c.bf16 %v1795, %v1792
  %v1820 = vpack.c.bf16 %v1803, %v1800
  %v1821 = vpack.c.bf16 %v1811, %v1808
  %v1830 = vunpack.c.l.b16 %v1814
  %v1831 = vunpack.c.h.b16 %v1814
  %v1832 = vunpack.c.l.b16 %v1815
  %v1833 = vunpack.c.h.b16 %v1815
  %v1834 = vunpack.c.l.b16 %v1816
  %v1835 = vunpack.c.h.b16 %v1816
  %v1836 = vunpack.c.l.b16 %v1817
  %v1837 = vunpack.c.h.b16 %v1817
  %v1838 = vunpack.c.l.b16 %v1818
  %v1839 = vunpack.c.h.b16 %v1818
  %v1840 = vunpack.c.l.b16 %v1819
  %v1841 = vunpack.c.h.b16 %v1819
  %v1842 = vunpack.c.l.b16 %v1820
  %v1843 = vunpack.c.h.b16 %v1820
  %v1844 = vunpack.c.l.b16 %v1821
  %v1845 = vunpack.c.h.b16 %v1821
  %v1846 = vpack.c.b16 %v1830, %v1830
  %v1847 = vpack.c.b16 %v1831, %v1831
  %v1848 = vpack.c.b16 %v1832, %v1832
  %v1849 = vpack.c.b16 %v1833, %v1833
  %v1850 = vpack.c.b16 %v1834, %v1834
  %v1851 = vpack.c.b16 %v1835, %v1835
  %v1852 = vpack.c.b16 %v1836, %v1836
  %v1853 = vpack.c.b16 %v1837, %v1837
  %v1854 = vpack.c.b16 %v1838, %v1838
  %v1855 = vpack.c.b16 %v1839, %v1839
  %v1856 = vpack.c.b16 %v1840, %v1840
  %v1857 = vpack.c.b16 %v1841, %v1841
  %v1858 = vpack.c.b16 %v1842, %v1842
  %v1859 = vpack.c.b16 %v1843, %v1843
  %v1860 = vpack.c.b16 %v1844, %v1844
  %v1861 = vpack.c.b16 %v1845, %v1845
  %vm1878 = vcmask 27648
  %1879 = vst.msk [vmem:[%s3] sm:$0xf] %vm1878, %v1846
  %1880 = vst.msk [vmem:[%s3 + $0x4] sm:$0xf] %vm1878, %v1847
  %1881 = vst.msk [vmem:[%s3 + $0x8] sm:$0xf] %vm1878, %v1848
  %1882 = vst.msk [vmem:[%s3 + $0xc] sm:$0xf] %vm1878, %v1849
  %1883 = vst.msk [vmem:[%s3 + $0x10] sm:$0xf] %vm1878, %v1850
  %1884 = vst.msk [vmem:[%s3 + $0x14] sm:$0xf] %vm1878, %v1851
  %1885 = vst.msk [vmem:[%s3 + $0x18] sm:$0xf] %vm1878, %v1852
  %1886 = vst.msk [vmem:[%s3 + $0x1c] sm:$0xf] %vm1878, %v1853
  %1887 = vst.msk [vmem:[%s3 + $0x80] sm:$0xf] %vm1878, %v1854
  %1888 = vst.msk [vmem:[%s3 + $0x84] sm:$0xf] %vm1878, %v1855
  %1889 = vst.msk [vmem:[%s3 + $0x88] sm:$0xf] %vm1878, %v1856
  %1890 = vst.msk [vmem:[%s3 + $0x8c] sm:$0xf] %vm1878, %v1857
  %1891 = vst.msk [vmem:[%s3 + $0x90] sm:$0xf] %vm1878, %v1858
  %1892 = vst.msk [vmem:[%s3 + $0x94] sm:$0xf] %vm1878, %v1859
  %1893 = vst.msk [vmem:[%s3 + $0x98] sm:$0xf] %vm1878, %v1860
  %1894 = vst.msk [vmem:[%s3 + $0x9c] sm:$0xf] %vm1878, %v1861
  %vm1895 = vcmask 31744
  %v1896 = vsel %vm1895, %v1752, 0.0
  %v1897 = vsel %vm1895, %v1755, 0.0
  %v1898 = vadd.f32 %v1896, %v1897
  %v1899 = vsel %vm1895, %v1760, 0.0
  %v1900 = vadd.f32 %v1898, %v1899
  %v1901 = vsel %vm1895, %v1763, 0.0
  %v1902 = vadd.f32 %v1900, %v1901
  %v1903 = vsel %vm1895, %v1768, 0.0
  %v1904 = vadd.f32 %v1902, %v1903
  %v1905 = vsel %vm1895, %v1771, 0.0
  %v1906 = vadd.f32 %v1904, %v1905
  %v1907 = vsel %vm1895, %v1776, 0.0
  %v1908 = vadd.f32 %v1906, %v1907
  %v1909 = vsel %vm1895, %v1779, 0.0
  %v1910 = vadd.f32 %v1908, %v1909
  %v1911 = vsel %vm1895, %v1784, 0.0
  %v1912 = vadd.f32 %v1910, %v1911
  %v1913 = vsel %vm1895, %v1787, 0.0
  %v1914 = vadd.f32 %v1912, %v1913
  %v1915 = vsel %vm1895, %v1792, 0.0
  %v1916 = vadd.f32 %v1914, %v1915
  %v1917 = vsel %vm1895, %v1795, 0.0
  %v1918 = vadd.f32 %v1916, %v1917
  %v1919 = vsel %vm1895, %v1800, 0.0
  %v1920 = vadd.f32 %v1918, %v1919
  %v1921 = vsel %vm1895, %v1803, 0.0
  %v1922 = vadd.f32 %v1920, %v1921
  %v1923 = vsel %vm1895, %v1808, 0.0
  %v1924 = vadd.f32 %v1922, %v1923
  %v1925 = vsel %vm1895, %v1811, 0.0
  %v1926 = vadd.f32 %v1924, %v1925
  %v1927 = vrot.slane %v1926, 4
  %v1928 = vadd.f32 %v1926, %v1927
  %v1929 = vrot.slane %v1928, 2
  %v1930 = vadd.f32 %v1928, %v1929
  %v1931 = vrot.slane %v1930, 1
  %v1932 = vadd.f32 %v1930, %v1931
  %v1933 = vadd.f32 %v1932, 0.0
  %v1934 = vmul.f32 %v1752, %v1752
  %v1935 = vmul.f32 %v1755, %v1755
  %v1936 = vmul.f32 %v1760, %v1760
  %v1937 = vmul.f32 %v1763, %v1763
  %v1938 = vmul.f32 %v1768, %v1768
  %v1939 = vmul.f32 %v1771, %v1771
  %v1940 = vmul.f32 %v1776, %v1776
  %v1941 = vmul.f32 %v1779, %v1779
  %v1942 = vmul.f32 %v1784, %v1784
  %v1943 = vmul.f32 %v1787, %v1787
  %v1944 = vmul.f32 %v1792, %v1792
  %v1945 = vmul.f32 %v1795, %v1795
  %v1946 = vmul.f32 %v1800, %v1800
  %v1947 = vmul.f32 %v1803, %v1803
  %v1948 = vmul.f32 %v1808, %v1808
  %v1949 = vmul.f32 %v1811, %v1811
  %v1950 = vsel %vm1895, %v1934, 0.0
  %v1951 = vsel %vm1895, %v1935, 0.0
  %v1952 = vadd.f32 %v1950, %v1951
  %v1953 = vsel %vm1895, %v1936, 0.0
  %v1954 = vadd.f32 %v1952, %v1953
  %v1955 = vsel %vm1895, %v1937, 0.0
  %v1956 = vadd.f32 %v1954, %v1955
  %v1957 = vsel %vm1895, %v1938, 0.0
  %v1958 = vadd.f32 %v1956, %v1957
  %v1959 = vsel %vm1895, %v1939, 0.0
  %v1960 = vadd.f32 %v1958, %v1959
  %v1961 = vsel %vm1895, %v1940, 0.0
  %v1962 = vadd.f32 %v1960, %v1961
  %v1963 = vsel %vm1895, %v1941, 0.0
  %v1964 = vadd.f32 %v1962, %v1963
  %v1965 = vsel %vm1895, %v1942, 0.0
  %v1966 = vadd.f32 %v1964, %v1965
  %v1967 = vsel %vm1895, %v1943, 0.0
  %v1968 = vadd.f32 %v1966, %v1967
  %v1969 = vsel %vm1895, %v1944, 0.0
  %v1970 = vadd.f32 %v1968, %v1969
  %v1971 = vsel %vm1895, %v1945, 0.0
  %v1972 = vadd.f32 %v1970, %v1971
  %v1973 = vsel %vm1895, %v1946, 0.0
  %v1974 = vadd.f32 %v1972, %v1973
  %v1975 = vsel %vm1895, %v1947, 0.0
  %v1976 = vadd.f32 %v1974, %v1975
  %v1977 = vsel %vm1895, %v1948, 0.0
  %v1978 = vadd.f32 %v1976, %v1977
  %v1979 = vsel %vm1895, %v1949, 0.0
  %v1980 = vadd.f32 %v1978, %v1979
  %v1981 = vrot.slane %v1980, 4
  %v1982 = vadd.f32 %v1980, %v1981
  %v1983 = vrot.slane %v1982, 2
  %v1984 = vadd.f32 %v1982, %v1983
  %v1985 = vrot.slane %v1984, 1
  %v1986 = vadd.f32 %v1984, %v1985
  %v1987 = vadd.f32 %v1986, 0.0
  %2004 = vst.msk [vmem:[#allocation5] sm:$0xf] %vm1288, %v1329
  %2005 = vst.msk [vmem:[#allocation5 + $0x4] sm:$0xf] %vm1288, %v1330
  %2006 = vst.msk [vmem:[#allocation5 + $0x8] sm:$0xf] %vm1288, %v1331
  %2007 = vst.msk [vmem:[#allocation5 + $0xc] sm:$0xf] %vm1288, %v1332
  %2008 = vst.msk [vmem:[#allocation5 + $0x10] sm:$0xf] %vm1288, %v1333
  %2009 = vst.msk [vmem:[#allocation5 + $0x14] sm:$0xf] %vm1288, %v1334
  %2010 = vst.msk [vmem:[#allocation5 + $0x18] sm:$0xf] %vm1288, %v1335
  %2011 = vst.msk [vmem:[#allocation5 + $0x1c] sm:$0xf] %vm1288, %v1336
  %2012 = vst.msk [vmem:[#allocation5 + $0x20] sm:$0xf] %vm1288, %v1337
  %2013 = vst.msk [vmem:[#allocation5 + $0x24] sm:$0xf] %vm1288, %v1338
  %2014 = vst.msk [vmem:[#allocation5 + $0x28] sm:$0xf] %vm1288, %v1339
  %2015 = vst.msk [vmem:[#allocation5 + $0x2c] sm:$0xf] %vm1288, %v1340
  %2016 = vst.msk [vmem:[#allocation5 + $0x30] sm:$0xf] %vm1288, %v1341
  %2017 = vst.msk [vmem:[#allocation5 + $0x34] sm:$0xf] %vm1288, %v1342
  %2018 = vst.msk [vmem:[#allocation5 + $0x38] sm:$0xf] %vm1288, %v1343
  %2019 = vst.msk [vmem:[#allocation5 + $0x3c] sm:$0xf] %vm1288, %v1344
  %v2028 = vunpack.c.l.b16 %v1079
  %v2029 = vunpack.c.h.b16 %v1079
  %v2030 = vunpack.c.l.b16 %v1080
  %v2031 = vunpack.c.h.b16 %v1080
  %v2032 = vunpack.c.l.b16 %v1081
  %v2033 = vunpack.c.h.b16 %v1081
  %v2034 = vunpack.c.l.b16 %v1082
  %v2035 = vunpack.c.h.b16 %v1082
  %v2036 = vunpack.c.l.b16 %v1083
  %v2037 = vunpack.c.h.b16 %v1083
  %v2038 = vunpack.c.l.b16 %v1084
  %v2039 = vunpack.c.h.b16 %v1084
  %v2040 = vunpack.c.l.b16 %v1085
  %v2041 = vunpack.c.h.b16 %v1085
  %v2042 = vunpack.c.l.b16 %v1086
  %v2043 = vunpack.c.h.b16 %v1086
  %v2044 = vpack.c.b16 %v2028, %v2028
  %v2045 = vpack.c.b16 %v2029, %v2029
  %v2046 = vpack.c.b16 %v2030, %v2030
  %v2047 = vpack.c.b16 %v2031, %v2031
  %v2048 = vpack.c.b16 %v2032, %v2032
  %v2049 = vpack.c.b16 %v2033, %v2033
  %v2050 = vpack.c.b16 %v2034, %v2034
  %v2051 = vpack.c.b16 %v2035, %v2035
  %v2052 = vpack.c.b16 %v2036, %v2036
  %v2053 = vpack.c.b16 %v2037, %v2037
  %v2054 = vpack.c.b16 %v2038, %v2038
  %v2055 = vpack.c.b16 %v2039, %v2039
  %v2056 = vpack.c.b16 %v2040, %v2040
  %v2057 = vpack.c.b16 %v2041, %v2041
  %v2058 = vpack.c.b16 %v2042, %v2042
  %v2059 = vpack.c.b16 %v2043, %v2043
  %2060 = vrot.lane.b32.xlu0 %v2044, 8
  %v2061 = vpop.permute.xlu0 %2060
  %2062 = vrot.lane.b32.xlu0 %v2045, 8
  %v2063 = vpop.permute.xlu0 %2062
  %2064 = vrot.lane.b32.xlu0 %v2046, 8
  %v2065 = vpop.permute.xlu0 %2064
  %2066 = vrot.lane.b32.xlu0 %v2047, 8
  %v2067 = vpop.permute.xlu0 %2066
  %2068 = vrot.lane.b32.xlu0 %v2048, 8
  %v2069 = vpop.permute.xlu0 %2068
  %2070 = vrot.lane.b32.xlu0 %v2049, 8
  %v2071 = vpop.permute.xlu0 %2070
  %2072 = vrot.lane.b32.xlu0 %v2050, 8
  %v2073 = vpop.permute.xlu0 %2072
  %2074 = vrot.lane.b32.xlu0 %v2051, 8
  %v2075 = vpop.permute.xlu0 %2074
  %2076 = vrot.lane.b32.xlu0 %v2052, 8
  %v2077 = vpop.permute.xlu0 %2076
  %2078 = vrot.lane.b32.xlu0 %v2053, 8
  %v2079 = vpop.permute.xlu0 %2078
  %2080 = vrot.lane.b32.xlu0 %v2054, 8
  %v2081 = vpop.permute.xlu0 %2080
  %2082 = vrot.lane.b32.xlu0 %v2055, 8
  %v2083 = vpop.permute.xlu0 %2082
  %2084 = vrot.lane.b32.xlu0 %v2056, 8
  %v2085 = vpop.permute.xlu0 %2084
  %2086 = vrot.lane.b32.xlu0 %v2057, 8
  %v2087 = vpop.permute.xlu0 %2086
  %2088 = vrot.lane.b32.xlu0 %v2058, 8
  %v2089 = vpop.permute.xlu0 %2088
  %2090 = vrot.lane.b32.xlu0 %v2059, 8
  %v2091 = vpop.permute.xlu0 %2090
  %2108 = vst.msk [vmem:[#allocation5] sm:$0xf] %vm1393, %v2061
  %2109 = vst.msk [vmem:[#allocation5 + $0x4] sm:$0xf] %vm1393, %v2063
  %2110 = vst.msk [vmem:[#allocation5 + $0x8] sm:$0xf] %vm1393, %v2065
  %2111 = vst.msk [vmem:[#allocation5 + $0xc] sm:$0xf] %vm1393, %v2067
  %2112 = vst.msk [vmem:[#allocation5 + $0x10] sm:$0xf] %vm1393, %v2069
  %2113 = vst.msk [vmem:[#allocation5 + $0x14] sm:$0xf] %vm1393, %v2071
  %2114 = vst.msk [vmem:[#allocation5 + $0x18] sm:$0xf] %vm1393, %v2073
  %2115 = vst.msk [vmem:[#allocation5 + $0x1c] sm:$0xf] %vm1393, %v2075
  %2116 = vst.msk [vmem:[#allocation5 + $0x20] sm:$0xf] %vm1393, %v2077
  %2117 = vst.msk [vmem:[#allocation5 + $0x24] sm:$0xf] %vm1393, %v2079
  %2118 = vst.msk [vmem:[#allocation5 + $0x28] sm:$0xf] %vm1393, %v2081
  %2119 = vst.msk [vmem:[#allocation5 + $0x2c] sm:$0xf] %vm1393, %v2083
  %2120 = vst.msk [vmem:[#allocation5 + $0x30] sm:$0xf] %vm1393, %v2085
  %2121 = vst.msk [vmem:[#allocation5 + $0x34] sm:$0xf] %vm1393, %v2087
  %2122 = vst.msk [vmem:[#allocation5 + $0x38] sm:$0xf] %vm1393, %v2089
  %2123 = vst.msk [vmem:[#allocation5 + $0x3c] sm:$0xf] %vm1393, %v2091
  %2124 = vrot.lane.b32.xlu0 %v1539, 16
  %v2125 = vpop.permute.xlu0 %2124
  %2126 = vrot.lane.b32.xlu0 %v1540, 16
  %v2127 = vpop.permute.xlu0 %2126
  %2128 = vrot.lane.b32.xlu0 %v1541, 16
  %v2129 = vpop.permute.xlu0 %2128
  %2130 = vrot.lane.b32.xlu0 %v1542, 16
  %v2131 = vpop.permute.xlu0 %2130
  %2132 = vrot.lane.b32.xlu0 %v1543, 16
  %v2133 = vpop.permute.xlu0 %2132
  %2134 = vrot.lane.b32.xlu0 %v1544, 16
  %v2135 = vpop.permute.xlu0 %2134
  %2136 = vrot.lane.b32.xlu0 %v1545, 16
  %v2137 = vpop.permute.xlu0 %2136
  %2138 = vrot.lane.b32.xlu0 %v1546, 16
  %v2139 = vpop.permute.xlu0 %2138
  %2140 = vrot.lane.b32.xlu0 %v1547, 16
  %v2141 = vpop.permute.xlu0 %2140
  %2142 = vrot.lane.b32.xlu0 %v1548, 16
  %v2143 = vpop.permute.xlu0 %2142
  %2144 = vrot.lane.b32.xlu0 %v1549, 16
  %v2145 = vpop.permute.xlu0 %2144
  %2146 = vrot.lane.b32.xlu0 %v1550, 16
  %v2147 = vpop.permute.xlu0 %2146
  %2148 = vrot.lane.b32.xlu0 %v1551, 16
  %v2149 = vpop.permute.xlu0 %2148
  %2150 = vrot.lane.b32.xlu0 %v1552, 16
  %v2151 = vpop.permute.xlu0 %2150
  %2152 = vrot.lane.b32.xlu0 %v1553, 16
  %v2153 = vpop.permute.xlu0 %2152
  %2154 = vrot.lane.b32.xlu0 %v1554, 16
  %v2155 = vpop.permute.xlu0 %2154
  %2172 = vst.msk [vmem:[#allocation5] sm:$0xf] %vm1498, %v2125
  %2173 = vst.msk [vmem:[#allocation5 + $0x4] sm:$0xf] %vm1498, %v2127
  %2174 = vst.msk [vmem:[#allocation5 + $0x8] sm:$0xf] %vm1498, %v2129
  %2175 = vst.msk [vmem:[#allocation5 + $0xc] sm:$0xf] %vm1498, %v2131
  %2176 = vst.msk [vmem:[#allocation5 + $0x10] sm:$0xf] %vm1498, %v2133
  %2177 = vst.msk [vmem:[#allocation5 + $0x14] sm:$0xf] %vm1498, %v2135
  %2178 = vst.msk [vmem:[#allocation5 + $0x18] sm:$0xf] %vm1498, %v2137
  %2179 = vst.msk [vmem:[#allocation5 + $0x1c] sm:$0xf] %vm1498, %v2139
  %2180 = vst.msk [vmem:[#allocation5 + $0x20] sm:$0xf] %vm1498, %v2141
  %2181 = vst.msk [vmem:[#allocation5 + $0x24] sm:$0xf] %vm1498, %v2143
  %2182 = vst.msk [vmem:[#allocation5 + $0x28] sm:$0xf] %vm1498, %v2145
  %2183 = vst.msk [vmem:[#allocation5 + $0x2c] sm:$0xf] %vm1498, %v2147
  %2184 = vst.msk [vmem:[#allocation5 + $0x30] sm:$0xf] %vm1498, %v2149
  %2185 = vst.msk [vmem:[#allocation5 + $0x34] sm:$0xf] %vm1498, %v2151
  %2186 = vst.msk [vmem:[#allocation5 + $0x38] sm:$0xf] %vm1498, %v2153
  %2187 = vst.msk [vmem:[#allocation5 + $0x3c] sm:$0xf] %vm1498, %v2155
  %v2196 = vunpack.c.l.b16 %v1151
  %v2197 = vunpack.c.h.b16 %v1151
  %v2198 = vunpack.c.l.b16 %v1152
  %v2199 = vunpack.c.h.b16 %v1152
  %v2200 = vunpack.c.l.b16 %v1153
  %v2201 = vunpack.c.h.b16 %v1153
  %v2202 = vunpack.c.l.b16 %v1154
  %v2203 = vunpack.c.h.b16 %v1154
  %v2204 = vunpack.c.l.b16 %v1155
  %v2205 = vunpack.c.h.b16 %v1155
  %v2206 = vunpack.c.l.b16 %v1156
  %v2207 = vunpack.c.h.b16 %v1156
  %v2208 = vunpack.c.l.b16 %v1157
  %v2209 = vunpack.c.h.b16 %v1157
  %v2210 = vunpack.c.l.b16 %v1158
  %v2211 = vunpack.c.h.b16 %v1158
  %v2212 = vpack.c.b16 %v2196, %v2196
  %v2213 = vpack.c.b16 %v2197, %v2197
  %v2214 = vpack.c.b16 %v2198, %v2198
  %v2215 = vpack.c.b16 %v2199, %v2199
  %v2216 = vpack.c.b16 %v2200, %v2200
  %v2217 = vpack.c.b16 %v2201, %v2201
  %v2218 = vpack.c.b16 %v2202, %v2202
  %v2219 = vpack.c.b16 %v2203, %v2203
  %v2220 = vpack.c.b16 %v2204, %v2204
  %v2221 = vpack.c.b16 %v2205, %v2205
  %v2222 = vpack.c.b16 %v2206, %v2206
  %v2223 = vpack.c.b16 %v2207, %v2207
  %v2224 = vpack.c.b16 %v2208, %v2208
  %v2225 = vpack.c.b16 %v2209, %v2209
  %v2226 = vpack.c.b16 %v2210, %v2210
  %v2227 = vpack.c.b16 %v2211, %v2211
  %2228 = vrot.lane.b32.xlu0 %v2212, 24
  %v2229 = vpop.permute.xlu0 %2228
  %2230 = vrot.lane.b32.xlu0 %v2213, 24
  %v2231 = vpop.permute.xlu0 %2230
  %2232 = vrot.lane.b32.xlu0 %v2214, 24
  %v2233 = vpop.permute.xlu0 %2232
  %2234 = vrot.lane.b32.xlu0 %v2215, 24
  %v2235 = vpop.permute.xlu0 %2234
  %2236 = vrot.lane.b32.xlu0 %v2216, 24
  %v2237 = vpop.permute.xlu0 %2236
  %2238 = vrot.lane.b32.xlu0 %v2217, 24
  %v2239 = vpop.permute.xlu0 %2238
  %2240 = vrot.lane.b32.xlu0 %v2218, 24
  %v2241 = vpop.permute.xlu0 %2240
  %2242 = vrot.lane.b32.xlu0 %v2219, 24
  %v2243 = vpop.permute.xlu0 %2242
  %2244 = vrot.lane.b32.xlu0 %v2220, 24
  %v2245 = vpop.permute.xlu0 %2244
  %2246 = vrot.lane.b32.xlu0 %v2221, 24
  %v2247 = vpop.permute.xlu0 %2246
  %2248 = vrot.lane.b32.xlu0 %v2222, 24
  %v2249 = vpop.permute.xlu0 %2248
  %2250 = vrot.lane.b32.xlu0 %v2223, 24
  %v2251 = vpop.permute.xlu0 %2250
  %2252 = vrot.lane.b32.xlu0 %v2224, 24
  %v2253 = vpop.permute.xlu0 %2252
  %2254 = vrot.lane.b32.xlu0 %v2225, 24
  %v2255 = vpop.permute.xlu0 %2254
  %2256 = vrot.lane.b32.xlu0 %v2226, 24
  %v2257 = vpop.permute.xlu0 %2256
  %2258 = vrot.lane.b32.xlu0 %v2227, 24
  %v2259 = vpop.permute.xlu0 %2258
  %2276 = vst.msk [vmem:[#allocation5] sm:$0xf] %vm1603, %v2229
  %2277 = vst.msk [vmem:[#allocation5 + $0x4] sm:$0xf] %vm1603, %v2231
  %2278 = vst.msk [vmem:[#allocation5 + $0x8] sm:$0xf] %vm1603, %v2233
  %2279 = vst.msk [vmem:[#allocation5 + $0xc] sm:$0xf] %vm1603, %v2235
  %2280 = vst.msk [vmem:[#allocation5 + $0x10] sm:$0xf] %vm1603, %v2237
  %2281 = vst.msk [vmem:[#allocation5 + $0x14] sm:$0xf] %vm1603, %v2239
  %2282 = vst.msk [vmem:[#allocation5 + $0x18] sm:$0xf] %vm1603, %v2241
  %2283 = vst.msk [vmem:[#allocation5 + $0x1c] sm:$0xf] %vm1603, %v2243
  %2284 = vst.msk [vmem:[#allocation5 + $0x20] sm:$0xf] %vm1603, %v2245
  %2285 = vst.msk [vmem:[#allocation5 + $0x24] sm:$0xf] %vm1603, %v2247
  %2286 = vst.msk [vmem:[#allocation5 + $0x28] sm:$0xf] %vm1603, %v2249
  %2287 = vst.msk [vmem:[#allocation5 + $0x2c] sm:$0xf] %vm1603, %v2251
  %2288 = vst.msk [vmem:[#allocation5 + $0x30] sm:$0xf] %vm1603, %v2253
  %2289 = vst.msk [vmem:[#allocation5 + $0x34] sm:$0xf] %vm1603, %v2255
  %2290 = vst.msk [vmem:[#allocation5 + $0x38] sm:$0xf] %vm1603, %v2257
  %2291 = vst.msk [vmem:[#allocation5 + $0x3c] sm:$0xf] %vm1603, %v2259
  %v2292 = vld [vmem:[#allocation5] sm:$0xf]
  %v2293 = vld [vmem:[#allocation5 + $0x4] sm:$0xf]
  %v2294 = vld [vmem:[#allocation5 + $0x8] sm:$0xf]
  %v2295 = vld [vmem:[#allocation5 + $0xc] sm:$0xf]
  %v2296 = vld [vmem:[#allocation5 + $0x10] sm:$0xf]
  %v2297 = vld [vmem:[#allocation5 + $0x14] sm:$0xf]
  %v2298 = vld [vmem:[#allocation5 + $0x18] sm:$0xf]
  %v2299 = vld [vmem:[#allocation5 + $0x1c] sm:$0xf]
  %v2300 = vld [vmem:[#allocation5 + $0x20] sm:$0xf]
  %v2301 = vld [vmem:[#allocation5 + $0x24] sm:$0xf]
  %v2302 = vld [vmem:[#allocation5 + $0x28] sm:$0xf]
  %v2303 = vld [vmem:[#allocation5 + $0x2c] sm:$0xf]
  %v2304 = vld [vmem:[#allocation5 + $0x30] sm:$0xf]
  %v2305 = vld [vmem:[#allocation5 + $0x34] sm:$0xf]
  %v2306 = vld [vmem:[#allocation5 + $0x38] sm:$0xf]
  %v2307 = vld [vmem:[#allocation5 + $0x3c] sm:$0xf]
  %s2308 = scalar_lea.vmem %s2, 16
  %v2309 = vld [vmem:[%s2308] sm:$0xf]
  %v2310 = vld [vmem:[%s2308 + $0x4] sm:$0xf]
  %v2311 = vld [vmem:[%s2308 + $0x8] sm:$0xf]
  %v2312 = vld [vmem:[%s2308 + $0xc] sm:$0xf]
  %v2329 = vunpack.c.l.b16 %v2292
  %v2330 = vunpack.c.l.b16 %v2293
  %v2331 = vunpack.c.l.b16 %v2294
  %v2332 = vunpack.c.l.b16 %v2295
  %v2333 = vunpack.c.l.b16 %v2296
  %v2334 = vunpack.c.l.b16 %v2297
  %v2335 = vunpack.c.l.b16 %v2298
  %v2336 = vunpack.c.l.b16 %v2299
  %v2337 = vunpack.c.l.b16 %v2300
  %v2338 = vunpack.c.l.b16 %v2301
  %v2339 = vunpack.c.l.b16 %v2302
  %v2340 = vunpack.c.l.b16 %v2303
  %v2341 = vunpack.c.l.b16 %v2304
  %v2342 = vunpack.c.l.b16 %v2305
  %v2343 = vunpack.c.l.b16 %v2306
  %v2344 = vunpack.c.l.b16 %v2307
  %v2345 = vpack.c.b16 %v2330, %v2329
  %v2346 = vpack.c.b16 %v2332, %v2331
  %v2347 = vpack.c.b16 %v2334, %v2333
  %v2348 = vpack.c.b16 %v2336, %v2335
  %v2349 = vpack.c.b16 %v2338, %v2337
  %v2350 = vpack.c.b16 %v2340, %v2339
  %v2351 = vpack.c.b16 %v2342, %v2341
  %v2352 = vpack.c.b16 %v2344, %v2343
  %v2357 = vunpack.c.l.b16 %v2309
  %v2358 = vunpack.c.l.b16 %v2310
  %v2359 = vunpack.c.l.b16 %v2311
  %v2360 = vunpack.c.l.b16 %v2312
  %v2361 = vpack.c.b16 %v2358, %v2357
  %v2362 = vpack.c.b16 %v2360, %v2359
  %v2366 = vsel %vm1692, %v2345, 0
  %v2369 = vsel %vm1692, %v2346, 0
  %v2372 = vsel %vm1692, %v2347, 0
  %v2375 = vsel %vm1692, %v2348, 0
  %v2378 = vsel %vm1692, %v2349, 0
  %v2381 = vsel %vm1692, %v2350, 0
  %v2384 = vsel %vm1692, %v2351, 0
  %v2387 = vsel %vm1692, %v2352, 0
  %2389 = vmatprep.subr.bf16.mxu0 0
  %2390 = vmatpush1.bf16.msra.mxu0 0
  %2391 = vmatprep.subr.bf16.mxu0 0
  %2392 = vmatpush1.bf16.msra.mxu0 0
  %2393 = vmatprep.subr.bf16.mxu0 0
  %2394 = vmatpush1.bf16.msra.mxu0 0
  %2395 = vmatprep.subr.bf16.mxu0 0
  %2396 = vmatpush1.bf16.msra.mxu0 0
  %2397 = vmatprep.subr.bf16.mxu0 0
  %2398 = vmatpush1.bf16.msra.mxu0 0
  %2399 = vmatprep.subr.bf16.mxu0 0
  %2400 = vmatpush1.bf16.msra.mxu0 0
  %2401 = vmatprep.subr.bf16.mxu0 0
  %2402 = vmatpush1.bf16.msra.mxu0 %v2362
  %2403 = vmatprep.subr.bf16.mxu0 0
  %2404 = vmatpush1.bf16.msra.mxu0 %v2361
  %2405 = vmatprep.subr.bf16.mxu0 0
  %2406 = vmatpush2.bf16.msra.mxu0 0
  %2407 = vmatprep.subr.bf16.mxu0 0
  %2408 = vmatpush2.bf16.msra.mxu0 0
  %2409 = vmatprep.subr.bf16.mxu0 0
  %2410 = vmatpush2.bf16.msra.mxu0 0
  %2411 = vmatprep.subr.bf16.mxu0 0
  %2412 = vmatpush2.bf16.msra.mxu0 0
  %2413 = vmatprep.subr.bf16.mxu0 0
  %2414 = vmatpush2.bf16.msra.mxu0 0
  %2415 = vmatprep.subr.bf16.mxu0 0
  %2416 = vmatpush2.bf16.msra.mxu0 0
  %2417 = vmatprep.subr.bf16.mxu0 0
  %2418 = vmatpush2.bf16.msra.mxu0 0
  %2419 = vmatprep.subr.bf16.mxu0 0
  %2420 = vmatpush2.bf16.msra.mxu0 0
  %2421 = vmatprep.mubr.bf16.mxu0 0
  %2422 = vmatmul.mubr.bf16.gmra.mxu0 %v2366
  %v2423 = vpop.f32.mrf.mxu0
  %v2424 = vadd.f32 0.0, %v2423
  %v2425 = vpop.f32.mrf.mxu0
  %v2426 = vpop.f32.mrf.mxu0
  %v2427 = vadd.f32 0.0, %v2426
  %v2428 = vpop.f32.mrf.mxu0
  %2429 = vmatprep.mubr.bf16.mxu0 0
  %2430 = vmatmul.mubr.bf16.gmra.mxu0 %v2369
  %v2431 = vpop.f32.mrf.mxu0
  %v2432 = vadd.f32 0.0, %v2431
  %v2433 = vpop.f32.mrf.mxu0
  %v2434 = vpop.f32.mrf.mxu0
  %v2435 = vadd.f32 0.0, %v2434
  %v2436 = vpop.f32.mrf.mxu0
  %2437 = vmatprep.mubr.bf16.mxu0 0
  %2438 = vmatmul.mubr.bf16.gmra.mxu0 %v2372
  %v2439 = vpop.f32.mrf.mxu0
  %v2440 = vadd.f32 0.0, %v2439
  %v2441 = vpop.f32.mrf.mxu0
  %v2442 = vpop.f32.mrf.mxu0
  %v2443 = vadd.f32 0.0, %v2442
  %v2444 = vpop.f32.mrf.mxu0
  %2445 = vmatprep.mubr.bf16.mxu0 0
  %2446 = vmatmul.mubr.bf16.gmra.mxu0 %v2375
  %v2447 = vpop.f32.mrf.mxu0
  %v2448 = vadd.f32 0.0, %v2447
  %v2449 = vpop.f32.mrf.mxu0
  %v2450 = vpop.f32.mrf.mxu0
  %v2451 = vadd.f32 0.0, %v2450
  %v2452 = vpop.f32.mrf.mxu0
  %2453 = vmatprep.mubr.bf16.mxu0 0
  %2454 = vmatmul.mubr.bf16.gmra.mxu0 %v2378
  %v2455 = vpop.f32.mrf.mxu0
  %v2456 = vadd.f32 0.0, %v2455
  %v2457 = vpop.f32.mrf.mxu0
  %v2458 = vpop.f32.mrf.mxu0
  %v2459 = vadd.f32 0.0, %v2458
  %v2460 = vpop.f32.mrf.mxu0
  %2461 = vmatprep.mubr.bf16.mxu0 0
  %2462 = vmatmul.mubr.bf16.gmra.mxu0 %v2381
  %v2463 = vpop.f32.mrf.mxu0
  %v2464 = vadd.f32 0.0, %v2463
  %v2465 = vpop.f32.mrf.mxu0
  %v2466 = vpop.f32.mrf.mxu0
  %v2467 = vadd.f32 0.0, %v2466
  %v2468 = vpop.f32.mrf.mxu0
  %2469 = vmatprep.mubr.bf16.mxu0 0
  %2470 = vmatmul.mubr.bf16.gmra.mxu0 %v2384
  %v2471 = vpop.f32.mrf.mxu0
  %v2472 = vadd.f32 0.0, %v2471
  %v2473 = vpop.f32.mrf.mxu0
  %v2474 = vpop.f32.mrf.mxu0
  %v2475 = vadd.f32 0.0, %v2474
  %v2476 = vpop.f32.mrf.mxu0
  %2477 = vmatprep.mubr.bf16.mxu0 0
  %2478 = vmatmul.mubr.bf16.gmra.mxu0 %v2387
  %v2479 = vpop.f32.mrf.mxu0
  %v2480 = vadd.f32 0.0, %v2479
  %v2481 = vpop.f32.mrf.mxu0
  %v2482 = vpop.f32.mrf.mxu0
  %v2483 = vadd.f32 0.0, %v2482
  %v2484 = vpop.f32.mrf.mxu0
  %2485 = vdwg.mxu0
  %v2486 = vpack.c.bf16 %v2427, %v2424
  %v2487 = vpack.c.bf16 %v2435, %v2432
  %v2488 = vpack.c.bf16 %v2443, %v2440
  %v2489 = vpack.c.bf16 %v2451, %v2448
  %v2490 = vpack.c.bf16 %v2459, %v2456
  %v2491 = vpack.c.bf16 %v2467, %v2464
  %v2492 = vpack.c.bf16 %v2475, %v2472
  %v2493 = vpack.c.bf16 %v2483, %v2480
  %v2502 = vunpack.c.l.b16 %v2486
  %v2503 = vunpack.c.h.b16 %v2486
  %v2504 = vunpack.c.l.b16 %v2487
  %v2505 = vunpack.c.h.b16 %v2487
  %v2506 = vunpack.c.l.b16 %v2488
  %v2507 = vunpack.c.h.b16 %v2488
  %v2508 = vunpack.c.l.b16 %v2489
  %v2509 = vunpack.c.h.b16 %v2489
  %v2510 = vunpack.c.l.b16 %v2490
  %v2511 = vunpack.c.h.b16 %v2490
  %v2512 = vunpack.c.l.b16 %v2491
  %v2513 = vunpack.c.h.b16 %v2491
  %v2514 = vunpack.c.l.b16 %v2492
  %v2515 = vunpack.c.h.b16 %v2492
  %v2516 = vunpack.c.l.b16 %v2493
  %v2517 = vunpack.c.h.b16 %v2493
  %v2518 = vpack.c.b16 %v2502, %v2502
  %v2519 = vpack.c.b16 %v2503, %v2503
  %v2520 = vpack.c.b16 %v2504, %v2504
  %v2521 = vpack.c.b16 %v2505, %v2505
  %v2522 = vpack.c.b16 %v2506, %v2506
  %v2523 = vpack.c.b16 %v2507, %v2507
  %v2524 = vpack.c.b16 %v2508, %v2508
  %v2525 = vpack.c.b16 %v2509, %v2509
  %v2526 = vpack.c.b16 %v2510, %v2510
  %v2527 = vpack.c.b16 %v2511, %v2511
  %v2528 = vpack.c.b16 %v2512, %v2512
  %v2529 = vpack.c.b16 %v2513, %v2513
  %v2530 = vpack.c.b16 %v2514, %v2514
  %v2531 = vpack.c.b16 %v2515, %v2515
  %v2532 = vpack.c.b16 %v2516, %v2516
  %v2533 = vpack.c.b16 %v2517, %v2517
  %s2550 = scalar_lea.vmem %s3, 32
  %2551 = vst.msk [vmem:[%s2550] sm:$0xf] %vm1878, %v2518
  %2552 = vst.msk [vmem:[%s2550 + $0x4] sm:$0xf] %vm1878, %v2519
  %2553 = vst.msk [vmem:[%s2550 + $0x8] sm:$0xf] %vm1878, %v2520
  %2554 = vst.msk [vmem:[%s2550 + $0xc] sm:$0xf] %vm1878, %v2521
  %2555 = vst.msk [vmem:[%s2550 + $0x10] sm:$0xf] %vm1878, %v2522
  %2556 = vst.msk [vmem:[%s2550 + $0x14] sm:$0xf] %vm1878, %v2523
  %2557 = vst.msk [vmem:[%s2550 + $0x18] sm:$0xf] %vm1878, %v2524
  %2558 = vst.msk [vmem:[%s2550 + $0x1c] sm:$0xf] %vm1878, %v2525
  %2559 = vst.msk [vmem:[%s2550 + $0x80] sm:$0xf] %vm1878, %v2526
  %2560 = vst.msk [vmem:[%s2550 + $0x84] sm:$0xf] %vm1878, %v2527
  %2561 = vst.msk [vmem:[%s2550 + $0x88] sm:$0xf] %vm1878, %v2528
  %2562 = vst.msk [vmem:[%s2550 + $0x8c] sm:$0xf] %vm1878, %v2529
  %2563 = vst.msk [vmem:[%s2550 + $0x90] sm:$0xf] %vm1878, %v2530
  %2564 = vst.msk [vmem:[%s2550 + $0x94] sm:$0xf] %vm1878, %v2531
  %2565 = vst.msk [vmem:[%s2550 + $0x98] sm:$0xf] %vm1878, %v2532
  %2566 = vst.msk [vmem:[%s2550 + $0x9c] sm:$0xf] %vm1878, %v2533
  %v2567 = vsel %vm1895, %v2424, 0.0
  %v2568 = vsel %vm1895, %v2427, 0.0
  %v2569 = vadd.f32 %v2567, %v2568
  %v2570 = vsel %vm1895, %v2432, 0.0
  %v2571 = vadd.f32 %v2569, %v2570
  %v2572 = vsel %vm1895, %v2435, 0.0
  %v2573 = vadd.f32 %v2571, %v2572
  %v2574 = vsel %vm1895, %v2440, 0.0
  %v2575 = vadd.f32 %v2573, %v2574
  %v2576 = vsel %vm1895, %v2443, 0.0
  %v2577 = vadd.f32 %v2575, %v2576
  %v2578 = vsel %vm1895, %v2448, 0.0
  %v2579 = vadd.f32 %v2577, %v2578
  %v2580 = vsel %vm1895, %v2451, 0.0
  %v2581 = vadd.f32 %v2579, %v2580
  %v2582 = vsel %vm1895, %v2456, 0.0
  %v2583 = vadd.f32 %v2581, %v2582
  %v2584 = vsel %vm1895, %v2459, 0.0
  %v2585 = vadd.f32 %v2583, %v2584
  %v2586 = vsel %vm1895, %v2464, 0.0
  %v2587 = vadd.f32 %v2585, %v2586
  %v2588 = vsel %vm1895, %v2467, 0.0
  %v2589 = vadd.f32 %v2587, %v2588
  %v2590 = vsel %vm1895, %v2472, 0.0
  %v2591 = vadd.f32 %v2589, %v2590
  %v2592 = vsel %vm1895, %v2475, 0.0
  %v2593 = vadd.f32 %v2591, %v2592
  %v2594 = vsel %vm1895, %v2480, 0.0
  %v2595 = vadd.f32 %v2593, %v2594
  %v2596 = vsel %vm1895, %v2483, 0.0
  %v2597 = vadd.f32 %v2595, %v2596
  %v2598 = vrot.slane %v2597, 4
  %v2599 = vadd.f32 %v2597, %v2598
  %v2600 = vrot.slane %v2599, 2
  %v2601 = vadd.f32 %v2599, %v2600
  %v2602 = vrot.slane %v2601, 1
  %v2603 = vadd.f32 %v2601, %v2602
  %v2604 = vadd.f32 %v1933, %v2603
  %v2605 = vmul.f32 %v2424, %v2424
  %v2606 = vmul.f32 %v2427, %v2427
  %v2607 = vmul.f32 %v2432, %v2432
  %v2608 = vmul.f32 %v2435, %v2435
  %v2609 = vmul.f32 %v2440, %v2440
  %v2610 = vmul.f32 %v2443, %v2443
  %v2611 = vmul.f32 %v2448, %v2448
  %v2612 = vmul.f32 %v2451, %v2451
  %v2613 = vmul.f32 %v2456, %v2456
  %v2614 = vmul.f32 %v2459, %v2459
  %v2615 = vmul.f32 %v2464, %v2464
  %v2616 = vmul.f32 %v2467, %v2467
  %v2617 = vmul.f32 %v2472, %v2472
  %v2618 = vmul.f32 %v2475, %v2475
  %v2619 = vmul.f32 %v2480, %v2480
  %v2620 = vmul.f32 %v2483, %v2483
  %v2621 = vsel %vm1895, %v2605, 0.0
  %v2622 = vsel %vm1895, %v2606, 0.0
  %v2623 = vadd.f32 %v2621, %v2622
  %v2624 = vsel %vm1895, %v2607, 0.0
  %v2625 = vadd.f32 %v2623, %v2624
  %v2626 = vsel %vm1895, %v2608, 0.0
  %v2627 = vadd.f32 %v2625, %v2626
  %v2628 = vsel %vm1895, %v2609, 0.0
  %v2629 = vadd.f32 %v2627, %v2628
  %v2630 = vsel %vm1895, %v2610, 0.0
  %v2631 = vadd.f32 %v2629, %v2630
  %v2632 = vsel %vm1895, %v2611, 0.0
  %v2633 = vadd.f32 %v2631, %v2632
  %v2634 = vsel %vm1895, %v2612, 0.0
  %v2635 = vadd.f32 %v2633, %v2634
  %v2636 = vsel %vm1895, %v2613, 0.0
  %v2637 = vadd.f32 %v2635, %v2636
  %v2638 = vsel %vm1895, %v2614, 0.0
  %v2639 = vadd.f32 %v2637, %v2638
  %v2640 = vsel %vm1895, %v2615, 0.0
  %v2641 = vadd.f32 %v2639, %v2640
  %v2642 = vsel %vm1895, %v2616, 0.0
  %v2643 = vadd.f32 %v2641, %v2642
  %v2644 = vsel %vm1895, %v2617, 0.0
  %v2645 = vadd.f32 %v2643, %v2644
  %v2646 = vsel %vm1895, %v2618, 0.0
  %v2647 = vadd.f32 %v2645, %v2646
  %v2648 = vsel %vm1895, %v2619, 0.0
  %v2649 = vadd.f32 %v2647, %v2648
  %v2650 = vsel %vm1895, %v2620, 0.0
  %v2651 = vadd.f32 %v2649, %v2650
  %v2652 = vrot.slane %v2651, 4
  %v2653 = vadd.f32 %v2651, %v2652
  %v2654 = vrot.slane %v2653, 2
  %v2655 = vadd.f32 %v2653, %v2654
  %v2656 = vrot.slane %v2655, 1
  %v2657 = vadd.f32 %v2655, %v2656
  %v2658 = vadd.f32 %v1987, %v2657
  %2675 = vst.msk [vmem:[#allocation5] sm:$0xf] %vm1288, %v1434
  %2676 = vst.msk [vmem:[#allocation5 + $0x4] sm:$0xf] %vm1288, %v1435
  %2677 = vst.msk [vmem:[#allocation5 + $0x8] sm:$0xf] %vm1288, %v1436
  %2678 = vst.msk [vmem:[#allocation5 + $0xc] sm:$0xf] %vm1288, %v1437
  %2679 = vst.msk [vmem:[#allocation5 + $0x10] sm:$0xf] %vm1288, %v1438
  %2680 = vst.msk [vmem:[#allocation5 + $0x14] sm:$0xf] %vm1288, %v1439
  %2681 = vst.msk [vmem:[#allocation5 + $0x18] sm:$0xf] %vm1288, %v1440
  %2682 = vst.msk [vmem:[#allocation5 + $0x1c] sm:$0xf] %vm1288, %v1441
  %2683 = vst.msk [vmem:[#allocation5 + $0x20] sm:$0xf] %vm1288, %v1442
  %2684 = vst.msk [vmem:[#allocation5 + $0x24] sm:$0xf] %vm1288, %v1443
  %2685 = vst.msk [vmem:[#allocation5 + $0x28] sm:$0xf] %vm1288, %v1444
  %2686 = vst.msk [vmem:[#allocation5 + $0x2c] sm:$0xf] %vm1288, %v1445
  %2687 = vst.msk [vmem:[#allocation5 + $0x30] sm:$0xf] %vm1288, %v1446
  %2688 = vst.msk [vmem:[#allocation5 + $0x34] sm:$0xf] %vm1288, %v1447
  %2689 = vst.msk [vmem:[#allocation5 + $0x38] sm:$0xf] %vm1288, %v1448
  %2690 = vst.msk [vmem:[#allocation5 + $0x3c] sm:$0xf] %vm1288, %v1449
  %2691 = vrot.lane.b32.xlu0 %v1539, 8
  %v2692 = vpop.permute.xlu0 %2691
  %2693 = vrot.lane.b32.xlu0 %v1540, 8
  %v2694 = vpop.permute.xlu0 %2693
  %2695 = vrot.lane.b32.xlu0 %v1541, 8
  %v2696 = vpop.permute.xlu0 %2695
  %2697 = vrot.lane.b32.xlu0 %v1542, 8
  %v2698 = vpop.permute.xlu0 %2697
  %2699 = vrot.lane.b32.xlu0 %v1543, 8
  %v2700 = vpop.permute.xlu0 %2699
  %2701 = vrot.lane.b32.xlu0 %v1544, 8
  %v2702 = vpop.permute.xlu0 %2701
  %2703 = vrot.lane.b32.xlu0 %v1545, 8
  %v2704 = vpop.permute.xlu0 %2703
  %2705 = vrot.lane.b32.xlu0 %v1546, 8
  %v2706 = vpop.permute.xlu0 %2705
  %2707 = vrot.lane.b32.xlu0 %v1547, 8
  %v2708 = vpop.permute.xlu0 %2707
  %2709 = vrot.lane.b32.xlu0 %v1548, 8
  %v2710 = vpop.permute.xlu0 %2709
  %2711 = vrot.lane.b32.xlu0 %v1549, 8
  %v2712 = vpop.permute.xlu0 %2711
  %2713 = vrot.lane.b32.xlu0 %v1550, 8
  %v2714 = vpop.permute.xlu0 %2713
  %2715 = vrot.lane.b32.xlu0 %v1551, 8
  %v2716 = vpop.permute.xlu0 %2715
  %2717 = vrot.lane.b32.xlu0 %v1552, 8
  %v2718 = vpop.permute.xlu0 %2717
  %2719 = vrot.lane.b32.xlu0 %v1553, 8
  %v2720 = vpop.permute.xlu0 %2719
  %2721 = vrot.lane.b32.xlu0 %v1554, 8
  %v2722 = vpop.permute.xlu0 %2721
  %2739 = vst.msk [vmem:[#allocation5] sm:$0xf] %vm1393, %v2692
  %2740 = vst.msk [vmem:[#allocation5 + $0x4] sm:$0xf] %vm1393, %v2694
  %2741 = vst.msk [vmem:[#allocation5 + $0x8] sm:$0xf] %vm1393, %v2696
  %2742 = vst.msk [vmem:[#allocation5 + $0xc] sm:$0xf] %vm1393, %v2698
  %2743 = vst.msk [vmem:[#allocation5 + $0x10] sm:$0xf] %vm1393, %v2700
  %2744 = vst.msk [vmem:[#allocation5 + $0x14] sm:$0xf] %vm1393, %v2702
  %2745 = vst.msk [vmem:[#allocation5 + $0x18] sm:$0xf] %vm1393, %v2704
  %2746 = vst.msk [vmem:[#allocation5 + $0x1c] sm:$0xf] %vm1393, %v2706
  %2747 = vst.msk [vmem:[#allocation5 + $0x20] sm:$0xf] %vm1393, %v2708
  %2748 = vst.msk [vmem:[#allocation5 + $0x24] sm:$0xf] %vm1393, %v2710
  %2749 = vst.msk [vmem:[#allocation5 + $0x28] sm:$0xf] %vm1393, %v2712
  %2750 = vst.msk [vmem:[#allocation5 + $0x2c] sm:$0xf] %vm1393, %v2714
  %2751 = vst.msk [vmem:[#allocation5 + $0x30] sm:$0xf] %vm1393, %v2716
  %2752 = vst.msk [vmem:[#allocation5 + $0x34] sm:$0xf] %vm1393, %v2718
  %2753 = vst.msk [vmem:[#allocation5 + $0x38] sm:$0xf] %vm1393, %v2720
  %2754 = vst.msk [vmem:[#allocation5 + $0x3c] sm:$0xf] %vm1393, %v2722
  %v2763 = vunpack.c.l.b16 %v1176
  %v2764 = vunpack.c.h.b16 %v1176
  %v2765 = vunpack.c.l.b16 %v1177
  %v2766 = vunpack.c.h.b16 %v1177
  %v2767 = vunpack.c.l.b16 %v1178
  %v2768 = vunpack.c.h.b16 %v1178
  %v2769 = vunpack.c.l.b16 %v1179
  %v2770 = vunpack.c.h.b16 %v1179
  %v2771 = vunpack.c.l.b16 %v1180
  %v2772 = vunpack.c.h.b16 %v1180
  %v2773 = vunpack.c.l.b16 %v1181
  %v2774 = vunpack.c.h.b16 %v1181
  %v2775 = vunpack.c.l.b16 %v1182
  %v2776 = vunpack.c.h.b16 %v1182
  %v2777 = vunpack.c.l.b16 %v1183
  %v2778 = vunpack.c.h.b16 %v1183
  %v2779 = vpack.c.b16 %v2763, %v2763
  %v2780 = vpack.c.b16 %v2764, %v2764
  %v2781 = vpack.c.b16 %v2765, %v2765
  %v2782 = vpack.c.b16 %v2766, %v2766
  %v2783 = vpack.c.b16 %v2767, %v2767
  %v2784 = vpack.c.b16 %v2768, %v2768
  %v2785 = vpack.c.b16 %v2769, %v2769
  %v2786 = vpack.c.b16 %v2770, %v2770
  %v2787 = vpack.c.b16 %v2771, %v2771
  %v2788 = vpack.c.b16 %v2772, %v2772
  %v2789 = vpack.c.b16 %v2773, %v2773
  %v2790 = vpack.c.b16 %v2774, %v2774
  %v2791 = vpack.c.b16 %v2775, %v2775
  %v2792 = vpack.c.b16 %v2776, %v2776
  %v2793 = vpack.c.b16 %v2777, %v2777
  %v2794 = vpack.c.b16 %v2778, %v2778
  %2795 = vrot.lane.b32.xlu0 %v2779, 16
  %v2796 = vpop.permute.xlu0 %2795
  %2797 = vrot.lane.b32.xlu0 %v2780, 16
  %v2798 = vpop.permute.xlu0 %2797
  %2799 = vrot.lane.b32.xlu0 %v2781, 16
  %v2800 = vpop.permute.xlu0 %2799
  %2801 = vrot.lane.b32.xlu0 %v2782, 16
  %v2802 = vpop.permute.xlu0 %2801
  %2803 = vrot.lane.b32.xlu0 %v2783, 16
  %v2804 = vpop.permute.xlu0 %2803
  %2805 = vrot.lane.b32.xlu0 %v2784, 16
  %v2806 = vpop.permute.xlu0 %2805
  %2807 = vrot.lane.b32.xlu0 %v2785, 16
  %v2808 = vpop.permute.xlu0 %2807
  %2809 = vrot.lane.b32.xlu0 %v2786, 16
  %v2810 = vpop.permute.xlu0 %2809
  %2811 = vrot.lane.b32.xlu0 %v2787, 16
  %v2812 = vpop.permute.xlu0 %2811
  %2813 = vrot.lane.b32.xlu0 %v2788, 16
  %v2814 = vpop.permute.xlu0 %2813
  %2815 = vrot.lane.b32.xlu0 %v2789, 16
  %v2816 = vpop.permute.xlu0 %2815
  %2817 = vrot.lane.b32.xlu0 %v2790, 16
  %v2818 = vpop.permute.xlu0 %2817
  %2819 = vrot.lane.b32.xlu0 %v2791, 16
  %v2820 = vpop.permute.xlu0 %2819
  %2821 = vrot.lane.b32.xlu0 %v2792, 16
  %v2822 = vpop.permute.xlu0 %2821
  %2823 = vrot.lane.b32.xlu0 %v2793, 16
  %v2824 = vpop.permute.xlu0 %2823
  %2825 = vrot.lane.b32.xlu0 %v2794, 16
  %v2826 = vpop.permute.xlu0 %2825
  %2843 = vst.msk [vmem:[#allocation5] sm:$0xf] %vm1498, %v2796
  %2844 = vst.msk [vmem:[#allocation5 + $0x4] sm:$0xf] %vm1498, %v2798
  %2845 = vst.msk [vmem:[#allocation5 + $0x8] sm:$0xf] %vm1498, %v2800
  %2846 = vst.msk [vmem:[#allocation5 + $0xc] sm:$0xf] %vm1498, %v2802
  %2847 = vst.msk [vmem:[#allocation5 + $0x10] sm:$0xf] %vm1498, %v2804
  %2848 = vst.msk [vmem:[#allocation5 + $0x14] sm:$0xf] %vm1498, %v2806
  %2849 = vst.msk [vmem:[#allocation5 + $0x18] sm:$0xf] %vm1498, %v2808
  %2850 = vst.msk [vmem:[#allocation5 + $0x1c] sm:$0xf] %vm1498, %v2810
  %2851 = vst.msk [vmem:[#allocation5 + $0x20] sm:$0xf] %vm1498, %v2812
  %2852 = vst.msk [vmem:[#allocation5 + $0x24] sm:$0xf] %vm1498, %v2814
  %2853 = vst.msk [vmem:[#allocation5 + $0x28] sm:$0xf] %vm1498, %v2816
  %2854 = vst.msk [vmem:[#allocation5 + $0x2c] sm:$0xf] %vm1498, %v2818
  %2855 = vst.msk [vmem:[#allocation5 + $0x30] sm:$0xf] %vm1498, %v2820
  %2856 = vst.msk [vmem:[#allocation5 + $0x34] sm:$0xf] %vm1498, %v2822
  %2857 = vst.msk [vmem:[#allocation5 + $0x38] sm:$0xf] %vm1498, %v2824
  %2858 = vst.msk [vmem:[#allocation5 + $0x3c] sm:$0xf] %vm1498, %v2826
  %v2867 = vunpack.c.l.b16 %v1200
  %v2868 = vunpack.c.h.b16 %v1200
  %v2869 = vunpack.c.l.b16 %v1201
  %v2870 = vunpack.c.h.b16 %v1201
  %v2871 = vunpack.c.l.b16 %v1202
  %v2872 = vunpack.c.h.b16 %v1202
  %v2873 = vunpack.c.l.b16 %v1203
  %v2874 = vunpack.c.h.b16 %v1203
  %v2875 = vunpack.c.l.b16 %v1204
  %v2876 = vunpack.c.h.b16 %v1204
  %v2877 = vunpack.c.l.b16 %v1205
  %v2878 = vunpack.c.h.b16 %v1205
  %v2879 = vunpack.c.l.b16 %v1206
  %v2880 = vunpack.c.h.b16 %v1206
  %v2881 = vunpack.c.l.b16 %v1207
  %v2882 = vunpack.c.h.b16 %v1207
  %v2883 = vpack.c.b16 %v2867, %v2867
  %v2884 = vpack.c.b16 %v2868, %v2868
  %v2885 = vpack.c.b16 %v2869, %v2869
  %v2886 = vpack.c.b16 %v2870, %v2870
  %v2887 = vpack.c.b16 %v2871, %v2871
  %v2888 = vpack.c.b16 %v2872, %v2872
  %v2889 = vpack.c.b16 %v2873, %v2873
  %v2890 = vpack.c.b16 %v2874, %v2874
  %v2891 = vpack.c.b16 %v2875, %v2875
  %v2892 = vpack.c.b16 %v2876, %v2876
  %v2893 = vpack.c.b16 %v2877, %v2877
  %v2894 = vpack.c.b16 %v2878, %v2878
  %v2895 = vpack.c.b16 %v2879, %v2879
  %v2896 = vpack.c.b16 %v2880, %v2880
  %v2897 = vpack.c.b16 %v2881, %v2881
  %v2898 = vpack.c.b16 %v2882, %v2882
  %2899 = vrot.lane.b32.xlu0 %v2883, 24
  %v2900 = vpop.permute.xlu0 %2899
  %2901 = vrot.lane.b32.xlu0 %v2884, 24
  %v2902 = vpop.permute.xlu0 %2901
  %2903 = vrot.lane.b32.xlu0 %v2885, 24
  %v2904 = vpop.permute.xlu0 %2903
  %2905 = vrot.lane.b32.xlu0 %v2886, 24
  %v2906 = vpop.permute.xlu0 %2905
  %2907 = vrot.lane.b32.xlu0 %v2887, 24
  %v2908 = vpop.permute.xlu0 %2907
  %2909 = vrot.lane.b32.xlu0 %v2888, 24
  %v2910 = vpop.permute.xlu0 %2909
  %2911 = vrot.lane.b32.xlu0 %v2889, 24
  %v2912 = vpop.permute.xlu0 %2911
  %2913 = vrot.lane.b32.xlu0 %v2890, 24
  %v2914 = vpop.permute.xlu0 %2913
  %2915 = vrot.lane.b32.xlu0 %v2891, 24
  %v2916 = vpop.permute.xlu0 %2915
  %2917 = vrot.lane.b32.xlu0 %v2892, 24
  %v2918 = vpop.permute.xlu0 %2917
  %2919 = vrot.lane.b32.xlu0 %v2893, 24
  %v2920 = vpop.permute.xlu0 %2919
  %2921 = vrot.lane.b32.xlu0 %v2894, 24
  %v2922 = vpop.permute.xlu0 %2921
  %2923 = vrot.lane.b32.xlu0 %v2895, 24
  %v2924 = vpop.permute.xlu0 %2923
  %2925 = vrot.lane.b32.xlu0 %v2896, 24
  %v2926 = vpop.permute.xlu0 %2925
  %2927 = vrot.lane.b32.xlu0 %v2897, 24
  %v2928 = vpop.permute.xlu0 %2927
  %2929 = vrot.lane.b32.xlu0 %v2898, 24
  %v2930 = vpop.permute.xlu0 %2929
  %2947 = vst.msk [vmem:[#allocation5] sm:$0xf] %vm1603, %v2900
  %2948 = vst.msk [vmem:[#allocation5 + $0x4] sm:$0xf] %vm1603, %v2902
  %2949 = vst.msk [vmem:[#allocation5 + $0x8] sm:$0xf] %vm1603, %v2904
  %2950 = vst.msk [vmem:[#allocation5 + $0xc] sm:$0xf] %vm1603, %v2906
  %2951 = vst.msk [vmem:[#allocation5 + $0x10] sm:$0xf] %vm1603, %v2908
  %2952 = vst.msk [vmem:[#allocation5 + $0x14] sm:$0xf] %vm1603, %v2910
  %2953 = vst.msk [vmem:[#allocation5 + $0x18] sm:$0xf] %vm1603, %v2912
  %2954 = vst.msk [vmem:[#allocation5 + $0x1c] sm:$0xf] %vm1603, %v2914
  %2955 = vst.msk [vmem:[#allocation5 + $0x20] sm:$0xf] %vm1603, %v2916
  %2956 = vst.msk [vmem:[#allocation5 + $0x24] sm:$0xf] %vm1603, %v2918
  %2957 = vst.msk [vmem:[#allocation5 + $0x28] sm:$0xf] %vm1603, %v2920
  %2958 = vst.msk [vmem:[#allocation5 + $0x2c] sm:$0xf] %vm1603, %v2922
  %2959 = vst.msk [vmem:[#allocation5 + $0x30] sm:$0xf] %vm1603, %v2924
  %2960 = vst.msk [vmem:[#allocation5 + $0x34] sm:$0xf] %vm1603, %v2926
  %2961 = vst.msk [vmem:[#allocation5 + $0x38] sm:$0xf] %vm1603, %v2928
  %2962 = vst.msk [vmem:[#allocation5 + $0x3c] sm:$0xf] %vm1603, %v2930
  %v2963 = vld [vmem:[#allocation5] sm:$0xf]
  %v2964 = vld [vmem:[#allocation5 + $0x4] sm:$0xf]
  %v2965 = vld [vmem:[#allocation5 + $0x8] sm:$0xf]
  %v2966 = vld [vmem:[#allocation5 + $0xc] sm:$0xf]
  %v2967 = vld [vmem:[#allocation5 + $0x10] sm:$0xf]
  %v2968 = vld [vmem:[#allocation5 + $0x14] sm:$0xf]
  %v2969 = vld [vmem:[#allocation5 + $0x18] sm:$0xf]
  %v2970 = vld [vmem:[#allocation5 + $0x1c] sm:$0xf]
  %v2971 = vld [vmem:[#allocation5 + $0x20] sm:$0xf]
  %v2972 = vld [vmem:[#allocation5 + $0x24] sm:$0xf]
  %v2973 = vld [vmem:[#allocation5 + $0x28] sm:$0xf]
  %v2974 = vld [vmem:[#allocation5 + $0x2c] sm:$0xf]
  %v2975 = vld [vmem:[#allocation5 + $0x30] sm:$0xf]
  %v2976 = vld [vmem:[#allocation5 + $0x34] sm:$0xf]
  %v2977 = vld [vmem:[#allocation5 + $0x38] sm:$0xf]
  %v2978 = vld [vmem:[#allocation5 + $0x3c] sm:$0xf]
  %s2979 = scalar_lea.vmem %s2, 32
  %v2980 = vld [vmem:[%s2979] sm:$0xf]
  %v2981 = vld [vmem:[%s2979 + $0x4] sm:$0xf]
  %v2982 = vld [vmem:[%s2979 + $0x8] sm:$0xf]
  %v2983 = vld [vmem:[%s2979 + $0xc] sm:$0xf]
  %v3000 = vunpack.c.l.b16 %v2963
  %v3001 = vunpack.c.l.b16 %v2964
  %v3002 = vunpack.c.l.b16 %v2965
  %v3003 = vunpack.c.l.b16 %v2966
  %v3004 = vunpack.c.l.b16 %v2967
  %v3005 = vunpack.c.l.b16 %v2968
  %v3006 = vunpack.c.l.b16 %v2969
  %v3007 = vunpack.c.l.b16 %v2970
  %v3008 = vunpack.c.l.b16 %v2971
  %v3009 = vunpack.c.l.b16 %v2972
  %v3010 = vunpack.c.l.b16 %v2973
  %v3011 = vunpack.c.l.b16 %v2974
  %v3012 = vunpack.c.l.b16 %v2975
  %v3013 = vunpack.c.l.b16 %v2976
  %v3014 = vunpack.c.l.b16 %v2977
  %v3015 = vunpack.c.l.b16 %v2978
  %v3016 = vpack.c.b16 %v3001, %v3000
  %v3017 = vpack.c.b16 %v3003, %v3002
  %v3018 = vpack.c.b16 %v3005, %v3004
  %v3019 = vpack.c.b16 %v3007, %v3006
  %v3020 = vpack.c.b16 %v3009, %v3008
  %v3021 = vpack.c.b16 %v3011, %v3010
  %v3022 = vpack.c.b16 %v3013, %v3012
  %v3023 = vpack.c.b16 %v3015, %v3014
  %v3028 = vunpack.c.l.b16 %v2980
  %v3029 = vunpack.c.l.b16 %v2981
  %v3030 = vunpack.c.l.b16 %v2982
  %v3031 = vunpack.c.l.b16 %v2983
  %v3032 = vpack.c.b16 %v3029, %v3028
  %v3033 = vpack.c.b16 %v3031, %v3030
  %v3037 = vsel %vm1692, %v3016, 0
  %v3040 = vsel %vm1692, %v3017, 0
  %v3043 = vsel %vm1692, %v3018, 0
  %v3046 = vsel %vm1692, %v3019, 0
  %v3049 = vsel %vm1692, %v3020, 0
  %v3052 = vsel %vm1692, %v3021, 0
  %v3055 = vsel %vm1692, %v3022, 0
  %v3058 = vsel %vm1692, %v3023, 0
  %3060 = vmatprep.subr.bf16.mxu0 0
  %3061 = vmatpush1.bf16.msra.mxu0 0
  %3062 = vmatprep.subr.bf16.mxu0 0
  %3063 = vmatpush1.bf16.msra.mxu0 0
  %3064 = vmatprep.subr.bf16.mxu0 0
  %3065 = vmatpush1.bf16.msra.mxu0 0
  %3066 = vmatprep.subr.bf16.mxu0 0
  %3067 = vmatpush1.bf16.msra.mxu0 0
  %3068 = vmatprep.subr.bf16.mxu0 0
  %3069 = vmatpush1.bf16.msra.mxu0 0
  %3070 = vmatprep.subr.bf16.mxu0 0
  %3071 = vmatpush1.bf16.msra.mxu0 0
  %3072 = vmatprep.subr.bf16.mxu0 0
  %3073 = vmatpush1.bf16.msra.mxu0 %v3033
  %3074 = vmatprep.subr.bf16.mxu0 0
  %3075 = vmatpush1.bf16.msra.mxu0 %v3032
  %3076 = vmatprep.subr.bf16.mxu0 0
  %3077 = vmatpush2.bf16.msra.mxu0 0
  %3078 = vmatprep.subr.bf16.mxu0 0
  %3079 = vmatpush2.bf16.msra.mxu0 0
  %3080 = vmatprep.subr.bf16.mxu0 0
  %3081 = vmatpush2.bf16.msra.mxu0 0
  %3082 = vmatprep.subr.bf16.mxu0 0
  %3083 = vmatpush2.bf16.msra.mxu0 0
  %3084 = vmatprep.subr.bf16.mxu0 0
  %3085 = vmatpush2.bf16.msra.mxu0 0
  %3086 = vmatprep.subr.bf16.mxu0 0
  %3087 = vmatpush2.bf16.msra.mxu0 0
  %3088 = vmatprep.subr.bf16.mxu0 0
  %3089 = vmatpush2.bf16.msra.mxu0 0
  %3090 = vmatprep.subr.bf16.mxu0 0
  %3091 = vmatpush2.bf16.msra.mxu0 0
  %3092 = vmatprep.mubr.bf16.mxu0 0
  %3093 = vmatmul.mubr.bf16.gmra.mxu0 %v3037
  %v3094 = vpop.f32.mrf.mxu0
  %v3095 = vadd.f32 0.0, %v3094
  %v3096 = vpop.f32.mrf.mxu0
  %v3097 = vpop.f32.mrf.mxu0
  %v3098 = vadd.f32 0.0, %v3097
  %v3099 = vpop.f32.mrf.mxu0
  %3100 = vmatprep.mubr.bf16.mxu0 0
  %3101 = vmatmul.mubr.bf16.gmra.mxu0 %v3040
  %v3102 = vpop.f32.mrf.mxu0
  %v3103 = vadd.f32 0.0, %v3102
  %v3104 = vpop.f32.mrf.mxu0
  %v3105 = vpop.f32.mrf.mxu0
  %v3106 = vadd.f32 0.0, %v3105
  %v3107 = vpop.f32.mrf.mxu0
  %3108 = vmatprep.mubr.bf16.mxu0 0
  %3109 = vmatmul.mubr.bf16.gmra.mxu0 %v3043
  %v3110 = vpop.f32.mrf.mxu0
  %v3111 = vadd.f32 0.0, %v3110
  %v3112 = vpop.f32.mrf.mxu0
  %v3113 = vpop.f32.mrf.mxu0
  %v3114 = vadd.f32 0.0, %v3113
  %v3115 = vpop.f32.mrf.mxu0
  %3116 = vmatprep.mubr.bf16.mxu0 0
  %3117 = vmatmul.mubr.bf16.gmra.mxu0 %v3046
  %v3118 = vpop.f32.mrf.mxu0
  %v3119 = vadd.f32 0.0, %v3118
  %v3120 = vpop.f32.mrf.mxu0
  %v3121 = vpop.f32.mrf.mxu0
  %v3122 = vadd.f32 0.0, %v3121
  %v3123 = vpop.f32.mrf.mxu0
  %3124 = vmatprep.mubr.bf16.mxu0 0
  %3125 = vmatmul.mubr.bf16.gmra.mxu0 %v3049
  %v3126 = vpop.f32.mrf.mxu0
  %v3127 = vadd.f32 0.0, %v3126
  %v3128 = vpop.f32.mrf.mxu0
  %v3129 = vpop.f32.mrf.mxu0
  %v3130 = vadd.f32 0.0, %v3129
  %v3131 = vpop.f32.mrf.mxu0
  %3132 = vmatprep.mubr.bf16.mxu0 0
  %3133 = vmatmul.mubr.bf16.gmra.mxu0 %v3052
  %v3134 = vpop.f32.mrf.mxu0
  %v3135 = vadd.f32 0.0, %v3134
  %v3136 = vpop.f32.mrf.mxu0
  %v3137 = vpop.f32.mrf.mxu0
  %v3138 = vadd.f32 0.0, %v3137
  %v3139 = vpop.f32.mrf.mxu0
  %3140 = vmatprep.mubr.bf16.mxu0 0
  %3141 = vmatmul.mubr.bf16.gmra.mxu0 %v3055
  %v3142 = vpop.f32.mrf.mxu0
  %v3143 = vadd.f32 0.0, %v3142
  %v3144 = vpop.f32.mrf.mxu0
  %v3145 = vpop.f32.mrf.mxu0
  %v3146 = vadd.f32 0.0, %v3145
  %v3147 = vpop.f32.mrf.mxu0
  %3148 = vmatprep.mubr.bf16.mxu0 0
  %3149 = vmatmul.mubr.bf16.gmra.mxu0 %v3058
  %v3150 = vpop.f32.mrf.mxu0
  %v3151 = vadd.f32 0.0, %v3150
  %v3152 = vpop.f32.mrf.mxu0
  %v3153 = vpop.f32.mrf.mxu0
  %v3154 = vadd.f32 0.0, %v3153
  %v3155 = vpop.f32.mrf.mxu0
  %3156 = vdwg.mxu0
  %v3157 = vpack.c.bf16 %v3098, %v3095
  %v3158 = vpack.c.bf16 %v3106, %v3103
  %v3159 = vpack.c.bf16 %v3114, %v3111
  %v3160 = vpack.c.bf16 %v3122, %v3119
  %v3161 = vpack.c.bf16 %v3130, %v3127
  %v3162 = vpack.c.bf16 %v3138, %v3135
  %v3163 = vpack.c.bf16 %v3146, %v3143
  %v3164 = vpack.c.bf16 %v3154, %v3151
  %v3173 = vunpack.c.l.b16 %v3157
  %v3174 = vunpack.c.h.b16 %v3157
  %v3175 = vunpack.c.l.b16 %v3158
  %v3176 = vunpack.c.h.b16 %v3158
  %v3177 = vunpack.c.l.b16 %v3159
  %v3178 = vunpack.c.h.b16 %v3159
  %v3179 = vunpack.c.l.b16 %v3160
  %v3180 = vunpack.c.h.b16 %v3160
  %v3181 = vunpack.c.l.b16 %v3161
  %v3182 = vunpack.c.h.b16 %v3161
  %v3183 = vunpack.c.l.b16 %v3162
  %v3184 = vunpack.c.h.b16 %v3162
  %v3185 = vunpack.c.l.b16 %v3163
  %v3186 = vunpack.c.h.b16 %v3163
  %v3187 = vunpack.c.l.b16 %v3164
  %v3188 = vunpack.c.h.b16 %v3164
  %v3189 = vpack.c.b16 %v3173, %v3173
  %v3190 = vpack.c.b16 %v3174, %v3174
  %v3191 = vpack.c.b16 %v3175, %v3175
  %v3192 = vpack.c.b16 %v3176, %v3176
  %v3193 = vpack.c.b16 %v3177, %v3177
  %v3194 = vpack.c.b16 %v3178, %v3178
  %v3195 = vpack.c.b16 %v3179, %v3179
  %v3196 = vpack.c.b16 %v3180, %v3180
  %v3197 = vpack.c.b16 %v3181, %v3181
  %v3198 = vpack.c.b16 %v3182, %v3182
  %v3199 = vpack.c.b16 %v3183, %v3183
  %v3200 = vpack.c.b16 %v3184, %v3184
  %v3201 = vpack.c.b16 %v3185, %v3185
  %v3202 = vpack.c.b16 %v3186, %v3186
  %v3203 = vpack.c.b16 %v3187, %v3187
  %v3204 = vpack.c.b16 %v3188, %v3188
  %s3221 = scalar_lea.vmem %s3, 64
  %3222 = vst.msk [vmem:[%s3221] sm:$0xf] %vm1878, %v3189
  %3223 = vst.msk [vmem:[%s3221 + $0x4] sm:$0xf] %vm1878, %v3190
  %3224 = vst.msk [vmem:[%s3221 + $0x8] sm:$0xf] %vm1878, %v3191
  %3225 = vst.msk [vmem:[%s3221 + $0xc] sm:$0xf] %vm1878, %v3192
  %3226 = vst.msk [vmem:[%s3221 + $0x10] sm:$0xf] %vm1878, %v3193
  %3227 = vst.msk [vmem:[%s3221 + $0x14] sm:$0xf] %vm1878, %v3194
  %3228 = vst.msk [vmem:[%s3221 + $0x18] sm:$0xf] %vm1878, %v3195
  %3229 = vst.msk [vmem:[%s3221 + $0x1c] sm:$0xf] %vm1878, %v3196
  %3230 = vst.msk [vmem:[%s3221 + $0x80] sm:$0xf] %vm1878, %v3197
  %3231 = vst.msk [vmem:[%s3221 + $0x84] sm:$0xf] %vm1878, %v3198
  %3232 = vst.msk [vmem:[%s3221 + $0x88] sm:$0xf] %vm1878, %v3199
  %3233 = vst.msk [vmem:[%s3221 + $0x8c] sm:$0xf] %vm1878, %v3200
  %3234 = vst.msk [vmem:[%s3221 + $0x90] sm:$0xf] %vm1878, %v3201
  %3235 = vst.msk [vmem:[%s3221 + $0x94] sm:$0xf] %vm1878, %v3202
  %3236 = vst.msk [vmem:[%s3221 + $0x98] sm:$0xf] %vm1878, %v3203
  %3237 = vst.msk [vmem:[%s3221 + $0x9c] sm:$0xf] %vm1878, %v3204
  %v3238 = vsel %vm1895, %v3095, 0.0
  %v3239 = vsel %vm1895, %v3098, 0.0
  %v3240 = vadd.f32 %v3238, %v3239
  %v3241 = vsel %vm1895, %v3103, 0.0
  %v3242 = vadd.f32 %v3240, %v3241
  %v3243 = vsel %vm1895, %v3106, 0.0
  %v3244 = vadd.f32 %v3242, %v3243
  %v3245 = vsel %vm1895, %v3111, 0.0
  %v3246 = vadd.f32 %v3244, %v3245
  %v3247 = vsel %vm1895, %v3114, 0.0
  %v3248 = vadd.f32 %v3246, %v3247
  %v3249 = vsel %vm1895, %v3119, 0.0
  %v3250 = vadd.f32 %v3248, %v3249
  %v3251 = vsel %vm1895, %v3122, 0.0
  %v3252 = vadd.f32 %v3250, %v3251
  %v3253 = vsel %vm1895, %v3127, 0.0
  %v3254 = vadd.f32 %v3252, %v3253
  %v3255 = vsel %vm1895, %v3130, 0.0
  %v3256 = vadd.f32 %v3254, %v3255
  %v3257 = vsel %vm1895, %v3135, 0.0
  %v3258 = vadd.f32 %v3256, %v3257
  %v3259 = vsel %vm1895, %v3138, 0.0
  %v3260 = vadd.f32 %v3258, %v3259
  %v3261 = vsel %vm1895, %v3143, 0.0
  %v3262 = vadd.f32 %v3260, %v3261
  %v3263 = vsel %vm1895, %v3146, 0.0
  %v3264 = vadd.f32 %v3262, %v3263
  %v3265 = vsel %vm1895, %v3151, 0.0
  %v3266 = vadd.f32 %v3264, %v3265
  %v3267 = vsel %vm1895, %v3154, 0.0
  %v3268 = vadd.f32 %v3266, %v3267
  %v3269 = vrot.slane %v3268, 4
  %v3270 = vadd.f32 %v3268, %v3269
  %v3271 = vrot.slane %v3270, 2
  %v3272 = vadd.f32 %v3270, %v3271
  %v3273 = vrot.slane %v3272, 1
  %v3274 = vadd.f32 %v3272, %v3273
  %v3275 = vadd.f32 %v2604, %v3274
  %v3276 = vmul.f32 %v3095, %v3095
  %v3277 = vmul.f32 %v3098, %v3098
  %v3278 = vmul.f32 %v3103, %v3103
  %v3279 = vmul.f32 %v3106, %v3106
  %v3280 = vmul.f32 %v3111, %v3111
  %v3281 = vmul.f32 %v3114, %v3114
  %v3282 = vmul.f32 %v3119, %v3119
  %v3283 = vmul.f32 %v3122, %v3122
  %v3284 = vmul.f32 %v3127, %v3127
  %v3285 = vmul.f32 %v3130, %v3130
  %v3286 = vmul.f32 %v3135, %v3135
  %v3287 = vmul.f32 %v3138, %v3138
  %v3288 = vmul.f32 %v3143, %v3143
  %v3289 = vmul.f32 %v3146, %v3146
  %v3290 = vmul.f32 %v3151, %v3151
  %v3291 = vmul.f32 %v3154, %v3154
  %v3292 = vsel %vm1895, %v3276, 0.0
  %v3293 = vsel %vm1895, %v3277, 0.0
  %v3294 = vadd.f32 %v3292, %v3293
  %v3295 = vsel %vm1895, %v3278, 0.0
  %v3296 = vadd.f32 %v3294, %v3295
  %v3297 = vsel %vm1895, %v3279, 0.0
  %v3298 = vadd.f32 %v3296, %v3297
  %v3299 = vsel %vm1895, %v3280, 0.0
  %v3300 = vadd.f32 %v3298, %v3299
  %v3301 = vsel %vm1895, %v3281, 0.0
  %v3302 = vadd.f32 %v3300, %v3301
  %v3303 = vsel %vm1895, %v3282, 0.0
  %v3304 = vadd.f32 %v3302, %v3303
  %v3305 = vsel %vm1895, %v3283, 0.0
  %v3306 = vadd.f32 %v3304, %v3305
  %v3307 = vsel %vm1895, %v3284, 0.0
  %v3308 = vadd.f32 %v3306, %v3307
  %v3309 = vsel %vm1895, %v3285, 0.0
  %v3310 = vadd.f32 %v3308, %v3309
  %v3311 = vsel %vm1895, %v3286, 0.0
  %v3312 = vadd.f32 %v3310, %v3311
  %v3313 = vsel %vm1895, %v3287, 0.0
  %v3314 = vadd.f32 %v3312, %v3313
  %v3315 = vsel %vm1895, %v3288, 0.0
  %v3316 = vadd.f32 %v3314, %v3315
  %v3317 = vsel %vm1895, %v3289, 0.0
  %v3318 = vadd.f32 %v3316, %v3317
  %v3319 = vsel %vm1895, %v3290, 0.0
  %v3320 = vadd.f32 %v3318, %v3319
  %v3321 = vsel %vm1895, %v3291, 0.0
  %v3322 = vadd.f32 %v3320, %v3321
  %v3323 = vrot.slane %v3322, 4
  %v3324 = vadd.f32 %v3322, %v3323
  %v3325 = vrot.slane %v3324, 2
  %v3326 = vadd.f32 %v3324, %v3325
  %v3327 = vrot.slane %v3326, 1
  %v3328 = vadd.f32 %v3326, %v3327
  %v3329 = vadd.f32 %v2658, %v3328
  %3346 = vst.msk [vmem:[#allocation5] sm:$0xf] %vm1288, %v1539
  %3347 = vst.msk [vmem:[#allocation5 + $0x4] sm:$0xf] %vm1288, %v1540
  %3348 = vst.msk [vmem:[#allocation5 + $0x8] sm:$0xf] %vm1288, %v1541
  %3349 = vst.msk [vmem:[#allocation5 + $0xc] sm:$0xf] %vm1288, %v1542
  %3350 = vst.msk [vmem:[#allocation5 + $0x10] sm:$0xf] %vm1288, %v1543
  %3351 = vst.msk [vmem:[#allocation5 + $0x14] sm:$0xf] %vm1288, %v1544
  %3352 = vst.msk [vmem:[#allocation5 + $0x18] sm:$0xf] %vm1288, %v1545
  %3353 = vst.msk [vmem:[#allocation5 + $0x1c] sm:$0xf] %vm1288, %v1546
  %3354 = vst.msk [vmem:[#allocation5 + $0x20] sm:$0xf] %vm1288, %v1547
  %3355 = vst.msk [vmem:[#allocation5 + $0x24] sm:$0xf] %vm1288, %v1548
  %3356 = vst.msk [vmem:[#allocation5 + $0x28] sm:$0xf] %vm1288, %v1549
  %3357 = vst.msk [vmem:[#allocation5 + $0x2c] sm:$0xf] %vm1288, %v1550
  %3358 = vst.msk [vmem:[#allocation5 + $0x30] sm:$0xf] %vm1288, %v1551
  %3359 = vst.msk [vmem:[#allocation5 + $0x34] sm:$0xf] %vm1288, %v1552
  %3360 = vst.msk [vmem:[#allocation5 + $0x38] sm:$0xf] %vm1288, %v1553
  %3361 = vst.msk [vmem:[#allocation5 + $0x3c] sm:$0xf] %vm1288, %v1554
  %3362 = vrot.lane.b32.xlu0 %v2212, 8
  %v3363 = vpop.permute.xlu0 %3362
  %3364 = vrot.lane.b32.xlu0 %v2213, 8
  %v3365 = vpop.permute.xlu0 %3364
  %3366 = vrot.lane.b32.xlu0 %v2214, 8
  %v3367 = vpop.permute.xlu0 %3366
  %3368 = vrot.lane.b32.xlu0 %v2215, 8
  %v3369 = vpop.permute.xlu0 %3368
  %3370 = vrot.lane.b32.xlu0 %v2216, 8
  %v3371 = vpop.permute.xlu0 %3370
  %3372 = vrot.lane.b32.xlu0 %v2217, 8
  %v3373 = vpop.permute.xlu0 %3372
  %3374 = vrot.lane.b32.xlu0 %v2218, 8
  %v3375 = vpop.permute.xlu0 %3374
  %3376 = vrot.lane.b32.xlu0 %v2219, 8
  %v3377 = vpop.permute.xlu0 %3376
  %3378 = vrot.lane.b32.xlu0 %v2220, 8
  %v3379 = vpop.permute.xlu0 %3378
  %3380 = vrot.lane.b32.xlu0 %v2221, 8
  %v3381 = vpop.permute.xlu0 %3380
  %3382 = vrot.lane.b32.xlu0 %v2222, 8
  %v3383 = vpop.permute.xlu0 %3382
  %3384 = vrot.lane.b32.xlu0 %v2223, 8
  %v3385 = vpop.permute.xlu0 %3384
  %3386 = vrot.lane.b32.xlu0 %v2224, 8
  %v3387 = vpop.permute.xlu0 %3386
  %3388 = vrot.lane.b32.xlu0 %v2225, 8
  %v3389 = vpop.permute.xlu0 %3388
  %3390 = vrot.lane.b32.xlu0 %v2226, 8
  %v3391 = vpop.permute.xlu0 %3390
  %3392 = vrot.lane.b32.xlu0 %v2227, 8
  %v3393 = vpop.permute.xlu0 %3392
  %3410 = vst.msk [vmem:[#allocation5] sm:$0xf] %vm1393, %v3363
  %3411 = vst.msk [vmem:[#allocation5 + $0x4] sm:$0xf] %vm1393, %v3365
  %3412 = vst.msk [vmem:[#allocation5 + $0x8] sm:$0xf] %vm1393, %v3367
  %3413 = vst.msk [vmem:[#allocation5 + $0xc] sm:$0xf] %vm1393, %v3369
  %3414 = vst.msk [vmem:[#allocation5 + $0x10] sm:$0xf] %vm1393, %v3371
  %3415 = vst.msk [vmem:[#allocation5 + $0x14] sm:$0xf] %vm1393, %v3373
  %3416 = vst.msk [vmem:[#allocation5 + $0x18] sm:$0xf] %vm1393, %v3375
  %3417 = vst.msk [vmem:[#allocation5 + $0x1c] sm:$0xf] %vm1393, %v3377
  %3418 = vst.msk [vmem:[#allocation5 + $0x20] sm:$0xf] %vm1393, %v3379
  %3419 = vst.msk [vmem:[#allocation5 + $0x24] sm:$0xf] %vm1393, %v3381
  %3420 = vst.msk [vmem:[#allocation5 + $0x28] sm:$0xf] %vm1393, %v3383
  %3421 = vst.msk [vmem:[#allocation5 + $0x2c] sm:$0xf] %vm1393, %v3385
  %3422 = vst.msk [vmem:[#allocation5 + $0x30] sm:$0xf] %vm1393, %v3387
  %3423 = vst.msk [vmem:[#allocation5 + $0x34] sm:$0xf] %vm1393, %v3389
  %3424 = vst.msk [vmem:[#allocation5 + $0x38] sm:$0xf] %vm1393, %v3391
  %3425 = vst.msk [vmem:[#allocation5 + $0x3c] sm:$0xf] %vm1393, %v3393
  %3426 = vrot.lane.b32.xlu0 %v2883, 16
  %v3427 = vpop.permute.xlu0 %3426
  %3428 = vrot.lane.b32.xlu0 %v2884, 16
  %v3429 = vpop.permute.xlu0 %3428
  %3430 = vrot.lane.b32.xlu0 %v2885, 16
  %v3431 = vpop.permute.xlu0 %3430
  %3432 = vrot.lane.b32.xlu0 %v2886, 16
  %v3433 = vpop.permute.xlu0 %3432
  %3434 = vrot.lane.b32.xlu0 %v2887, 16
  %v3435 = vpop.permute.xlu0 %3434
  %3436 = vrot.lane.b32.xlu0 %v2888, 16
  %v3437 = vpop.permute.xlu0 %3436
  %3438 = vrot.lane.b32.xlu0 %v2889, 16
  %v3439 = vpop.permute.xlu0 %3438
  %3440 = vrot.lane.b32.xlu0 %v2890, 16
  %v3441 = vpop.permute.xlu0 %3440
  %3442 = vrot.lane.b32.xlu0 %v2891, 16
  %v3443 = vpop.permute.xlu0 %3442
  %3444 = vrot.lane.b32.xlu0 %v2892, 16
  %v3445 = vpop.permute.xlu0 %3444
  %3446 = vrot.lane.b32.xlu0 %v2893, 16
  %v3447 = vpop.permute.xlu0 %3446
  %3448 = vrot.lane.b32.xlu0 %v2894, 16
  %v3449 = vpop.permute.xlu0 %3448
  %3450 = vrot.lane.b32.xlu0 %v2895, 16
  %v3451 = vpop.permute.xlu0 %3450
  %3452 = vrot.lane.b32.xlu0 %v2896, 16
  %v3453 = vpop.permute.xlu0 %3452
  %3454 = vrot.lane.b32.xlu0 %v2897, 16
  %v3455 = vpop.permute.xlu0 %3454
  %3456 = vrot.lane.b32.xlu0 %v2898, 16
  %v3457 = vpop.permute.xlu0 %3456
  %3474 = vst.msk [vmem:[#allocation5] sm:$0xf] %vm1498, %v3427
  %3475 = vst.msk [vmem:[#allocation5 + $0x4] sm:$0xf] %vm1498, %v3429
  %3476 = vst.msk [vmem:[#allocation5 + $0x8] sm:$0xf] %vm1498, %v3431
  %3477 = vst.msk [vmem:[#allocation5 + $0xc] sm:$0xf] %vm1498, %v3433
  %3478 = vst.msk [vmem:[#allocation5 + $0x10] sm:$0xf] %vm1498, %v3435
  %3479 = vst.msk [vmem:[#allocation5 + $0x14] sm:$0xf] %vm1498, %v3437
  %3480 = vst.msk [vmem:[#allocation5 + $0x18] sm:$0xf] %vm1498, %v3439
  %3481 = vst.msk [vmem:[#allocation5 + $0x1c] sm:$0xf] %vm1498, %v3441
  %3482 = vst.msk [vmem:[#allocation5 + $0x20] sm:$0xf] %vm1498, %v3443
  %3483 = vst.msk [vmem:[#allocation5 + $0x24] sm:$0xf] %vm1498, %v3445
  %3484 = vst.msk [vmem:[#allocation5 + $0x28] sm:$0xf] %vm1498, %v3447
  %3485 = vst.msk [vmem:[#allocation5 + $0x2c] sm:$0xf] %vm1498, %v3449
  %3486 = vst.msk [vmem:[#allocation5 + $0x30] sm:$0xf] %vm1498, %v3451
  %3487 = vst.msk [vmem:[#allocation5 + $0x34] sm:$0xf] %vm1498, %v3453
  %3488 = vst.msk [vmem:[#allocation5 + $0x38] sm:$0xf] %vm1498, %v3455
  %3489 = vst.msk [vmem:[#allocation5 + $0x3c] sm:$0xf] %vm1498, %v3457
  %v3498 = vunpack.c.l.b16 %v1224
  %v3499 = vunpack.c.h.b16 %v1224
  %v3500 = vunpack.c.l.b16 %v1225
  %v3501 = vunpack.c.h.b16 %v1225
  %v3502 = vunpack.c.l.b16 %v1226
  %v3503 = vunpack.c.h.b16 %v1226
  %v3504 = vunpack.c.l.b16 %v1227
  %v3505 = vunpack.c.h.b16 %v1227
  %v3506 = vunpack.c.l.b16 %v1228
  %v3507 = vunpack.c.h.b16 %v1228
  %v3508 = vunpack.c.l.b16 %v1229
  %v3509 = vunpack.c.h.b16 %v1229
  %v3510 = vunpack.c.l.b16 %v1230
  %v3511 = vunpack.c.h.b16 %v1230
  %v3512 = vunpack.c.l.b16 %v1231
  %v3513 = vunpack.c.h.b16 %v1231
  %v3514 = vpack.c.b16 %v3498, %v3498
  %v3515 = vpack.c.b16 %v3499, %v3499
  %v3516 = vpack.c.b16 %v3500, %v3500
  %v3517 = vpack.c.b16 %v3501, %v3501
  %v3518 = vpack.c.b16 %v3502, %v3502
  %v3519 = vpack.c.b16 %v3503, %v3503
  %v3520 = vpack.c.b16 %v3504, %v3504
  %v3521 = vpack.c.b16 %v3505, %v3505
  %v3522 = vpack.c.b16 %v3506, %v3506
  %v3523 = vpack.c.b16 %v3507, %v3507
  %v3524 = vpack.c.b16 %v3508, %v3508
  %v3525 = vpack.c.b16 %v3509, %v3509
  %v3526 = vpack.c.b16 %v3510, %v3510
  %v3527 = vpack.c.b16 %v3511, %v3511
  %v3528 = vpack.c.b16 %v3512, %v3512
  %v3529 = vpack.c.b16 %v3513, %v3513
  %3530 = vrot.lane.b32.xlu0 %v3514, 24
  %v3531 = vpop.permute.xlu0 %3530
  %3532 = vrot.lane.b32.xlu0 %v3515, 24
  %v3533 = vpop.permute.xlu0 %3532
  %3534 = vrot.lane.b32.xlu0 %v3516, 24
  %v3535 = vpop.permute.xlu0 %3534
  %3536 = vrot.lane.b32.xlu0 %v3517, 24
  %v3537 = vpop.permute.xlu0 %3536
  %3538 = vrot.lane.b32.xlu0 %v3518, 24
  %v3539 = vpop.permute.xlu0 %3538
  %3540 = vrot.lane.b32.xlu0 %v3519, 24
  %v3541 = vpop.permute.xlu0 %3540
  %3542 = vrot.lane.b32.xlu0 %v3520, 24
  %v3543 = vpop.permute.xlu0 %3542
  %3544 = vrot.lane.b32.xlu0 %v3521, 24
  %v3545 = vpop.permute.xlu0 %3544
  %3546 = vrot.lane.b32.xlu0 %v3522, 24
  %v3547 = vpop.permute.xlu0 %3546
  %3548 = vrot.lane.b32.xlu0 %v3523, 24
  %v3549 = vpop.permute.xlu0 %3548
  %3550 = vrot.lane.b32.xlu0 %v3524, 24
  %v3551 = vpop.permute.xlu0 %3550
  %3552 = vrot.lane.b32.xlu0 %v3525, 24
  %v3553 = vpop.permute.xlu0 %3552
  %3554 = vrot.lane.b32.xlu0 %v3526, 24
  %v3555 = vpop.permute.xlu0 %3554
  %3556 = vrot.lane.b32.xlu0 %v3527, 24
  %v3557 = vpop.permute.xlu0 %3556
  %3558 = vrot.lane.b32.xlu0 %v3528, 24
  %v3559 = vpop.permute.xlu0 %3558
  %3560 = vrot.lane.b32.xlu0 %v3529, 24
  %v3561 = vpop.permute.xlu0 %3560
  %3578 = vst.msk [vmem:[#allocation5] sm:$0xf] %vm1603, %v3531
  %3579 = vst.msk [vmem:[#allocation5 + $0x4] sm:$0xf] %vm1603, %v3533
  %3580 = vst.msk [vmem:[#allocation5 + $0x8] sm:$0xf] %vm1603, %v3535
  %3581 = vst.msk [vmem:[#allocation5 + $0xc] sm:$0xf] %vm1603, %v3537
  %3582 = vst.msk [vmem:[#allocation5 + $0x10] sm:$0xf] %vm1603, %v3539
  %3583 = vst.msk [vmem:[#allocation5 + $0x14] sm:$0xf] %vm1603, %v3541
  %3584 = vst.msk [vmem:[#allocation5 + $0x18] sm:$0xf] %vm1603, %v3543
  %3585 = vst.msk [vmem:[#allocation5 + $0x1c] sm:$0xf] %vm1603, %v3545
  %3586 = vst.msk [vmem:[#allocation5 + $0x20] sm:$0xf] %vm1603, %v3547
  %3587 = vst.msk [vmem:[#allocation5 + $0x24] sm:$0xf] %vm1603, %v3549
  %3588 = vst.msk [vmem:[#allocation5 + $0x28] sm:$0xf] %vm1603, %v3551
  %3589 = vst.msk [vmem:[#allocation5 + $0x2c] sm:$0xf] %vm1603, %v3553
  %3590 = vst.msk [vmem:[#allocation5 + $0x30] sm:$0xf] %vm1603, %v3555
  %3591 = vst.msk [vmem:[#allocation5 + $0x34] sm:$0xf] %vm1603, %v3557
  %3592 = vst.msk [vmem:[#allocation5 + $0x38] sm:$0xf] %vm1603, %v3559
  %3593 = vst.msk [vmem:[#allocation5 + $0x3c] sm:$0xf] %vm1603, %v3561
  %v3594 = vld [vmem:[#allocation5] sm:$0xf]
  %v3595 = vld [vmem:[#allocation5 + $0x4] sm:$0xf]
  %v3596 = vld [vmem:[#allocation5 + $0x8] sm:$0xf]
  %v3597 = vld [vmem:[#allocation5 + $0xc] sm:$0xf]
  %v3598 = vld [vmem:[#allocation5 + $0x10] sm:$0xf]
  %v3599 = vld [vmem:[#allocation5 + $0x14] sm:$0xf]
  %v3600 = vld [vmem:[#allocation5 + $0x18] sm:$0xf]
  %v3601 = vld [vmem:[#allocation5 + $0x1c] sm:$0xf]
  %v3602 = vld [vmem:[#allocation5 + $0x20] sm:$0xf]
  %v3603 = vld [vmem:[#allocation5 + $0x24] sm:$0xf]
  %v3604 = vld [vmem:[#allocation5 + $0x28] sm:$0xf]
  %v3605 = vld [vmem:[#allocation5 + $0x2c] sm:$0xf]
  %v3606 = vld [vmem:[#allocation5 + $0x30] sm:$0xf]
  %v3607 = vld [vmem:[#allocation5 + $0x34] sm:$0xf]
  %v3608 = vld [vmem:[#allocation5 + $0x38] sm:$0xf]
  %v3609 = vld [vmem:[#allocation5 + $0x3c] sm:$0xf]
  %s3610 = scalar_lea.vmem %s2, 48
  %v3611 = vld [vmem:[%s3610] sm:$0xf]
  %v3612 = vld [vmem:[%s3610 + $0x4] sm:$0xf]
  %v3613 = vld [vmem:[%s3610 + $0x8] sm:$0xf]
  %v3614 = vld [vmem:[%s3610 + $0xc] sm:$0xf]
  %v3631 = vunpack.c.l.b16 %v3594
  %v3632 = vunpack.c.l.b16 %v3595
  %v3633 = vunpack.c.l.b16 %v3596
  %v3634 = vunpack.c.l.b16 %v3597
  %v3635 = vunpack.c.l.b16 %v3598
  %v3636 = vunpack.c.l.b16 %v3599
  %v3637 = vunpack.c.l.b16 %v3600
  %v3638 = vunpack.c.l.b16 %v3601
  %v3639 = vunpack.c.l.b16 %v3602
  %v3640 = vunpack.c.l.b16 %v3603
  %v3641 = vunpack.c.l.b16 %v3604
  %v3642 = vunpack.c.l.b16 %v3605
  %v3643 = vunpack.c.l.b16 %v3606
  %v3644 = vunpack.c.l.b16 %v3607
  %v3645 = vunpack.c.l.b16 %v3608
  %v3646 = vunpack.c.l.b16 %v3609
  %v3647 = vpack.c.b16 %v3632, %v3631
  %v3648 = vpack.c.b16 %v3634, %v3633
  %v3649 = vpack.c.b16 %v3636, %v3635
  %v3650 = vpack.c.b16 %v3638, %v3637
  %v3651 = vpack.c.b16 %v3640, %v3639
  %v3652 = vpack.c.b16 %v3642, %v3641
  %v3653 = vpack.c.b16 %v3644, %v3643
  %v3654 = vpack.c.b16 %v3646, %v3645
  %v3659 = vunpack.c.l.b16 %v3611
  %v3660 = vunpack.c.l.b16 %v3612
  %v3661 = vunpack.c.l.b16 %v3613
  %v3662 = vunpack.c.l.b16 %v3614
  %v3663 = vpack.c.b16 %v3660, %v3659
  %v3664 = vpack.c.b16 %v3662, %v3661
  %v3668 = vsel %vm1692, %v3647, 0
  %v3671 = vsel %vm1692, %v3648, 0
  %v3674 = vsel %vm1692, %v3649, 0
  %v3677 = vsel %vm1692, %v3650, 0
  %v3680 = vsel %vm1692, %v3651, 0
  %v3683 = vsel %vm1692, %v3652, 0
  %v3686 = vsel %vm1692, %v3653, 0
  %v3689 = vsel %vm1692, %v3654, 0
  %3691 = vmatprep.subr.bf16.mxu0 0
  %3692 = vmatpush1.bf16.msra.mxu0 0
  %3693 = vmatprep.subr.bf16.mxu0 0
  %3694 = vmatpush1.bf16.msra.mxu0 0
  %3695 = vmatprep.subr.bf16.mxu0 0
  %3696 = vmatpush1.bf16.msra.mxu0 0
  %3697 = vmatprep.subr.bf16.mxu0 0
  %3698 = vmatpush1.bf16.msra.mxu0 0
  %3699 = vmatprep.subr.bf16.mxu0 0
  %3700 = vmatpush1.bf16.msra.mxu0 0
  %3701 = vmatprep.subr.bf16.mxu0 0
  %3702 = vmatpush1.bf16.msra.mxu0 0
  %3703 = vmatprep.subr.bf16.mxu0 0
  %3704 = vmatpush1.bf16.msra.mxu0 %v3664
  %3705 = vmatprep.subr.bf16.mxu0 0
  %3706 = vmatpush1.bf16.msra.mxu0 %v3663
  %3707 = vmatprep.subr.bf16.mxu0 0
  %3708 = vmatpush2.bf16.msra.mxu0 0
  %3709 = vmatprep.subr.bf16.mxu0 0
  %3710 = vmatpush2.bf16.msra.mxu0 0
  %3711 = vmatprep.subr.bf16.mxu0 0
  %3712 = vmatpush2.bf16.msra.mxu0 0
  %3713 = vmatprep.subr.bf16.mxu0 0
  %3714 = vmatpush2.bf16.msra.mxu0 0
  %3715 = vmatprep.subr.bf16.mxu0 0
  %3716 = vmatpush2.bf16.msra.mxu0 0
  %3717 = vmatprep.subr.bf16.mxu0 0
  %3718 = vmatpush2.bf16.msra.mxu0 0
  %3719 = vmatprep.subr.bf16.mxu0 0
  %3720 = vmatpush2.bf16.msra.mxu0 0
  %3721 = vmatprep.subr.bf16.mxu0 0
  %3722 = vmatpush2.bf16.msra.mxu0 0
  %3723 = vmatprep.mubr.bf16.mxu0 0
  %3724 = vmatmul.mubr.bf16.gmra.mxu0 %v3668
  %v3725 = vpop.f32.mrf.mxu0
  %v3726 = vadd.f32 0.0, %v3725
  %v3727 = vpop.f32.mrf.mxu0
  %v3728 = vpop.f32.mrf.mxu0
  %v3729 = vadd.f32 0.0, %v3728
  %v3730 = vpop.f32.mrf.mxu0
  %3731 = vmatprep.mubr.bf16.mxu0 0
  %3732 = vmatmul.mubr.bf16.gmra.mxu0 %v3671
  %v3733 = vpop.f32.mrf.mxu0
  %v3734 = vadd.f32 0.0, %v3733
  %v3735 = vpop.f32.mrf.mxu0
  %v3736 = vpop.f32.mrf.mxu0
  %v3737 = vadd.f32 0.0, %v3736
  %v3738 = vpop.f32.mrf.mxu0
  %3739 = vmatprep.mubr.bf16.mxu0 0
  %3740 = vmatmul.mubr.bf16.gmra.mxu0 %v3674
  %v3741 = vpop.f32.mrf.mxu0
  %v3742 = vadd.f32 0.0, %v3741
  %v3743 = vpop.f32.mrf.mxu0
  %v3744 = vpop.f32.mrf.mxu0
  %v3745 = vadd.f32 0.0, %v3744
  %v3746 = vpop.f32.mrf.mxu0
  %3747 = vmatprep.mubr.bf16.mxu0 0
  %3748 = vmatmul.mubr.bf16.gmra.mxu0 %v3677
  %v3749 = vpop.f32.mrf.mxu0
  %v3750 = vadd.f32 0.0, %v3749
  %v3751 = vpop.f32.mrf.mxu0
  %v3752 = vpop.f32.mrf.mxu0
  %v3753 = vadd.f32 0.0, %v3752
  %v3754 = vpop.f32.mrf.mxu0
  %3755 = vmatprep.mubr.bf16.mxu0 0
  %3756 = vmatmul.mubr.bf16.gmra.mxu0 %v3680
  %v3757 = vpop.f32.mrf.mxu0
  %v3758 = vadd.f32 0.0, %v3757
  %v3759 = vpop.f32.mrf.mxu0
  %v3760 = vpop.f32.mrf.mxu0
  %v3761 = vadd.f32 0.0, %v3760
  %v3762 = vpop.f32.mrf.mxu0
  %3763 = vmatprep.mubr.bf16.mxu0 0
  %3764 = vmatmul.mubr.bf16.gmra.mxu0 %v3683
  %v3765 = vpop.f32.mrf.mxu0
  %v3766 = vadd.f32 0.0, %v3765
  %v3767 = vpop.f32.mrf.mxu0
  %v3768 = vpop.f32.mrf.mxu0
  %v3769 = vadd.f32 0.0, %v3768
  %v3770 = vpop.f32.mrf.mxu0
  %3771 = vmatprep.mubr.bf16.mxu0 0
  %3772 = vmatmul.mubr.bf16.gmra.mxu0 %v3686
  %v3773 = vpop.f32.mrf.mxu0
  %v3774 = vadd.f32 0.0, %v3773
  %v3775 = vpop.f32.mrf.mxu0
  %v3776 = vpop.f32.mrf.mxu0
  %v3777 = vadd.f32 0.0, %v3776
  %v3778 = vpop.f32.mrf.mxu0
  %3779 = vmatprep.mubr.bf16.mxu0 0
  %3780 = vmatmul.mubr.bf16.gmra.mxu0 %v3689
  %v3781 = vpop.f32.mrf.mxu0
  %v3782 = vadd.f32 0.0, %v3781
  %v3783 = vpop.f32.mrf.mxu0
  %v3784 = vpop.f32.mrf.mxu0
  %v3785 = vadd.f32 0.0, %v3784
  %v3786 = vpop.f32.mrf.mxu0
  %3787 = vdwg.mxu0
  %v3788 = vpack.c.bf16 %v3729, %v3726
  %v3789 = vpack.c.bf16 %v3737, %v3734
  %v3790 = vpack.c.bf16 %v3745, %v3742
  %v3791 = vpack.c.bf16 %v3753, %v3750
  %v3792 = vpack.c.bf16 %v3761, %v3758
  %v3793 = vpack.c.bf16 %v3769, %v3766
  %v3794 = vpack.c.bf16 %v3777, %v3774
  %v3795 = vpack.c.bf16 %v3785, %v3782
  %v3804 = vunpack.c.l.b16 %v3788
  %v3805 = vunpack.c.h.b16 %v3788
  %v3806 = vunpack.c.l.b16 %v3789
  %v3807 = vunpack.c.h.b16 %v3789
  %v3808 = vunpack.c.l.b16 %v3790
  %v3809 = vunpack.c.h.b16 %v3790
  %v3810 = vunpack.c.l.b16 %v3791
  %v3811 = vunpack.c.h.b16 %v3791
  %v3812 = vunpack.c.l.b16 %v3792
  %v3813 = vunpack.c.h.b16 %v3792
  %v3814 = vunpack.c.l.b16 %v3793
  %v3815 = vunpack.c.h.b16 %v3793
  %v3816 = vunpack.c.l.b16 %v3794
  %v3817 = vunpack.c.h.b16 %v3794
  %v3818 = vunpack.c.l.b16 %v3795
  %v3819 = vunpack.c.h.b16 %v3795
  %v3820 = vpack.c.b16 %v3804, %v3804
  %v3821 = vpack.c.b16 %v3805, %v3805
  %v3822 = vpack.c.b16 %v3806, %v3806
  %v3823 = vpack.c.b16 %v3807, %v3807
  %v3824 = vpack.c.b16 %v3808, %v3808
  %v3825 = vpack.c.b16 %v3809, %v3809
  %v3826 = vpack.c.b16 %v3810, %v3810
  %v3827 = vpack.c.b16 %v3811, %v3811
  %v3828 = vpack.c.b16 %v3812, %v3812
  %v3829 = vpack.c.b16 %v3813, %v3813
  %v3830 = vpack.c.b16 %v3814, %v3814
  %v3831 = vpack.c.b16 %v3815, %v3815
  %v3832 = vpack.c.b16 %v3816, %v3816
  %v3833 = vpack.c.b16 %v3817, %v3817
  %v3834 = vpack.c.b16 %v3818, %v3818
  %v3835 = vpack.c.b16 %v3819, %v3819
  %s3852 = scalar_lea.vmem %s3, 96
  %3853 = vst.msk [vmem:[%s3852] sm:$0xf] %vm1878, %v3820
  %3854 = vst.msk [vmem:[%s3852 + $0x4] sm:$0xf] %vm1878, %v3821
  %3855 = vst.msk [vmem:[%s3852 + $0x8] sm:$0xf] %vm1878, %v3822
  %3856 = vst.msk [vmem:[%s3852 + $0xc] sm:$0xf] %vm1878, %v3823
  %3857 = vst.msk [vmem:[%s3852 + $0x10] sm:$0xf] %vm1878, %v3824
  %3858 = vst.msk [vmem:[%s3852 + $0x14] sm:$0xf] %vm1878, %v3825
  %3859 = vst.msk [vmem:[%s3852 + $0x18] sm:$0xf] %vm1878, %v3826
  %3860 = vst.msk [vmem:[%s3852 + $0x1c] sm:$0xf] %vm1878, %v3827
  %3861 = vst.msk [vmem:[%s3852 + $0x80] sm:$0xf] %vm1878, %v3828
  %3862 = vst.msk [vmem:[%s3852 + $0x84] sm:$0xf] %vm1878, %v3829
  %3863 = vst.msk [vmem:[%s3852 + $0x88] sm:$0xf] %vm1878, %v3830
  %3864 = vst.msk [vmem:[%s3852 + $0x8c] sm:$0xf] %vm1878, %v3831
  %3865 = vst.msk [vmem:[%s3852 + $0x90] sm:$0xf] %vm1878, %v3832
  %3866 = vst.msk [vmem:[%s3852 + $0x94] sm:$0xf] %vm1878, %v3833
  %3867 = vst.msk [vmem:[%s3852 + $0x98] sm:$0xf] %vm1878, %v3834
  %3868 = vst.msk [vmem:[%s3852 + $0x9c] sm:$0xf] %vm1878, %v3835
  %v3869 = vsel %vm1895, %v3726, 0.0
  %v3870 = vsel %vm1895, %v3729, 0.0
  %v3871 = vadd.f32 %v3869, %v3870
  %v3872 = vsel %vm1895, %v3734, 0.0
  %v3873 = vadd.f32 %v3871, %v3872
  %v3874 = vsel %vm1895, %v3737, 0.0
  %v3875 = vadd.f32 %v3873, %v3874
  %v3876 = vsel %vm1895, %v3742, 0.0
  %v3877 = vadd.f32 %v3875, %v3876
  %v3878 = vsel %vm1895, %v3745, 0.0
  %v3879 = vadd.f32 %v3877, %v3878
  %v3880 = vsel %vm1895, %v3750, 0.0
  %v3881 = vadd.f32 %v3879, %v3880
  %v3882 = vsel %vm1895, %v3753, 0.0
  %v3883 = vadd.f32 %v3881, %v3882
  %v3884 = vsel %vm1895, %v3758, 0.0
  %v3885 = vadd.f32 %v3883, %v3884
  %v3886 = vsel %vm1895, %v3761, 0.0
  %v3887 = vadd.f32 %v3885, %v3886
  %v3888 = vsel %vm1895, %v3766, 0.0
  %v3889 = vadd.f32 %v3887, %v3888
  %v3890 = vsel %vm1895, %v3769, 0.0
  %v3891 = vadd.f32 %v3889, %v3890
  %v3892 = vsel %vm1895, %v3774, 0.0
  %v3893 = vadd.f32 %v3891, %v3892
  %v3894 = vsel %vm1895, %v3777, 0.0
  %v3895 = vadd.f32 %v3893, %v3894
  %v3896 = vsel %vm1895, %v3782, 0.0
  %v3897 = vadd.f32 %v3895, %v3896
  %v3898 = vsel %vm1895, %v3785, 0.0
  %v3899 = vadd.f32 %v3897, %v3898
  %v3900 = vrot.slane %v3899, 4
  %v3901 = vadd.f32 %v3899, %v3900
  %v3902 = vrot.slane %v3901, 2
  %v3903 = vadd.f32 %v3901, %v3902
  %v3904 = vrot.slane %v3903, 1
  %v3905 = vadd.f32 %v3903, %v3904
  %v3906 = vadd.f32 %v3275, %v3905
  %v3907 = vmul.f32 %v3726, %v3726
  %v3908 = vmul.f32 %v3729, %v3729
  %v3909 = vmul.f32 %v3734, %v3734
  %v3910 = vmul.f32 %v3737, %v3737
  %v3911 = vmul.f32 %v3742, %v3742
  %v3912 = vmul.f32 %v3745, %v3745
  %v3913 = vmul.f32 %v3750, %v3750
  %v3914 = vmul.f32 %v3753, %v3753
  %v3915 = vmul.f32 %v3758, %v3758
  %v3916 = vmul.f32 %v3761, %v3761
  %v3917 = vmul.f32 %v3766, %v3766
  %v3918 = vmul.f32 %v3769, %v3769
  %v3919 = vmul.f32 %v3774, %v3774
  %v3920 = vmul.f32 %v3777, %v3777
  %v3921 = vmul.f32 %v3782, %v3782
  %v3922 = vmul.f32 %v3785, %v3785
  %v3923 = vsel %vm1895, %v3907, 0.0
  %v3924 = vsel %vm1895, %v3908, 0.0
  %v3925 = vadd.f32 %v3923, %v3924
  %v3926 = vsel %vm1895, %v3909, 0.0
  %v3927 = vadd.f32 %v3925, %v3926
  %v3928 = vsel %vm1895, %v3910, 0.0
  %v3929 = vadd.f32 %v3927, %v3928
  %v3930 = vsel %vm1895, %v3911, 0.0
  %v3931 = vadd.f32 %v3929, %v3930
  %v3932 = vsel %vm1895, %v3912, 0.0
  %v3933 = vadd.f32 %v3931, %v3932
  %v3934 = vsel %vm1895, %v3913, 0.0
  %v3935 = vadd.f32 %v3933, %v3934
  %v3936 = vsel %vm1895, %v3914, 0.0
  %v3937 = vadd.f32 %v3935, %v3936
  %v3938 = vsel %vm1895, %v3915, 0.0
  %v3939 = vadd.f32 %v3937, %v3938
  %v3940 = vsel %vm1895, %v3916, 0.0
  %v3941 = vadd.f32 %v3939, %v3940
  %v3942 = vsel %vm1895, %v3917, 0.0
  %v3943 = vadd.f32 %v3941, %v3942
  %v3944 = vsel %vm1895, %v3918, 0.0
  %v3945 = vadd.f32 %v3943, %v3944
  %v3946 = vsel %vm1895, %v3919, 0.0
  %v3947 = vadd.f32 %v3945, %v3946
  %v3948 = vsel %vm1895, %v3920, 0.0
  %v3949 = vadd.f32 %v3947, %v3948
  %v3950 = vsel %vm1895, %v3921, 0.0
  %v3951 = vadd.f32 %v3949, %v3950
  %v3952 = vsel %vm1895, %v3922, 0.0
  %v3953 = vadd.f32 %v3951, %v3952
  %v3954 = vrot.slane %v3953, 4
  %v3955 = vadd.f32 %v3953, %v3954
  %v3956 = vrot.slane %v3955, 2
  %v3957 = vadd.f32 %v3955, %v3956
  %v3958 = vrot.slane %v3957, 1
  %v3959 = vadd.f32 %v3957, %v3958
  %v3960 = vadd.f32 %v3329, %v3959
  %vm3961 = vcmask 24576
  %3962 = vst.msk [vmem:[%s4] sm:$0x1] %vm3961, %v3906
  %3963 = vst.msk [vmem:[%s4 + $0x1] sm:$0x1] %vm3961, %v3960
  // Predicated region
  $region14: #{unet_innermost_forward.1} parent=0 // pred_check
    _
  $region15: #{unet_innermost_forward.1} parent=0 // pred_check_branch
    %3965 = sbr.rel (0) target = $region17
  $region16: #{unet_innermost_forward.1} parent=0 // pred_region
    _
  $region17: #{unet_innermost_forward.1} parent=0 // pred_fallthru
    _
  // Predicated region
  $region18: #{unet_innermost_forward.1} parent=0 // pred_check
    _
  $region19: #{unet_innermost_forward.1} parent=0 // pred_check_branch
    %3967 = sbr.rel (0) target = $region21
  $region20: #{unet_innermost_forward.1} parent=0 // pred_region
    _
  $region21: #{unet_innermost_forward.1} parent=0 // pred_fallthru
    _
  // Predicated region
  $region22: #{unet_innermost_forward.1} parent=0 // pred_check
    _
  $region23: #{unet_innermost_forward.1} parent=0 // pred_check_branch
    %3969 = sbr.rel (0) target = $region25
  $region24: #{unet_innermost_forward.1} parent=0 // pred_region
    _
  $region25: #{unet_innermost_forward.1} parent=0 // pred_fallthru
    _
  // Predicated region
  $region26: #{unet_innermost_forward.1} parent=0 // pred_check
    _
  $region27: #{unet_innermost_forward.1} parent=0 // pred_check_branch
    %3971 = sbr.rel (0) target = $region29
  $region28: #{unet_innermost_forward.1} parent=0 // pred_region
    _
  $region29: #{unet_innermost_forward.1} parent=0 // pred_fallthru
    _

</llo_original>
